<compile_context>
chip_gen: v6e
topology: v6e:2x2x1
jax: 0.10.0
libtpu: 0.0.40
codegen_flags: <defaults>
</compile_context>

<pallas_src>
import functools
import math

import jax
import jax.numpy as jnp
from jax.experimental import pallas as pl
from jax.experimental.pallas import tpu as pltpu


# ----------------------------------------------------------------------------
# Fused decoder-stack kernel. Grid = (batch_tile, layer).
# ----------------------------------------------------------------------------
def _decoder_stack_kernel(
    # per-batch inputs
    x0_ref, la_bias_ref, pad_bias_ref, enc_kv_ref,
    # shared (layer-invariant) weights, VMEM-resident across the whole grid
    sa_wqkv_ref, sa_bqkv_ref, sa_wo_ref, sa_bo_ref, ln1_g_ref, ln1_b_ref,
    ca_wq_ref, ca_bq_ref, ca_wo_ref, ca_bo_ref, ln2_g_ref, ln2_b_ref,
    w1_ref, b1_ref, w2_ref, b2_ref, ln3_g_ref, ln3_b_ref,
    # outputs
    y_ref, attn1_ref, attn2_ref,
    *, H, dk,
):
    D = H * dk
    bf16 = jnp.bfloat16
    l = pl.program_id(1)

    def layer_norm(y, g_ref, b_ref, eps):
        mu = jnp.mean(y, axis=-1, keepdims=True)
        var = jnp.mean(jnp.square(y - mu), axis=-1, keepdims=True)
        return (y - mu) * jax.lax.rsqrt(var + eps) * g_ref[...] + b_ref[...]

    def mha(q, k_bf, v_bf, bias_ref, attn_ref, wo_ref):
        # q: [Sq, D] f32 (1/sqrt(d_k) folded into the Q projection)
        # k_bf/v_bf: [Sk, D] bf16; bias_ref/attn_ref: [H, Sq, Sk]
        # wo_ref: [H, dk, D] bf16. Returns concat_h(ctx_h) @ Wo as
        # sum_h ctx_h @ Wo[h] — no head-merge relayout, no VMEM round-trip.
        qb = q.astype(bf16)
        out = None
        for h in range(H):
            lo = h * dk
            s = jnp.einsum("qd,kd->qk", qb[:, lo:lo + dk], k_bf[:, lo:lo + dk],
                           preferred_element_type=jnp.float32)
            s = s + bias_ref[h]                       # additive mask (0 / finfo.min)
            s = s - jnp.max(s, axis=-1, keepdims=True)
            e = jnp.exp(s)
            a = e * pl.reciprocal(jnp.sum(e, axis=-1, keepdims=True), approx=True)
            attn_ref[h] = a                           # one wide store per head
            ctx_h = jnp.dot(a.astype(bf16), v_bf[:, lo:lo + dk],
                            preferred_element_type=jnp.float32)      # [Sq, dk]
            part = jnp.dot(ctx_h.astype(bf16), wo_ref[h],
                           preferred_element_type=jnp.float32)       # [Sq, D]
            out = part if out is None else out + part
        return out

    # layer 0: initialize the VMEM-resident carry (= the y output block)
    @pl.when(l == 0)
    def _init():
        y_ref[...] = x0_ref[...]

    x = y_ref[...]                                    # [Sd, D] f32 carry

    # -------------------- self-attention block (LN eps = 1e-5) --------------
    qkv = (jnp.dot(x.astype(bf16), sa_wqkv_ref[...],
                   preferred_element_type=jnp.float32) + sa_bqkv_ref[...])
    q = qkv[:, 0 * D:1 * D]                           # scale folded into Wq/bq
    k = qkv[:, 1 * D:2 * D].astype(bf16)
    v = qkv[:, 2 * D:3 * D].astype(bf16)
    sa_out = mha(q, k, v, la_bias_ref, attn1_ref, sa_wo_ref) + sa_bo_ref[...]
    x = layer_norm(x + sa_out, ln1_g_ref, ln1_b_ref, 1e-5)

    # -------------------- cross-attention block (LN eps = 1e-12) ------------
    q = (jnp.dot(x.astype(bf16), ca_wq_ref[...],
                 preferred_element_type=jnp.float32) + ca_bq_ref[...])
    kv = enc_kv_ref[...]                              # [Se, 2D] bf16 (precomputed)
    ca_out = mha(q, kv[:, 0:D], kv[:, D:2 * D], pad_bias_ref, attn2_ref,
                 ca_wo_ref) + ca_bo_ref[...]
    x = layer_norm(x + ca_out, ln2_g_ref, ln2_b_ref, 1e-12)

    # -------------------- feed-forward block (LN eps = 1e-12) ---------------
    h1 = (jnp.dot(x.astype(bf16), w1_ref[...],
                  preferred_element_type=jnp.float32) + b1_ref[...])
    h1 = 0.5 * h1 * (1.0 + jax.lax.erf(h1 * (1.0 / math.sqrt(2.0))))  # exact GELU
    ff = (jnp.dot(h1.astype(bf16), w2_ref[...],
                  preferred_element_type=jnp.float32) + b2_ref[...])
    x = layer_norm(x + ff, ln3_g_ref, ln3_b_ref, 1e-12)

    y_ref[...] = x                                    # carry to the next layer


# ----------------------------------------------------------------------------
# Wrapper: one pallas_call for the whole decoder stack
# ----------------------------------------------------------------------------
def transformer_decoder(x, enc_output, look_ahead_mask, enc_pad_mask,
                        layer_params, num_layers, num_heads):
    B, Sd, D = x.shape
    Se = enc_output.shape[1]
    dk = D // num_heads
    F_ = layer_params["w1"].shape[1]
    scale = 1.0 / math.sqrt(dk)
    NEG = float(jnp.finfo(jnp.float32).min)
    bf16 = jnp.bfloat16

    sa = layer_params["self_attn"]
    ca = layer_params["enc_attn"]

    # Fold 1/sqrt(d_k) into the Q projection; fuse QKV weights; cast to bf16.
    sa_wqkv = jnp.concatenate([sa["wq"] * scale, sa["wk"], sa["wv"]], axis=1).astype(bf16)
    sa_bqkv = jnp.concatenate([sa["bq"] * scale, sa["bk"], sa["bv"]]).reshape(1, 3 * D)
    sa_wo3 = sa["wo"].reshape(num_heads, dk, D).astype(bf16)
    ca_wq = (ca["wq"] * scale).astype(bf16)
    ca_bq = (ca["bq"] * scale).reshape(1, D)
    ca_wo3 = ca["wo"].reshape(num_heads, dk, D).astype(bf16)

    # Cross-attn K/V depend only on enc_output + shared weights -> compute once.
    enc_kv = (enc_output.reshape(B * Se, D)
              @ jnp.concatenate([ca["wk"], ca["wv"]], axis=1)
              + jnp.concatenate([ca["bk"], ca["bv"]])
              ).reshape(B, Se, 2 * D).astype(bf16)

    # Additive attention bias: exactly torch's attn + (1 - mask)*finfo.min
    la_bias = ((1.0 - look_ahead_mask) * NEG).astype(jnp.float32)
    pad_bias = ((1.0 - enc_pad_mask) * NEG).astype(jnp.float32)

    def r2(a):
        return a.reshape(1, -1)

    def wspec(shape):                      # layer-invariant weight: resident
        return pl.BlockSpec(shape, lambda b, l: (0,) * len(shape))

    kernel = functools.partial(_decoder_stack_kernel, H=num_heads, dk=dk)

    y, attn1, attn2 = pl.pallas_call(
        kernel,
        grid=(B, num_layers),
        in_specs=[
            pl.BlockSpec((None, Sd, D), lambda b, l: (b, 0, 0)),                 # x0
            pl.BlockSpec((None, num_heads, Sd, Sd), lambda b, l: (b, 0, 0, 0)),  # la bias
            pl.BlockSpec((None, num_heads, Sd, Se), lambda b, l: (b, 0, 0, 0)),  # pad bias
            pl.BlockSpec((None, Se, 2 * D), lambda b, l: (b, 0, 0)),             # enc K/V
            wspec((D, 3 * D)), wspec((1, 3 * D)),        # self-attn W_qkv, b_qkv
            wspec((num_heads, dk, D)), wspec((1, D)),    # self-attn W_o, b_o
            wspec((1, D)), wspec((1, D)),                # ln1 gamma, beta
            wspec((D, D)), wspec((1, D)),                # cross-attn W_q, b_q
            wspec((num_heads, dk, D)), wspec((1, D)),    # cross-attn W_o, b_o
            wspec((1, D)), wspec((1, D)),                # ln2 gamma, beta
            wspec((D, F_)), wspec((1, F_)),              # fc1
            wspec((F_, D)), wspec((1, D)),               # fc2
            wspec((1, D)), wspec((1, D)),                # ln3 gamma, beta
        ],
        out_shape=(
            jax.ShapeDtypeStruct((B, Sd, D), jnp.float32),
            jax.ShapeDtypeStruct((num_layers, B, num_heads, Sd, Sd), jnp.float32),
            jax.ShapeDtypeStruct((num_layers, B, num_heads, Sd, Se), jnp.float32),
        ),
        out_specs=(
            pl.BlockSpec((None, Sd, D), lambda b, l: (b, 0, 0)),   # carry / result
            pl.BlockSpec((None, None, num_heads, Sd, Sd), lambda b, l: (l, b, 0, 0, 0)),
            pl.BlockSpec((None, None, num_heads, Sd, Se), lambda b, l: (l, b, 0, 0, 0)),
        ),
        compiler_params=pltpu.CompilerParams(
            dimension_semantics=("parallel", "arbitrary")),  # batch || , layer seq
    )(
        x, la_bias, pad_bias, enc_kv,
        sa_wqkv, sa_bqkv, sa_wo3, r2(sa["bo"]),
        r2(layer_params["ln1_g"]), r2(layer_params["ln1_b"]),
        ca_wq, ca_bq, ca_wo3, r2(ca["bo"]),
        r2(layer_params["ln2_g"]), r2(layer_params["ln2_b"]),
        layer_params["w1"].astype(bf16), r2(layer_params["b1"]),
        layer_params["w2"].astype(bf16), r2(layer_params["b2"]),
        r2(layer_params["ln3_g"]), r2(layer_params["ln3_b"]),
    )

    attn1_list = [attn1[i] for i in range(num_layers)]
    attn2_list = [attn2[i] for i in range(num_layers)]
    return y, attn1_list, attn2_list


# ----------------------------------------------------------------------------
# Deterministic parameter init (synthetic, shapes match the PyTorch module).
# All stacked layers share identical params, matching clones()'s deep copies.
# ----------------------------------------------------------------------------
def _linear_params(key, d_in, d_out):
    kw, kb = jax.random.split(key)
    w = 0.05 * jax.random.normal(kw, (d_in, d_out), jnp.float32)
    b = 0.05 * jax.random.normal(kb, (d_out,), jnp.float32)
    return w, b


def _attention_params(key, d_model):
    k1, k2, k3, k4 = jax.random.split(key, 4)
    wq, bq = _linear_params(k1, d_model, d_model)
    wk, bk = _linear_params(k2, d_model, d_model)
    wv, bv = _linear_params(k3, d_model, d_model)
    wo, bo = _linear_params(k4, d_model, d_model)
    return dict(wq=wq, bq=bq, wk=wk, bk=bk, wv=wv, bv=bv, wo=wo, bo=bo)


def init_layer_params(key, d_model, dim_ff):
    k0, k1, k2, k3 = jax.random.split(key, 4)
    p = dict(
        self_attn=_attention_params(k0, d_model),
        enc_attn=_attention_params(k1, d_model),
        ln1_g=jnp.ones((d_model,), jnp.float32),
        ln1_b=jnp.zeros((d_model,), jnp.float32),
        ln2_g=jnp.ones((d_model,), jnp.float32),
        ln2_b=jnp.zeros((d_model,), jnp.float32),
        ln3_g=jnp.ones((d_model,), jnp.float32),
        ln3_b=jnp.zeros((d_model,), jnp.float32),
    )
    p["w1"], p["b1"] = _linear_params(k2, d_model, dim_ff)
    p["w2"], p["b2"] = _linear_params(k3, dim_ff, d_model)
    return p


# ----------------------------------------------------------------------------
if __name__ == "__main__":
    num_layers = 2
    d_model = 32
    num_heads = 4
    dim_ff = 4 * d_model
    B, S_dec, S_enc = 2, 8, 8

    params = init_layer_params(jax.random.PRNGKey(0), d_model, dim_ff)

    kx, ke = jax.random.split(jax.random.PRNGKey(0), 2)
    x = jax.random.normal(kx, (B, S_dec, d_model), jnp.float32)
    enc_output = jax.random.normal(ke, (B, S_enc, d_model), jnp.float32)

    # look-ahead (causal) mask: 1.0 = attend, 0.0 = masked
    causal = jnp.tril(jnp.ones((S_dec, S_dec), jnp.float32))
    look_ahead_mask = jnp.broadcast_to(causal, (B, num_heads, S_dec, S_dec))

    # encoder pad mask: batch 1 has its last two source positions padded
    pad = jnp.ones((B, S_enc), jnp.float32).at[1, -2:].set(0.0)
    enc_pad_mask = jnp.broadcast_to(
        pad[:, None, None, :], (B, num_heads, S_dec, S_enc)
    )

    out, attn_scores_1, attn_scores_2 = transformer_decoder(
        x, enc_output, look_ahead_mask, enc_pad_mask, params, num_layers, num_heads
    )
    jax.block_until_ready(out)
    jax.block_until_ready(attn_scores_1)
    jax.block_until_ready(attn_scores_2)

    assert out.shape == (B, S_dec, d_model)
    assert len(attn_scores_1) == num_layers
    assert len(attn_scores_2) == num_layers
    assert attn_scores_1[0].shape == (B, num_heads, S_dec, S_dec)
    assert attn_scores_2[0].shape == (B, num_heads, S_dec, S_enc)
    assert bool(jnp.all(jnp.isfinite(out)))
    assert bool(jnp.all(jnp.isfinite(attn_scores_1[0])))
    assert bool(jnp.all(jnp.isfinite(attn_scores_2[0])))
    print("KERNEL_OK")
</pallas_src>

<mosaic_0001>
module attributes {stable_mosaic.version = 11 : i64} {
  func.func @_decoder_stack_kernel(%arg0: i32, %arg1: i32, %arg2: memref<1x8x32xf32, #tpu.memory_space<vmem>>, %arg3: memref<1x4x8x8xf32, #tpu.memory_space<vmem>>, %arg4: memref<1x4x8x8xf32, #tpu.memory_space<vmem>>, %arg5: memref<1x8x64xbf16, #tpu.memory_space<vmem>>, %arg6: memref<32x96xbf16, #tpu.memory_space<vmem>>, %arg7: memref<1x96xf32, #tpu.memory_space<vmem>>, %arg8: memref<4x8x32xbf16, #tpu.memory_space<vmem>>, %arg9: memref<1x32xf32, #tpu.memory_space<vmem>>, %arg10: memref<1x32xf32, #tpu.memory_space<vmem>>, %arg11: memref<1x32xf32, #tpu.memory_space<vmem>>, %arg12: memref<32x32xbf16, #tpu.memory_space<vmem>>, %arg13: memref<1x32xf32, #tpu.memory_space<vmem>>, %arg14: memref<4x8x32xbf16, #tpu.memory_space<vmem>>, %arg15: memref<1x32xf32, #tpu.memory_space<vmem>>, %arg16: memref<1x32xf32, #tpu.memory_space<vmem>>, %arg17: memref<1x32xf32, #tpu.memory_space<vmem>>, %arg18: memref<32x128xbf16, #tpu.memory_space<vmem>>, %arg19: memref<1x128xf32, #tpu.memory_space<vmem>>, %arg20: memref<128x32xbf16, #tpu.memory_space<vmem>>, %arg21: memref<1x32xf32, #tpu.memory_space<vmem>>, %arg22: memref<1x32xf32, #tpu.memory_space<vmem>>, %arg23: memref<1x32xf32, #tpu.memory_space<vmem>>, %arg24: memref<1x8x32xf32, #tpu.memory_space<vmem>>, %arg25: memref<1x1x4x8x8xf32, #tpu.memory_space<vmem>>, %arg26: memref<1x1x4x8x8xf32, #tpu.memory_space<vmem>>) attributes {dimension_semantics = [#tpu.dimension_semantics<parallel>, #tpu.dimension_semantics<arbitrary>], iteration_bounds = array<i64: 2, 2>, scalar_prefetch = 0 : i64, scratch_operands = 0 : i64, tpu.core_type = #tpu.core_type<tc>, window_params = [{transform_indices = @transform_0, window_bounds = array<i64: 1, 8, 32>}, {transform_indices = @transform_1, window_bounds = array<i64: 1, 4, 8, 8>}, {transform_indices = @transform_2, window_bounds = array<i64: 1, 4, 8, 8>}, {transform_indices = @transform_3, window_bounds = array<i64: 1, 8, 64>}, {pipeline_mode = #tpu.pipeline_mode<synchronous>, transform_indices = @transform_4, window_bounds = array<i64: 32, 96>}, {pipeline_mode = #tpu.pipeline_mode<synchronous>, transform_indices = @transform_5, window_bounds = array<i64: 1, 96>}, {pipeline_mode = #tpu.pipeline_mode<synchronous>, transform_indices = @transform_6, window_bounds = array<i64: 4, 8, 32>}, {pipeline_mode = #tpu.pipeline_mode<synchronous>, transform_indices = @transform_7, window_bounds = array<i64: 1, 32>}, {pipeline_mode = #tpu.pipeline_mode<synchronous>, transform_indices = @transform_8, window_bounds = array<i64: 1, 32>}, {pipeline_mode = #tpu.pipeline_mode<synchronous>, transform_indices = @transform_9, window_bounds = array<i64: 1, 32>}, {pipeline_mode = #tpu.pipeline_mode<synchronous>, transform_indices = @transform_10, window_bounds = array<i64: 32, 32>}, {pipeline_mode = #tpu.pipeline_mode<synchronous>, transform_indices = @transform_11, window_bounds = array<i64: 1, 32>}, {pipeline_mode = #tpu.pipeline_mode<synchronous>, transform_indices = @transform_12, window_bounds = array<i64: 4, 8, 32>}, {pipeline_mode = #tpu.pipeline_mode<synchronous>, transform_indices = @transform_13, window_bounds = array<i64: 1, 32>}, {pipeline_mode = #tpu.pipeline_mode<synchronous>, transform_indices = @transform_14, window_bounds = array<i64: 1, 32>}, {pipeline_mode = #tpu.pipeline_mode<synchronous>, transform_indices = @transform_15, window_bounds = array<i64: 1, 32>}, {pipeline_mode = #tpu.pipeline_mode<synchronous>, transform_indices = @transform_16, window_bounds = array<i64: 32, 128>}, {pipeline_mode = #tpu.pipeline_mode<synchronous>, transform_indices = @transform_17, window_bounds = array<i64: 1, 128>}, {pipeline_mode = #tpu.pipeline_mode<synchronous>, transform_indices = @transform_18, window_bounds = array<i64: 128, 32>}, {pipeline_mode = #tpu.pipeline_mode<synchronous>, transform_indices = @transform_19, window_bounds = array<i64: 1, 32>}, {pipeline_mode = #tpu.pipeline_mode<synchronous>, transform_indices = @transform_20, window_bounds = array<i64: 1, 32>}, {pipeline_mode = #tpu.pipeline_mode<synchronous>, transform_indices = @transform_21, window_bounds = array<i64: 1, 32>}, {transform_indices = @transform_22, window_bounds = array<i64: 1, 8, 32>}, {transform_indices = @transform_23, window_bounds = array<i64: 1, 1, 4, 8, 8>}, {transform_indices = @transform_24, window_bounds = array<i64: 1, 1, 4, 8, 8>}]} {
    %c0_i32 = arith.constant 0 : i32
    %0 = arith.cmpi eq, %arg1, %c0_i32 : i32
    %1 = arith.extui %0 : i1 to i32
    %c0_i32_0 = arith.constant 0 : i32
    %2 = arith.cmpi ne, %1, %c0_i32_0 : i32
    scf.if %2 {
      %c0_195 = arith.constant 0 : index
      %c0_196 = arith.constant 0 : index
      %c0_197 = arith.constant 0 : index
      %346 = vector.load %arg2[%c0_195, %c0_196, %c0_197] : memref<1x8x32xf32, #tpu.memory_space<vmem>>, vector<1x8x32xf32>
      %347 = vector.shape_cast %346 : vector<1x8x32xf32> to vector<8x32xf32>
      %c0_198 = arith.constant 0 : index
      %c0_199 = arith.constant 0 : index
      %c0_200 = arith.constant 0 : index
      %348 = vector.load %arg24[%c0_198, %c0_199, %c0_200] : memref<1x8x32xf32, #tpu.memory_space<vmem>>, vector<1x8x32xf32>
      %349 = vector.shape_cast %348 : vector<1x8x32xf32> to vector<8x32xf32>
      %350 = vector.shape_cast %347 : vector<8x32xf32> to vector<1x8x32xf32>
      tpu.vector_store %arg24[%c0_198, %c0_199, %c0_200], %350 {strides = array<i32>} : memref<1x8x32xf32, #tpu.memory_space<vmem>>, vector<1x8x32xf32>,
    } else {
    }
    %c0 = arith.constant 0 : index
    %c0_1 = arith.constant 0 : index
    %c0_2 = arith.constant 0 : index
    %3 = vector.load %arg24[%c0, %c0_1, %c0_2] : memref<1x8x32xf32, #tpu.memory_space<vmem>>, vector<1x8x32xf32>
    %4 = vector.shape_cast %3 : vector<1x8x32xf32> to vector<8x32xf32>
    %5 = arith.truncf %4 : vector<8x32xf32> to vector<8x32xbf16>
    %c0_3 = arith.constant 0 : index
    %c0_4 = arith.constant 0 : index
    %6 = vector.load %arg6[%c0_3, %c0_4] : memref<32x96xbf16, #tpu.memory_space<vmem>>, vector<32x96xbf16>
    %cst = arith.constant dense<0.000000e+00> : vector<8x96xf32>
    %7 = tpu.matmul %5, %6, %cst {dimension_numbers = #tpu.dot_dimension_numbers<[1], [0], [0], [1], [0, 0, 1, 1], [], []>} : vector<8x32xbf16>, vector<32x96xbf16>, vector<8x96xf32> -> vector<8x96xf32>
    %c0_5 = arith.constant 0 : index
    %c0_6 = arith.constant 0 : index
    %8 = vector.load %arg7[%c0_5, %c0_6] : memref<1x96xf32, #tpu.memory_space<vmem>>, vector<1x96xf32>
    %9 = vector.broadcast %8 : vector<1x96xf32> to vector<8x96xf32>
    %10 = arith.addf %7, %9 : vector<8x96xf32>
    %11 = vector.extract_strided_slice %10 {offsets = [0, 0], sizes = [8, 32], strides = [1, 1]} : vector<8x96xf32> to vector<8x32xf32>
    %12 = vector.extract_strided_slice %10 {offsets = [0, 32], sizes = [8, 32], strides = [1, 1]} : vector<8x96xf32> to vector<8x32xf32>
    %13 = arith.truncf %12 : vector<8x32xf32> to vector<8x32xbf16>
    %14 = vector.extract_strided_slice %10 {offsets = [0, 64], sizes = [8, 32], strides = [1, 1]} : vector<8x96xf32> to vector<8x32xf32>
    %15 = arith.truncf %14 : vector<8x32xf32> to vector<8x32xbf16>
    %16 = arith.truncf %11 : vector<8x32xf32> to vector<8x32xbf16>
    %17 = vector.extract_strided_slice %16 {offsets = [0, 0], sizes = [8, 8], strides = [1, 1]} : vector<8x32xbf16> to vector<8x8xbf16>
    %18 = vector.extract_strided_slice %13 {offsets = [0, 0], sizes = [8, 8], strides = [1, 1]} : vector<8x32xbf16> to vector<8x8xbf16>
    "tpu.trace_start"() <{level = 10 : i32, message = "qd,kd->qk"}> : () -> ()
    %cst_7 = arith.constant dense<0.000000e+00> : vector<8x8xf32>
    %19 = tpu.matmul %17, %18, %cst_7 {dimension_numbers = #tpu.dot_dimension_numbers<[1], [1], [0], [0], [0, 0, 1, 0], [], []>} : vector<8x8xbf16>, vector<8x8xbf16>, vector<8x8xf32> -> vector<8x8xf32>
    "tpu.trace_stop"() : () -> ()
    %c0_8 = arith.constant 0 : index
    %c0_9 = arith.constant 0 : index
    %c0_10 = arith.constant 0 : index
    %c0_11 = arith.constant 0 : index
    %20 = vector.load %arg3[%c0_8, %c0_9, %c0_10, %c0_11] : memref<1x4x8x8xf32, #tpu.memory_space<vmem>>, vector<1x1x8x8xf32>
    %21 = vector.shape_cast %20 : vector<1x1x8x8xf32> to vector<8x8xf32>
    %22 = arith.addf %19, %21 : vector<8x8xf32>
    %cst_12 = arith.constant dense<0xFF800000> : vector<8xf32>
    %23 = vector.multi_reduction <maximumf>, %22, %cst_12 [1] : vector<8x8xf32> to vector<8xf32>
    %24 = vector.shape_cast %23 : vector<8xf32> to vector<8x1xf32>
    %25 = vector.broadcast %24 : vector<8x1xf32> to vector<8x8xf32>
    %26 = arith.subf %22, %25 : vector<8x8xf32>
    %27 = math.exp %26 : vector<8x8xf32>
    %cst_13 = arith.constant dense<0.000000e+00> : vector<8xf32>
    %28 = vector.multi_reduction <add>, %27, %cst_13 [1] : vector<8x8xf32> to vector<8xf32>
    %29 = vector.shape_cast %28 : vector<8xf32> to vector<8x1xf32>
    %30 = tpu.reciprocal %29 {approx = true} : vector<8x1xf32> -> vector<8x1xf32>
    %31 = vector.broadcast %30 : vector<8x1xf32> to vector<8x8xf32>
    %32 = arith.mulf %27, %31 : vector<8x8xf32>
    %c0_14 = arith.constant 0 : index
    %c0_15 = arith.constant 0 : index
    %c0_16 = arith.constant 0 : index
    %c0_17 = arith.constant 0 : index
    %c0_18 = arith.constant 0 : index
    %33 = vector.load %arg25[%c0_14, %c0_15, %c0_16, %c0_17, %c0_18] : memref<1x1x4x8x8xf32, #tpu.memory_space<vmem>>, vector<1x1x1x8x8xf32>
    %34 = vector.shape_cast %33 : vector<1x1x1x8x8xf32> to vector<8x8xf32>
    %35 = vector.shape_cast %32 : vector<8x8xf32> to vector<1x1x1x8x8xf32>
    tpu.vector_store %arg25[%c0_14, %c0_15, %c0_16, %c0_17, %c0_18], %35 {strides = array<i32>} : memref<1x1x4x8x8xf32, #tpu.memory_space<vmem>>, vector<1x1x1x8x8xf32>,
    %36 = arith.truncf %32 : vector<8x8xf32> to vector<8x8xbf16>
    %37 = vector.extract_strided_slice %15 {offsets = [0, 0], sizes = [8, 8], strides = [1, 1]} : vector<8x32xbf16> to vector<8x8xbf16>
    %cst_19 = arith.constant dense<0.000000e+00> : vector<8x8xf32>
    %38 = tpu.matmul %36, %37, %cst_19 {dimension_numbers = #tpu.dot_dimension_numbers<[1], [0], [0], [1], [0, 0, 1, 1], [], []>} : vector<8x8xbf16>, vector<8x8xbf16>, vector<8x8xf32> -> vector<8x8xf32>
    %39 = arith.truncf %38 : vector<8x8xf32> to vector<8x8xbf16>
    %c0_20 = arith.constant 0 : index
    %c0_21 = arith.constant 0 : index
    %c0_22 = arith.constant 0 : index
    %40 = vector.load %arg8[%c0_20, %c0_21, %c0_22] : memref<4x8x32xbf16, #tpu.memory_space<vmem>>, vector<1x8x32xbf16>
    %41 = vector.shape_cast %40 : vector<1x8x32xbf16> to vector<8x32xbf16>
    %cst_23 = arith.constant dense<0.000000e+00> : vector<8x32xf32>
    %42 = tpu.matmul %39, %41, %cst_23 {dimension_numbers = #tpu.dot_dimension_numbers<[1], [0], [0], [1], [0, 0, 1, 1], [], []>} : vector<8x8xbf16>, vector<8x32xbf16>, vector<8x32xf32> -> vector<8x32xf32>
    %43 = vector.extract_strided_slice %16 {offsets = [0, 8], sizes = [8, 8], strides = [1, 1]} : vector<8x32xbf16> to vector<8x8xbf16>
    %44 = vector.extract_strided_slice %13 {offsets = [0, 8], sizes = [8, 8], strides = [1, 1]} : vector<8x32xbf16> to vector<8x8xbf16>
    "tpu.trace_start"() <{level = 10 : i32, message = "qd,kd->qk"}> : () -> ()
    %cst_24 = arith.constant dense<0.000000e+00> : vector<8x8xf32>
    %45 = tpu.matmul %43, %44, %cst_24 {dimension_numbers = #tpu.dot_dimension_numbers<[1], [1], [0], [0], [0, 0, 1, 0], [], []>} : vector<8x8xbf16>, vector<8x8xbf16>, vector<8x8xf32> -> vector<8x8xf32>
    "tpu.trace_stop"() : () -> ()
    %c0_25 = arith.constant 0 : index
    %c1 = arith.constant 1 : index
    %c0_26 = arith.constant 0 : index
    %c0_27 = arith.constant 0 : index
    %46 = vector.load %arg3[%c0_25, %c1, %c0_26, %c0_27] : memref<1x4x8x8xf32, #tpu.memory_space<vmem>>, vector<1x1x8x8xf32>
    %47 = vector.shape_cast %46 : vector<1x1x8x8xf32> to vector<8x8xf32>
    %48 = arith.addf %45, %47 : vector<8x8xf32>
    %cst_28 = arith.constant dense<0xFF800000> : vector<8xf32>
    %49 = vector.multi_reduction <maximumf>, %48, %cst_28 [1] : vector<8x8xf32> to vector<8xf32>
    %50 = vector.shape_cast %49 : vector<8xf32> to vector<8x1xf32>
    %51 = vector.broadcast %50 : vector<8x1xf32> to vector<8x8xf32>
    %52 = arith.subf %48, %51 : vector<8x8xf32>
    %53 = math.exp %52 : vector<8x8xf32>
    %cst_29 = arith.constant dense<0.000000e+00> : vector<8xf32>
    %54 = vector.multi_reduction <add>, %53, %cst_29 [1] : vector<8x8xf32> to vector<8xf32>
    %55 = vector.shape_cast %54 : vector<8xf32> to vector<8x1xf32>
    %56 = tpu.reciprocal %55 {approx = true} : vector<8x1xf32> -> vector<8x1xf32>
    %57 = vector.broadcast %56 : vector<8x1xf32> to vector<8x8xf32>
    %58 = arith.mulf %53, %57 : vector<8x8xf32>
    %c0_30 = arith.constant 0 : index
    %c0_31 = arith.constant 0 : index
    %c1_32 = arith.constant 1 : index
    %c0_33 = arith.constant 0 : index
    %c0_34 = arith.constant 0 : index
    %59 = vector.load %arg25[%c0_30, %c0_31, %c1_32, %c0_33, %c0_34] : memref<1x1x4x8x8xf32, #tpu.memory_space<vmem>>, vector<1x1x1x8x8xf32>
    %60 = vector.shape_cast %59 : vector<1x1x1x8x8xf32> to vector<8x8xf32>
    %61 = vector.shape_cast %58 : vector<8x8xf32> to vector<1x1x1x8x8xf32>
    tpu.vector_store %arg25[%c0_30, %c0_31, %c1_32, %c0_33, %c0_34], %61 {strides = array<i32>} : memref<1x1x4x8x8xf32, #tpu.memory_space<vmem>>, vector<1x1x1x8x8xf32>,
    %62 = arith.truncf %58 : vector<8x8xf32> to vector<8x8xbf16>
    %63 = vector.extract_strided_slice %15 {offsets = [0, 8], sizes = [8, 8], strides = [1, 1]} : vector<8x32xbf16> to vector<8x8xbf16>
    %cst_35 = arith.constant dense<0.000000e+00> : vector<8x8xf32>
    %64 = tpu.matmul %62, %63, %cst_35 {dimension_numbers = #tpu.dot_dimension_numbers<[1], [0], [0], [1], [0, 0, 1, 1], [], []>} : vector<8x8xbf16>, vector<8x8xbf16>, vector<8x8xf32> -> vector<8x8xf32>
    %65 = arith.truncf %64 : vector<8x8xf32> to vector<8x8xbf16>
    %c1_36 = arith.constant 1 : index
    %c0_37 = arith.constant 0 : index
    %c0_38 = arith.constant 0 : index
    %66 = vector.load %arg8[%c1_36, %c0_37, %c0_38] : memref<4x8x32xbf16, #tpu.memory_space<vmem>>, vector<1x8x32xbf16>
    %67 = vector.shape_cast %66 : vector<1x8x32xbf16> to vector<8x32xbf16>
    %cst_39 = arith.constant dense<0.000000e+00> : vector<8x32xf32>
    %68 = tpu.matmul %65, %67, %cst_39 {dimension_numbers = #tpu.dot_dimension_numbers<[1], [0], [0], [1], [0, 0, 1, 1], [], []>} : vector<8x8xbf16>, vector<8x32xbf16>, vector<8x32xf32> -> vector<8x32xf32>
    %69 = arith.addf %42, %68 : vector<8x32xf32>
    %70 = vector.extract_strided_slice %16 {offsets = [0, 16], sizes = [8, 8], strides = [1, 1]} : vector<8x32xbf16> to vector<8x8xbf16>
    %71 = vector.extract_strided_slice %13 {offsets = [0, 16], sizes = [8, 8], strides = [1, 1]} : vector<8x32xbf16> to vector<8x8xbf16>
    "tpu.trace_start"() <{level = 10 : i32, message = "qd,kd->qk"}> : () -> ()
    %cst_40 = arith.constant dense<0.000000e+00> : vector<8x8xf32>
    %72 = tpu.matmul %70, %71, %cst_40 {dimension_numbers = #tpu.dot_dimension_numbers<[1], [1], [0], [0], [0, 0, 1, 0], [], []>} : vector<8x8xbf16>, vector<8x8xbf16>, vector<8x8xf32> -> vector<8x8xf32>
    "tpu.trace_stop"() : () -> ()
    %c0_41 = arith.constant 0 : index
    %c2 = arith.constant 2 : index
    %c0_42 = arith.constant 0 : index
    %c0_43 = arith.constant 0 : index
    %73 = vector.load %arg3[%c0_41, %c2, %c0_42, %c0_43] : memref<1x4x8x8xf32, #tpu.memory_space<vmem>>, vector<1x1x8x8xf32>
    %74 = vector.shape_cast %73 : vector<1x1x8x8xf32> to vector<8x8xf32>
    %75 = arith.addf %72, %74 : vector<8x8xf32>
    %cst_44 = arith.constant dense<0xFF800000> : vector<8xf32>
    %76 = vector.multi_reduction <maximumf>, %75, %cst_44 [1] : vector<8x8xf32> to vector<8xf32>
    %77 = vector.shape_cast %76 : vector<8xf32> to vector<8x1xf32>
    %78 = vector.broadcast %77 : vector<8x1xf32> to vector<8x8xf32>
    %79 = arith.subf %75, %78 : vector<8x8xf32>
    %80 = math.exp %79 : vector<8x8xf32>
    %cst_45 = arith.constant dense<0.000000e+00> : vector<8xf32>
    %81 = vector.multi_reduction <add>, %80, %cst_45 [1] : vector<8x8xf32> to vector<8xf32>
    %82 = vector.shape_cast %81 : vector<8xf32> to vector<8x1xf32>
    %83 = tpu.reciprocal %82 {approx = true} : vector<8x1xf32> -> vector<8x1xf32>
    %84 = vector.broadcast %83 : vector<8x1xf32> to vector<8x8xf32>
    %85 = arith.mulf %80, %84 : vector<8x8xf32>
    %c0_46 = arith.constant 0 : index
    %c0_47 = arith.constant 0 : index
    %c2_48 = arith.constant 2 : index
    %c0_49 = arith.constant 0 : index
    %c0_50 = arith.constant 0 : index
    %86 = vector.load %arg25[%c0_46, %c0_47, %c2_48, %c0_49, %c0_50] : memref<1x1x4x8x8xf32, #tpu.memory_space<vmem>>, vector<1x1x1x8x8xf32>
    %87 = vector.shape_cast %86 : vector<1x1x1x8x8xf32> to vector<8x8xf32>
    %88 = vector.shape_cast %85 : vector<8x8xf32> to vector<1x1x1x8x8xf32>
    tpu.vector_store %arg25[%c0_46, %c0_47, %c2_48, %c0_49, %c0_50], %88 {strides = array<i32>} : memref<1x1x4x8x8xf32, #tpu.memory_space<vmem>>, vector<1x1x1x8x8xf32>,
    %89 = arith.truncf %85 : vector<8x8xf32> to vector<8x8xbf16>
    %90 = vector.extract_strided_slice %15 {offsets = [0, 16], sizes = [8, 8], strides = [1, 1]} : vector<8x32xbf16> to vector<8x8xbf16>
    %cst_51 = arith.constant dense<0.000000e+00> : vector<8x8xf32>
    %91 = tpu.matmul %89, %90, %cst_51 {dimension_numbers = #tpu.dot_dimension_numbers<[1], [0], [0], [1], [0, 0, 1, 1], [], []>} : vector<8x8xbf16>, vector<8x8xbf16>, vector<8x8xf32> -> vector<8x8xf32>
    %92 = arith.truncf %91 : vector<8x8xf32> to vector<8x8xbf16>
    %c2_52 = arith.constant 2 : index
    %c0_53 = arith.constant 0 : index
    %c0_54 = arith.constant 0 : index
    %93 = vector.load %arg8[%c2_52, %c0_53, %c0_54] : memref<4x8x32xbf16, #tpu.memory_space<vmem>>, vector<1x8x32xbf16>
    %94 = vector.shape_cast %93 : vector<1x8x32xbf16> to vector<8x32xbf16>
    %cst_55 = arith.constant dense<0.000000e+00> : vector<8x32xf32>
    %95 = tpu.matmul %92, %94, %cst_55 {dimension_numbers = #tpu.dot_dimension_numbers<[1], [0], [0], [1], [0, 0, 1, 1], [], []>} : vector<8x8xbf16>, vector<8x32xbf16>, vector<8x32xf32> -> vector<8x32xf32>
    %96 = arith.addf %69, %95 : vector<8x32xf32>
    %97 = vector.extract_strided_slice %16 {offsets = [0, 24], sizes = [8, 8], strides = [1, 1]} : vector<8x32xbf16> to vector<8x8xbf16>
    %98 = vector.extract_strided_slice %13 {offsets = [0, 24], sizes = [8, 8], strides = [1, 1]} : vector<8x32xbf16> to vector<8x8xbf16>
    "tpu.trace_start"() <{level = 10 : i32, message = "qd,kd->qk"}> : () -> ()
    %cst_56 = arith.constant dense<0.000000e+00> : vector<8x8xf32>
    %99 = tpu.matmul %97, %98, %cst_56 {dimension_numbers = #tpu.dot_dimension_numbers<[1], [1], [0], [0], [0, 0, 1, 0], [], []>} : vector<8x8xbf16>, vector<8x8xbf16>, vector<8x8xf32> -> vector<8x8xf32>
    "tpu.trace_stop"() : () -> ()
    %c0_57 = arith.constant 0 : index
    %c3 = arith.constant 3 : index
    %c0_58 = arith.constant 0 : index
    %c0_59 = arith.constant 0 : index
    %100 = vector.load %arg3[%c0_57, %c3, %c0_58, %c0_59] : memref<1x4x8x8xf32, #tpu.memory_space<vmem>>, vector<1x1x8x8xf32>
    %101 = vector.shape_cast %100 : vector<1x1x8x8xf32> to vector<8x8xf32>
    %102 = arith.addf %99, %101 : vector<8x8xf32>
    %cst_60 = arith.constant dense<0xFF800000> : vector<8xf32>
    %103 = vector.multi_reduction <maximumf>, %102, %cst_60 [1] : vector<8x8xf32> to vector<8xf32>
    %104 = vector.shape_cast %103 : vector<8xf32> to vector<8x1xf32>
    %105 = vector.broadcast %104 : vector<8x1xf32> to vector<8x8xf32>
    %106 = arith.subf %102, %105 : vector<8x8xf32>
    %107 = math.exp %106 : vector<8x8xf32>
    %cst_61 = arith.constant dense<0.000000e+00> : vector<8xf32>
    %108 = vector.multi_reduction <add>, %107, %cst_61 [1] : vector<8x8xf32> to vector<8xf32>
    %109 = vector.shape_cast %108 : vector<8xf32> to vector<8x1xf32>
    %110 = tpu.reciprocal %109 {approx = true} : vector<8x1xf32> -> vector<8x1xf32>
    %111 = vector.broadcast %110 : vector<8x1xf32> to vector<8x8xf32>
    %112 = arith.mulf %107, %111 : vector<8x8xf32>
    %c0_62 = arith.constant 0 : index
    %c0_63 = arith.constant 0 : index
    %c3_64 = arith.constant 3 : index
    %c0_65 = arith.constant 0 : index
    %c0_66 = arith.constant 0 : index
    %113 = vector.load %arg25[%c0_62, %c0_63, %c3_64, %c0_65, %c0_66] : memref<1x1x4x8x8xf32, #tpu.memory_space<vmem>>, vector<1x1x1x8x8xf32>
    %114 = vector.shape_cast %113 : vector<1x1x1x8x8xf32> to vector<8x8xf32>
    %115 = vector.shape_cast %112 : vector<8x8xf32> to vector<1x1x1x8x8xf32>
    tpu.vector_store %arg25[%c0_62, %c0_63, %c3_64, %c0_65, %c0_66], %115 {strides = array<i32>} : memref<1x1x4x8x8xf32, #tpu.memory_space<vmem>>, vector<1x1x1x8x8xf32>,
    %116 = arith.truncf %112 : vector<8x8xf32> to vector<8x8xbf16>
    %117 = vector.extract_strided_slice %15 {offsets = [0, 24], sizes = [8, 8], strides = [1, 1]} : vector<8x32xbf16> to vector<8x8xbf16>
    %cst_67 = arith.constant dense<0.000000e+00> : vector<8x8xf32>
    %118 = tpu.matmul %116, %117, %cst_67 {dimension_numbers = #tpu.dot_dimension_numbers<[1], [0], [0], [1], [0, 0, 1, 1], [], []>} : vector<8x8xbf16>, vector<8x8xbf16>, vector<8x8xf32> -> vector<8x8xf32>
    %119 = arith.truncf %118 : vector<8x8xf32> to vector<8x8xbf16>
    %c3_68 = arith.constant 3 : index
    %c0_69 = arith.constant 0 : index
    %c0_70 = arith.constant 0 : index
    %120 = vector.load %arg8[%c3_68, %c0_69, %c0_70] : memref<4x8x32xbf16, #tpu.memory_space<vmem>>, vector<1x8x32xbf16>
    %121 = vector.shape_cast %120 : vector<1x8x32xbf16> to vector<8x32xbf16>
    %cst_71 = arith.constant dense<0.000000e+00> : vector<8x32xf32>
    %122 = tpu.matmul %119, %121, %cst_71 {dimension_numbers = #tpu.dot_dimension_numbers<[1], [0], [0], [1], [0, 0, 1, 1], [], []>} : vector<8x8xbf16>, vector<8x32xbf16>, vector<8x32xf32> -> vector<8x32xf32>
    %123 = arith.addf %96, %122 : vector<8x32xf32>
    %c0_72 = arith.constant 0 : index
    %c0_73 = arith.constant 0 : index
    %124 = vector.load %arg9[%c0_72, %c0_73] : memref<1x32xf32, #tpu.memory_space<vmem>>, vector<1x32xf32>
    %125 = vector.broadcast %124 : vector<1x32xf32> to vector<8x32xf32>
    %126 = arith.addf %123, %125 : vector<8x32xf32>
    %127 = arith.addf %4, %126 : vector<8x32xf32>
    %cst_74 = arith.constant dense<0.000000e+00> : vector<8xf32>
    %128 = vector.multi_reduction <add>, %127, %cst_74 [1] : vector<8x32xf32> to vector<8xf32>
    %129 = vector.shape_cast %128 : vector<8xf32> to vector<8x1xf32>
    %cst_75 = arith.constant 3.200000e+01 : f32
    %130 = vector.broadcast %cst_75 : f32 to vector<8x1xf32>
    %131 = arith.divf %129, %130 : vector<8x1xf32>
    %132 = vector.broadcast %131 : vector<8x1xf32> to vector<8x32xf32>
    %133 = arith.subf %127, %132 : vector<8x32xf32>
    %134 = arith.mulf %133, %133 : vector<8x32xf32>
    %cst_76 = arith.constant dense<0.000000e+00> : vector<8xf32>
    %135 = vector.multi_reduction <add>, %134, %cst_76 [1] : vector<8x32xf32> to vector<8xf32>
    %136 = vector.shape_cast %135 : vector<8xf32> to vector<8x1xf32>
    %cst_77 = arith.constant 3.200000e+01 : f32
    %137 = vector.broadcast %cst_77 : f32 to vector<8x1xf32>
    %138 = arith.divf %136, %137 : vector<8x1xf32>
    %139 = vector.broadcast %131 : vector<8x1xf32> to vector<8x32xf32>
    %140 = arith.subf %127, %139 : vector<8x32xf32>
    %cst_78 = arith.constant 9.99999974E-6 : f32
    %141 = vector.broadcast %cst_78 : f32 to vector<8x1xf32>
    %142 = arith.addf %138, %141 : vector<8x1xf32>
    %143 = math.rsqrt %142 : vector<8x1xf32>
    %144 = vector.broadcast %143 : vector<8x1xf32> to vector<8x32xf32>
    %145 = arith.mulf %140, %144 : vector<8x32xf32>
    %c0_79 = arith.constant 0 : index
    %c0_80 = arith.constant 0 : index
    %146 = vector.load %arg10[%c0_79, %c0_80] : memref<1x32xf32, #tpu.memory_space<vmem>>, vector<1x32xf32>
    %147 = vector.broadcast %146 : vector<1x32xf32> to vector<8x32xf32>
    %148 = arith.mulf %145, %147 : vector<8x32xf32>
    %c0_81 = arith.constant 0 : index
    %c0_82 = arith.constant 0 : index
    %149 = vector.load %arg11[%c0_81, %c0_82] : memref<1x32xf32, #tpu.memory_space<vmem>>, vector<1x32xf32>
    %150 = vector.broadcast %149 : vector<1x32xf32> to vector<8x32xf32>
    %151 = arith.addf %148, %150 : vector<8x32xf32>
    %152 = arith.truncf %151 : vector<8x32xf32> to vector<8x32xbf16>
    %c0_83 = arith.constant 0 : index
    %c0_84 = arith.constant 0 : index
    %153 = vector.load %arg12[%c0_83, %c0_84] : memref<32x32xbf16, #tpu.memory_space<vmem>>, vector<32x32xbf16>
    %cst_85 = arith.constant dense<0.000000e+00> : vector<8x32xf32>
    %154 = tpu.matmul %152, %153, %cst_85 {dimension_numbers = #tpu.dot_dimension_numbers<[1], [0], [0], [1], [0, 0, 1, 1], [], []>} : vector<8x32xbf16>, vector<32x32xbf16>, vector<8x32xf32> -> vector<8x32xf32>
    %c0_86 = arith.constant 0 : index
    %c0_87 = arith.constant 0 : index
    %155 = vector.load %arg13[%c0_86, %c0_87] : memref<1x32xf32, #tpu.memory_space<vmem>>, vector<1x32xf32>
    %156 = vector.broadcast %155 : vector<1x32xf32> to vector<8x32xf32>
    %157 = arith.addf %154, %156 : vector<8x32xf32>
    %c0_88 = arith.constant 0 : index
    %c0_89 = arith.constant 0 : index
    %c0_90 = arith.constant 0 : index
    %158 = vector.load %arg5[%c0_88, %c0_89, %c0_90] : memref<1x8x64xbf16, #tpu.memory_space<vmem>>, vector<1x8x64xbf16>
    %159 = vector.shape_cast %158 : vector<1x8x64xbf16> to vector<8x64xbf16>
    %160 = vector.extract_strided_slice %159 {offsets = [0, 0], sizes = [8, 32], strides = [1, 1]} : vector<8x64xbf16> to vector<8x32xbf16>
    %161 = vector.extract_strided_slice %159 {offsets = [0, 32], sizes = [8, 32], strides = [1, 1]} : vector<8x64xbf16> to vector<8x32xbf16>
    %162 = arith.truncf %157 : vector<8x32xf32> to vector<8x32xbf16>
    %163 = vector.extract_strided_slice %162 {offsets = [0, 0], sizes = [8, 8], strides = [1, 1]} : vector<8x32xbf16> to vector<8x8xbf16>
    %164 = vector.extract_strided_slice %160 {offsets = [0, 0], sizes = [8, 8], strides = [1, 1]} : vector<8x32xbf16> to vector<8x8xbf16>
    "tpu.trace_start"() <{level = 10 : i32, message = "qd,kd->qk"}> : () -> ()
    %cst_91 = arith.constant dense<0.000000e+00> : vector<8x8xf32>
    %165 = tpu.matmul %163, %164, %cst_91 {dimension_numbers = #tpu.dot_dimension_numbers<[1], [1], [0], [0], [0, 0, 1, 0], [], []>} : vector<8x8xbf16>, vector<8x8xbf16>, vector<8x8xf32> -> vector<8x8xf32>
    "tpu.trace_stop"() : () -> ()
    %c0_92 = arith.constant 0 : index
    %c0_93 = arith.constant 0 : index
    %c0_94 = arith.constant 0 : index
    %c0_95 = arith.constant 0 : index
    %166 = vector.load %arg4[%c0_92, %c0_93, %c0_94, %c0_95] : memref<1x4x8x8xf32, #tpu.memory_space<vmem>>, vector<1x1x8x8xf32>
    %167 = vector.shape_cast %166 : vector<1x1x8x8xf32> to vector<8x8xf32>
    %168 = arith.addf %165, %167 : vector<8x8xf32>
    %cst_96 = arith.constant dense<0xFF800000> : vector<8xf32>
    %169 = vector.multi_reduction <maximumf>, %168, %cst_96 [1] : vector<8x8xf32> to vector<8xf32>
    %170 = vector.shape_cast %169 : vector<8xf32> to vector<8x1xf32>
    %171 = vector.broadcast %170 : vector<8x1xf32> to vector<8x8xf32>
    %172 = arith.subf %168, %171 : vector<8x8xf32>
    %173 = math.exp %172 : vector<8x8xf32>
    %cst_97 = arith.constant dense<0.000000e+00> : vector<8xf32>
    %174 = vector.multi_reduction <add>, %173, %cst_97 [1] : vector<8x8xf32> to vector<8xf32>
    %175 = vector.shape_cast %174 : vector<8xf32> to vector<8x1xf32>
    %176 = tpu.reciprocal %175 {approx = true} : vector<8x1xf32> -> vector<8x1xf32>
    %177 = vector.broadcast %176 : vector<8x1xf32> to vector<8x8xf32>
    %178 = arith.mulf %173, %177 : vector<8x8xf32>
    %c0_98 = arith.constant 0 : index
    %c0_99 = arith.constant 0 : index
    %c0_100 = arith.constant 0 : index
    %c0_101 = arith.constant 0 : index
    %c0_102 = arith.constant 0 : index
    %179 = vector.load %arg26[%c0_98, %c0_99, %c0_100, %c0_101, %c0_102] : memref<1x1x4x8x8xf32, #tpu.memory_space<vmem>>, vector<1x1x1x8x8xf32>
    %180 = vector.shape_cast %179 : vector<1x1x1x8x8xf32> to vector<8x8xf32>
    %181 = vector.shape_cast %178 : vector<8x8xf32> to vector<1x1x1x8x8xf32>
    tpu.vector_store %arg26[%c0_98, %c0_99, %c0_100, %c0_101, %c0_102], %181 {strides = array<i32>} : memref<1x1x4x8x8xf32, #tpu.memory_space<vmem>>, vector<1x1x1x8x8xf32>,
    %182 = arith.truncf %178 : vector<8x8xf32> to vector<8x8xbf16>
    %183 = vector.extract_strided_slice %161 {offsets = [0, 0], sizes = [8, 8], strides = [1, 1]} : vector<8x32xbf16> to vector<8x8xbf16>
    %cst_103 = arith.constant dense<0.000000e+00> : vector<8x8xf32>
    %184 = tpu.matmul %182, %183, %cst_103 {dimension_numbers = #tpu.dot_dimension_numbers<[1], [0], [0], [1], [0, 0, 1, 1], [], []>} : vector<8x8xbf16>, vector<8x8xbf16>, vector<8x8xf32> -> vector<8x8xf32>
    %185 = arith.truncf %184 : vector<8x8xf32> to vector<8x8xbf16>
    %c0_104 = arith.constant 0 : index
    %c0_105 = arith.constant 0 : index
    %c0_106 = arith.constant 0 : index
    %186 = vector.load %arg14[%c0_104, %c0_105, %c0_106] : memref<4x8x32xbf16, #tpu.memory_space<vmem>>, vector<1x8x32xbf16>
    %187 = vector.shape_cast %186 : vector<1x8x32xbf16> to vector<8x32xbf16>
    %cst_107 = arith.constant dense<0.000000e+00> : vector<8x32xf32>
    %188 = tpu.matmul %185, %187, %cst_107 {dimension_numbers = #tpu.dot_dimension_numbers<[1], [0], [0], [1], [0, 0, 1, 1], [], []>} : vector<8x8xbf16>, vector<8x32xbf16>, vector<8x32xf32> -> vector<8x32xf32>
    %189 = vector.extract_strided_slice %162 {offsets = [0, 8], sizes = [8, 8], strides = [1, 1]} : vector<8x32xbf16> to vector<8x8xbf16>
    %190 = vector.extract_strided_slice %160 {offsets = [0, 8], sizes = [8, 8], strides = [1, 1]} : vector<8x32xbf16> to vector<8x8xbf16>
    "tpu.trace_start"() <{level = 10 : i32, message = "qd,kd->qk"}> : () -> ()
    %cst_108 = arith.constant dense<0.000000e+00> : vector<8x8xf32>
    %191 = tpu.matmul %189, %190, %cst_108 {dimension_numbers = #tpu.dot_dimension_numbers<[1], [1], [0], [0], [0, 0, 1, 0], [], []>} : vector<8x8xbf16>, vector<8x8xbf16>, vector<8x8xf32> -> vector<8x8xf32>
    "tpu.trace_stop"() : () -> ()
    %c0_109 = arith.constant 0 : index
    %c1_110 = arith.constant 1 : index
    %c0_111 = arith.constant 0 : index
    %c0_112 = arith.constant 0 : index
    %192 = vector.load %arg4[%c0_109, %c1_110, %c0_111, %c0_112] : memref<1x4x8x8xf32, #tpu.memory_space<vmem>>, vector<1x1x8x8xf32>
    %193 = vector.shape_cast %192 : vector<1x1x8x8xf32> to vector<8x8xf32>
    %194 = arith.addf %191, %193 : vector<8x8xf32>
    %cst_113 = arith.constant dense<0xFF800000> : vector<8xf32>
    %195 = vector.multi_reduction <maximumf>, %194, %cst_113 [1] : vector<8x8xf32> to vector<8xf32>
    %196 = vector.shape_cast %195 : vector<8xf32> to vector<8x1xf32>
    %197 = vector.broadcast %196 : vector<8x1xf32> to vector<8x8xf32>
    %198 = arith.subf %194, %197 : vector<8x8xf32>
    %199 = math.exp %198 : vector<8x8xf32>
    %cst_114 = arith.constant dense<0.000000e+00> : vector<8xf32>
    %200 = vector.multi_reduction <add>, %199, %cst_114 [1] : vector<8x8xf32> to vector<8xf32>
    %201 = vector.shape_cast %200 : vector<8xf32> to vector<8x1xf32>
    %202 = tpu.reciprocal %201 {approx = true} : vector<8x1xf32> -> vector<8x1xf32>
    %203 = vector.broadcast %202 : vector<8x1xf32> to vector<8x8xf32>
    %204 = arith.mulf %199, %203 : vector<8x8xf32>
    %c0_115 = arith.constant 0 : index
    %c0_116 = arith.constant 0 : index
    %c1_117 = arith.constant 1 : index
    %c0_118 = arith.constant 0 : index
    %c0_119 = arith.constant 0 : index
    %205 = vector.load %arg26[%c0_115, %c0_116, %c1_117, %c0_118, %c0_119] : memref<1x1x4x8x8xf32, #tpu.memory_space<vmem>>, vector<1x1x1x8x8xf32>
    %206 = vector.shape_cast %205 : vector<1x1x1x8x8xf32> to vector<8x8xf32>
    %207 = vector.shape_cast %204 : vector<8x8xf32> to vector<1x1x1x8x8xf32>
    tpu.vector_store %arg26[%c0_115, %c0_116, %c1_117, %c0_118, %c0_119], %207 {strides = array<i32>} : memref<1x1x4x8x8xf32, #tpu.memory_space<vmem>>, vector<1x1x1x8x8xf32>,
    %208 = arith.truncf %204 : vector<8x8xf32> to vector<8x8xbf16>
    %209 = vector.extract_strided_slice %161 {offsets = [0, 8], sizes = [8, 8], strides = [1, 1]} : vector<8x32xbf16> to vector<8x8xbf16>
    %cst_120 = arith.constant dense<0.000000e+00> : vector<8x8xf32>
    %210 = tpu.matmul %208, %209, %cst_120 {dimension_numbers = #tpu.dot_dimension_numbers<[1], [0], [0], [1], [0, 0, 1, 1], [], []>} : vector<8x8xbf16>, vector<8x8xbf16>, vector<8x8xf32> -> vector<8x8xf32>
    %211 = arith.truncf %210 : vector<8x8xf32> to vector<8x8xbf16>
    %c1_121 = arith.constant 1 : index
    %c0_122 = arith.constant 0 : index
    %c0_123 = arith.constant 0 : index
    %212 = vector.load %arg14[%c1_121, %c0_122, %c0_123] : memref<4x8x32xbf16, #tpu.memory_space<vmem>>, vector<1x8x32xbf16>
    %213 = vector.shape_cast %212 : vector<1x8x32xbf16> to vector<8x32xbf16>
    %cst_124 = arith.constant dense<0.000000e+00> : vector<8x32xf32>
    %214 = tpu.matmul %211, %213, %cst_124 {dimension_numbers = #tpu.dot_dimension_numbers<[1], [0], [0], [1], [0, 0, 1, 1], [], []>} : vector<8x8xbf16>, vector<8x32xbf16>, vector<8x32xf32> -> vector<8x32xf32>
    %215 = arith.addf %188, %214 : vector<8x32xf32>
    %216 = vector.extract_strided_slice %162 {offsets = [0, 16], sizes = [8, 8], strides = [1, 1]} : vector<8x32xbf16> to vector<8x8xbf16>
    %217 = vector.extract_strided_slice %160 {offsets = [0, 16], sizes = [8, 8], strides = [1, 1]} : vector<8x32xbf16> to vector<8x8xbf16>
    "tpu.trace_start"() <{level = 10 : i32, message = "qd,kd->qk"}> : () -> ()
    %cst_125 = arith.constant dense<0.000000e+00> : vector<8x8xf32>
    %218 = tpu.matmul %216, %217, %cst_125 {dimension_numbers = #tpu.dot_dimension_numbers<[1], [1], [0], [0], [0, 0, 1, 0], [], []>} : vector<8x8xbf16>, vector<8x8xbf16>, vector<8x8xf32> -> vector<8x8xf32>
    "tpu.trace_stop"() : () -> ()
    %c0_126 = arith.constant 0 : index
    %c2_127 = arith.constant 2 : index
    %c0_128 = arith.constant 0 : index
    %c0_129 = arith.constant 0 : index
    %219 = vector.load %arg4[%c0_126, %c2_127, %c0_128, %c0_129] : memref<1x4x8x8xf32, #tpu.memory_space<vmem>>, vector<1x1x8x8xf32>
    %220 = vector.shape_cast %219 : vector<1x1x8x8xf32> to vector<8x8xf32>
    %221 = arith.addf %218, %220 : vector<8x8xf32>
    %cst_130 = arith.constant dense<0xFF800000> : vector<8xf32>
    %222 = vector.multi_reduction <maximumf>, %221, %cst_130 [1] : vector<8x8xf32> to vector<8xf32>
    %223 = vector.shape_cast %222 : vector<8xf32> to vector<8x1xf32>
    %224 = vector.broadcast %223 : vector<8x1xf32> to vector<8x8xf32>
    %225 = arith.subf %221, %224 : vector<8x8xf32>
    %226 = math.exp %225 : vector<8x8xf32>
    %cst_131 = arith.constant dense<0.000000e+00> : vector<8xf32>
    %227 = vector.multi_reduction <add>, %226, %cst_131 [1] : vector<8x8xf32> to vector<8xf32>
    %228 = vector.shape_cast %227 : vector<8xf32> to vector<8x1xf32>
    %229 = tpu.reciprocal %228 {approx = true} : vector<8x1xf32> -> vector<8x1xf32>
    %230 = vector.broadcast %229 : vector<8x1xf32> to vector<8x8xf32>
    %231 = arith.mulf %226, %230 : vector<8x8xf32>
    %c0_132 = arith.constant 0 : index
    %c0_133 = arith.constant 0 : index
    %c2_134 = arith.constant 2 : index
    %c0_135 = arith.constant 0 : index
    %c0_136 = arith.constant 0 : index
    %232 = vector.load %arg26[%c0_132, %c0_133, %c2_134, %c0_135, %c0_136] : memref<1x1x4x8x8xf32, #tpu.memory_space<vmem>>, vector<1x1x1x8x8xf32>
    %233 = vector.shape_cast %232 : vector<1x1x1x8x8xf32> to vector<8x8xf32>
    %234 = vector.shape_cast %231 : vector<8x8xf32> to vector<1x1x1x8x8xf32>
    tpu.vector_store %arg26[%c0_132, %c0_133, %c2_134, %c0_135, %c0_136], %234 {strides = array<i32>} : memref<1x1x4x8x8xf32, #tpu.memory_space<vmem>>, vector<1x1x1x8x8xf32>,
    %235 = arith.truncf %231 : vector<8x8xf32> to vector<8x8xbf16>
    %236 = vector.extract_strided_slice %161 {offsets = [0, 16], sizes = [8, 8], strides = [1, 1]} : vector<8x32xbf16> to vector<8x8xbf16>
    %cst_137 = arith.constant dense<0.000000e+00> : vector<8x8xf32>
    %237 = tpu.matmul %235, %236, %cst_137 {dimension_numbers = #tpu.dot_dimension_numbers<[1], [0], [0], [1], [0, 0, 1, 1], [], []>} : vector<8x8xbf16>, vector<8x8xbf16>, vector<8x8xf32> -> vector<8x8xf32>
    %238 = arith.truncf %237 : vector<8x8xf32> to vector<8x8xbf16>
    %c2_138 = arith.constant 2 : index
    %c0_139 = arith.constant 0 : index
    %c0_140 = arith.constant 0 : index
    %239 = vector.load %arg14[%c2_138, %c0_139, %c0_140] : memref<4x8x32xbf16, #tpu.memory_space<vmem>>, vector<1x8x32xbf16>
    %240 = vector.shape_cast %239 : vector<1x8x32xbf16> to vector<8x32xbf16>
    %cst_141 = arith.constant dense<0.000000e+00> : vector<8x32xf32>
    %241 = tpu.matmul %238, %240, %cst_141 {dimension_numbers = #tpu.dot_dimension_numbers<[1], [0], [0], [1], [0, 0, 1, 1], [], []>} : vector<8x8xbf16>, vector<8x32xbf16>, vector<8x32xf32> -> vector<8x32xf32>
    %242 = arith.addf %215, %241 : vector<8x32xf32>
    %243 = vector.extract_strided_slice %162 {offsets = [0, 24], sizes = [8, 8], strides = [1, 1]} : vector<8x32xbf16> to vector<8x8xbf16>
    %244 = vector.extract_strided_slice %160 {offsets = [0, 24], sizes = [8, 8], strides = [1, 1]} : vector<8x32xbf16> to vector<8x8xbf16>
    "tpu.trace_start"() <{level = 10 : i32, message = "qd,kd->qk"}> : () -> ()
    %cst_142 = arith.constant dense<0.000000e+00> : vector<8x8xf32>
    %245 = tpu.matmul %243, %244, %cst_142 {dimension_numbers = #tpu.dot_dimension_numbers<[1], [1], [0], [0], [0, 0, 1, 0], [], []>} : vector<8x8xbf16>, vector<8x8xbf16>, vector<8x8xf32> -> vector<8x8xf32>
    "tpu.trace_stop"() : () -> ()
    %c0_143 = arith.constant 0 : index
    %c3_144 = arith.constant 3 : index
    %c0_145 = arith.constant 0 : index
    %c0_146 = arith.constant 0 : index
    %246 = vector.load %arg4[%c0_143, %c3_144, %c0_145, %c0_146] : memref<1x4x8x8xf32, #tpu.memory_space<vmem>>, vector<1x1x8x8xf32>
    %247 = vector.shape_cast %246 : vector<1x1x8x8xf32> to vector<8x8xf32>
    %248 = arith.addf %245, %247 : vector<8x8xf32>
    %cst_147 = arith.constant dense<0xFF800000> : vector<8xf32>
    %249 = vector.multi_reduction <maximumf>, %248, %cst_147 [1] : vector<8x8xf32> to vector<8xf32>
    %250 = vector.shape_cast %249 : vector<8xf32> to vector<8x1xf32>
    %251 = vector.broadcast %250 : vector<8x1xf32> to vector<8x8xf32>
    %252 = arith.subf %248, %251 : vector<8x8xf32>
    %253 = math.exp %252 : vector<8x8xf32>
    %cst_148 = arith.constant dense<0.000000e+00> : vector<8xf32>
    %254 = vector.multi_reduction <add>, %253, %cst_148 [1] : vector<8x8xf32> to vector<8xf32>
    %255 = vector.shape_cast %254 : vector<8xf32> to vector<8x1xf32>
    %256 = tpu.reciprocal %255 {approx = true} : vector<8x1xf32> -> vector<8x1xf32>
    %257 = vector.broadcast %256 : vector<8x1xf32> to vector<8x8xf32>
    %258 = arith.mulf %253, %257 : vector<8x8xf32>
    %c0_149 = arith.constant 0 : index
    %c0_150 = arith.constant 0 : index
    %c3_151 = arith.constant 3 : index
    %c0_152 = arith.constant 0 : index
    %c0_153 = arith.constant 0 : index
    %259 = vector.load %arg26[%c0_149, %c0_150, %c3_151, %c0_152, %c0_153] : memref<1x1x4x8x8xf32, #tpu.memory_space<vmem>>, vector<1x1x1x8x8xf32>
    %260 = vector.shape_cast %259 : vector<1x1x1x8x8xf32> to vector<8x8xf32>
    %261 = vector.shape_cast %258 : vector<8x8xf32> to vector<1x1x1x8x8xf32>
    tpu.vector_store %arg26[%c0_149, %c0_150, %c3_151, %c0_152, %c0_153], %261 {strides = array<i32>} : memref<1x1x4x8x8xf32, #tpu.memory_space<vmem>>, vector<1x1x1x8x8xf32>,
    %262 = arith.truncf %258 : vector<8x8xf32> to vector<8x8xbf16>
    %263 = vector.extract_strided_slice %161 {offsets = [0, 24], sizes = [8, 8], strides = [1, 1]} : vector<8x32xbf16> to vector<8x8xbf16>
    %cst_154 = arith.constant dense<0.000000e+00> : vector<8x8xf32>
    %264 = tpu.matmul %262, %263, %cst_154 {dimension_numbers = #tpu.dot_dimension_numbers<[1], [0], [0], [1], [0, 0, 1, 1], [], []>} : vector<8x8xbf16>, vector<8x8xbf16>, vector<8x8xf32> -> vector<8x8xf32>
    %265 = arith.truncf %264 : vector<8x8xf32> to vector<8x8xbf16>
    %c3_155 = arith.constant 3 : index
    %c0_156 = arith.constant 0 : index
    %c0_157 = arith.constant 0 : index
    %266 = vector.load %arg14[%c3_155, %c0_156, %c0_157] : memref<4x8x32xbf16, #tpu.memory_space<vmem>>, vector<1x8x32xbf16>
    %267 = vector.shape_cast %266 : vector<1x8x32xbf16> to vector<8x32xbf16>
    %cst_158 = arith.constant dense<0.000000e+00> : vector<8x32xf32>
    %268 = tpu.matmul %265, %267, %cst_158 {dimension_numbers = #tpu.dot_dimension_numbers<[1], [0], [0], [1], [0, 0, 1, 1], [], []>} : vector<8x8xbf16>, vector<8x32xbf16>, vector<8x32xf32> -> vector<8x32xf32>
    %269 = arith.addf %242, %268 : vector<8x32xf32>
    %c0_159 = arith.constant 0 : index
    %c0_160 = arith.constant 0 : index
    %270 = vector.load %arg15[%c0_159, %c0_160] : memref<1x32xf32, #tpu.memory_space<vmem>>, vector<1x32xf32>
    %271 = vector.broadcast %270 : vector<1x32xf32> to vector<8x32xf32>
    %272 = arith.addf %269, %271 : vector<8x32xf32>
    %273 = arith.addf %151, %272 : vector<8x32xf32>
    %cst_161 = arith.constant dense<0.000000e+00> : vector<8xf32>
    %274 = vector.multi_reduction <add>, %273, %cst_161 [1] : vector<8x32xf32> to vector<8xf32>
    %275 = vector.shape_cast %274 : vector<8xf32> to vector<8x1xf32>
    %cst_162 = arith.constant 3.200000e+01 : f32
    %276 = vector.broadcast %cst_162 : f32 to vector<8x1xf32>
    %277 = arith.divf %275, %276 : vector<8x1xf32>
    %278 = vector.broadcast %277 : vector<8x1xf32> to vector<8x32xf32>
    %279 = arith.subf %273, %278 : vector<8x32xf32>
    %280 = arith.mulf %279, %279 : vector<8x32xf32>
    %cst_163 = arith.constant dense<0.000000e+00> : vector<8xf32>
    %281 = vector.multi_reduction <add>, %280, %cst_163 [1] : vector<8x32xf32> to vector<8xf32>
    %282 = vector.shape_cast %281 : vector<8xf32> to vector<8x1xf32>
    %cst_164 = arith.constant 3.200000e+01 : f32
    %283 = vector.broadcast %cst_164 : f32 to vector<8x1xf32>
    %284 = arith.divf %282, %283 : vector<8x1xf32>
    %285 = vector.broadcast %277 : vector<8x1xf32> to vector<8x32xf32>
    %286 = arith.subf %273, %285 : vector<8x32xf32>
    %cst_165 = arith.constant 9.99999996E-13 : f32
    %287 = vector.broadcast %cst_165 : f32 to vector<8x1xf32>
    %288 = arith.addf %284, %287 : vector<8x1xf32>
    %289 = math.rsqrt %288 : vector<8x1xf32>
    %290 = vector.broadcast %289 : vector<8x1xf32> to vector<8x32xf32>
    %291 = arith.mulf %286, %290 : vector<8x32xf32>
    %c0_166 = arith.constant 0 : index
    %c0_167 = arith.constant 0 : index
    %292 = vector.load %arg16[%c0_166, %c0_167] : memref<1x32xf32, #tpu.memory_space<vmem>>, vector<1x32xf32>
    %293 = vector.broadcast %292 : vector<1x32xf32> to vector<8x32xf32>
    %294 = arith.mulf %291, %293 : vector<8x32xf32>
    %c0_168 = arith.constant 0 : index
    %c0_169 = arith.constant 0 : index
    %295 = vector.load %arg17[%c0_168, %c0_169] : memref<1x32xf32, #tpu.memory_space<vmem>>, vector<1x32xf32>
    %296 = vector.broadcast %295 : vector<1x32xf32> to vector<8x32xf32>
    %297 = arith.addf %294, %296 : vector<8x32xf32>
    %298 = arith.truncf %297 : vector<8x32xf32> to vector<8x32xbf16>
    %c0_170 = arith.constant 0 : index
    %c0_171 = arith.constant 0 : index
    %299 = vector.load %arg18[%c0_170, %c0_171] : memref<32x128xbf16, #tpu.memory_space<vmem>>, vector<32x128xbf16>
    %cst_172 = arith.constant dense<0.000000e+00> : vector<8x128xf32>
    %300 = tpu.matmul %298, %299, %cst_172 {dimension_numbers = #tpu.dot_dimension_numbers<[1], [0], [0], [1], [0, 0, 1, 1], [], []>} : vector<8x32xbf16>, vector<32x128xbf16>, vector<8x128xf32> -> vector<8x128xf32>
    %c0_173 = arith.constant 0 : index
    %c0_174 = arith.constant 0 : index
    %301 = vector.load %arg19[%c0_173, %c0_174] : memref<1x128xf32, #tpu.memory_space<vmem>>, vector<1x128xf32>
    %302 = vector.broadcast %301 : vector<1x128xf32> to vector<8x128xf32>
    %303 = arith.addf %300, %302 : vector<8x128xf32>
    %cst_175 = arith.constant 5.000000e-01 : f32
    %304 = vector.broadcast %cst_175 : f32 to vector<8x128xf32>
    %305 = arith.mulf %304, %303 : vector<8x128xf32>
    %cst_176 = arith.constant 0.707106769 : f32
    %306 = vector.broadcast %cst_176 : f32 to vector<8x128xf32>
    %307 = arith.mulf %303, %306 : vector<8x128xf32>
    %308 = math.erf %307 : vector<8x128xf32>
    %cst_177 = arith.constant 1.000000e+00 : f32
    %309 = vector.broadcast %cst_177 : f32 to vector<8x128xf32>
    %310 = arith.addf %309, %308 : vector<8x128xf32>
    %311 = arith.mulf %305, %310 : vector<8x128xf32>
    %312 = arith.truncf %311 : vector<8x128xf32> to vector<8x128xbf16>
    %c0_178 = arith.constant 0 : index
    %c0_179 = arith.constant 0 : index
    %313 = vector.load %arg20[%c0_178, %c0_179] : memref<128x32xbf16, #tpu.memory_space<vmem>>, vector<128x32xbf16>
    %cst_180 = arith.constant dense<0.000000e+00> : vector<8x32xf32>
    %314 = tpu.matmul %312, %313, %cst_180 {dimension_numbers = #tpu.dot_dimension_numbers<[1], [0], [0], [1], [0, 0, 1, 1], [], []>} : vector<8x128xbf16>, vector<128x32xbf16>, vector<8x32xf32> -> vector<8x32xf32>
    %c0_181 = arith.constant 0 : index
    %c0_182 = arith.constant 0 : index
    %315 = vector.load %arg21[%c0_181, %c0_182] : memref<1x32xf32, #tpu.memory_space<vmem>>, vector<1x32xf32>
    %316 = vector.broadcast %315 : vector<1x32xf32> to vector<8x32xf32>
    %317 = arith.addf %314, %316 : vector<8x32xf32>
    %318 = arith.addf %297, %317 : vector<8x32xf32>
    %cst_183 = arith.constant dense<0.000000e+00> : vector<8xf32>
    %319 = vector.multi_reduction <add>, %318, %cst_183 [1] : vector<8x32xf32> to vector<8xf32>
    %320 = vector.shape_cast %319 : vector<8xf32> to vector<8x1xf32>
    %cst_184 = arith.constant 3.200000e+01 : f32
    %321 = vector.broadcast %cst_184 : f32 to vector<8x1xf32>
    %322 = arith.divf %320, %321 : vector<8x1xf32>
    %323 = vector.broadcast %322 : vector<8x1xf32> to vector<8x32xf32>
    %324 = arith.subf %318, %323 : vector<8x32xf32>
    %325 = arith.mulf %324, %324 : vector<8x32xf32>
    %cst_185 = arith.constant dense<0.000000e+00> : vector<8xf32>
    %326 = vector.multi_reduction <add>, %325, %cst_185 [1] : vector<8x32xf32> to vector<8xf32>
    %327 = vector.shape_cast %326 : vector<8xf32> to vector<8x1xf32>
    %cst_186 = arith.constant 3.200000e+01 : f32
    %328 = vector.broadcast %cst_186 : f32 to vector<8x1xf32>
    %329 = arith.divf %327, %328 : vector<8x1xf32>
    %330 = vector.broadcast %322 : vector<8x1xf32> to vector<8x32xf32>
    %331 = arith.subf %318, %330 : vector<8x32xf32>
    %cst_187 = arith.constant 9.99999996E-13 : f32
    %332 = vector.broadcast %cst_187 : f32 to vector<8x1xf32>
    %333 = arith.addf %329, %332 : vector<8x1xf32>
    %334 = math.rsqrt %333 : vector<8x1xf32>
    %335 = vector.broadcast %334 : vector<8x1xf32> to vector<8x32xf32>
    %336 = arith.mulf %331, %335 : vector<8x32xf32>
    %c0_188 = arith.constant 0 : index
    %c0_189 = arith.constant 0 : index
    %337 = vector.load %arg22[%c0_188, %c0_189] : memref<1x32xf32, #tpu.memory_space<vmem>>, vector<1x32xf32>
    %338 = vector.broadcast %337 : vector<1x32xf32> to vector<8x32xf32>
    %339 = arith.mulf %336, %338 : vector<8x32xf32>
    %c0_190 = arith.constant 0 : index
    %c0_191 = arith.constant 0 : index
    %340 = vector.load %arg23[%c0_190, %c0_191] : memref<1x32xf32, #tpu.memory_space<vmem>>, vector<1x32xf32>
    %341 = vector.broadcast %340 : vector<1x32xf32> to vector<8x32xf32>
    %342 = arith.addf %339, %341 : vector<8x32xf32>
    %c0_192 = arith.constant 0 : index
    %c0_193 = arith.constant 0 : index
    %c0_194 = arith.constant 0 : index
    %343 = vector.load %arg24[%c0_192, %c0_193, %c0_194] : memref<1x8x32xf32, #tpu.memory_space<vmem>>, vector<1x8x32xf32>
    %344 = vector.shape_cast %343 : vector<1x8x32xf32> to vector<8x32xf32>
    %345 = vector.shape_cast %342 : vector<8x32xf32> to vector<1x8x32xf32>
    tpu.vector_store %arg24[%c0_192, %c0_193, %c0_194], %345 {strides = array<i32>} : memref<1x8x32xf32, #tpu.memory_space<vmem>>, vector<1x8x32xf32>,
    return
  }
  func.func @transform_0(%arg0: i32, %arg1: i32) -> (i32, i32, i32) {
    %c0_i32 = arith.constant 0 : i32
    %c0_i32_0 = arith.constant 0 : i32
    %c0_i32_1 = arith.constant 0 : i32
    return %arg0, %c0_i32, %c0_i32_0 : i32, i32, i32
  }
  func.func @transform_1(%arg0: i32, %arg1: i32) -> (i32, i32, i32, i32) {
    %c0_i32 = arith.constant 0 : i32
    %c0_i32_0 = arith.constant 0 : i32
    %c0_i32_1 = arith.constant 0 : i32
    %c0_i32_2 = arith.constant 0 : i32
    return %arg0, %c0_i32, %c0_i32_0, %c0_i32_1 : i32, i32, i32, i32
  }
  func.func @transform_2(%arg0: i32, %arg1: i32) -> (i32, i32, i32, i32) {
    %c0_i32 = arith.constant 0 : i32
    %c0_i32_0 = arith.constant 0 : i32
    %c0_i32_1 = arith.constant 0 : i32
    %c0_i32_2 = arith.constant 0 : i32
    return %arg0, %c0_i32, %c0_i32_0, %c0_i32_1 : i32, i32, i32, i32
  }
  func.func @transform_3(%arg0: i32, %arg1: i32) -> (i32, i32, i32) {
    %c0_i32 = arith.constant 0 : i32
    %c0_i32_0 = arith.constant 0 : i32
    %c0_i32_1 = arith.constant 0 : i32
    return %arg0, %c0_i32, %c0_i32_0 : i32, i32, i32
  }
  func.func @transform_4(%arg0: i32, %arg1: i32) -> (i32, i32) {
    %c0_i32 = arith.constant 0 : i32
    %c0_i32_0 = arith.constant 0 : i32
    %c0_i32_1 = arith.constant 0 : i32
    return %c0_i32, %c0_i32_0 : i32, i32
  }
  func.func @transform_5(%arg0: i32, %arg1: i32) -> (i32, i32) {
    %c0_i32 = arith.constant 0 : i32
    %c0_i32_0 = arith.constant 0 : i32
    %c0_i32_1 = arith.constant 0 : i32
    return %c0_i32, %c0_i32_0 : i32, i32
  }
  func.func @transform_6(%arg0: i32, %arg1: i32) -> (i32, i32, i32) {
    %c0_i32 = arith.constant 0 : i32
    %c0_i32_0 = arith.constant 0 : i32
    %c0_i32_1 = arith.constant 0 : i32
    %c0_i32_2 = arith.constant 0 : i32
    return %c0_i32, %c0_i32_0, %c0_i32_1 : i32, i32, i32
  }
  func.func @transform_7(%arg0: i32, %arg1: i32) -> (i32, i32) {
    %c0_i32 = arith.constant 0 : i32
    %c0_i32_0 = arith.constant 0 : i32
    %c0_i32_1 = arith.constant 0 : i32
    return %c0_i32, %c0_i32_0 : i32, i32
  }
  func.func @transform_8(%arg0: i32, %arg1: i32) -> (i32, i32) {
    %c0_i32 = arith.constant 0 : i32
    %c0_i32_0 = arith.constant 0 : i32
    %c0_i32_1 = arith.constant 0 : i32
    return %c0_i32, %c0_i32_0 : i32, i32
  }
  func.func @transform_9(%arg0: i32, %arg1: i32) -> (i32, i32) {
    %c0_i32 = arith.constant 0 : i32
    %c0_i32_0 = arith.constant 0 : i32
    %c0_i32_1 = arith.constant 0 : i32
    return %c0_i32, %c0_i32_0 : i32, i32
  }
  func.func @transform_10(%arg0: i32, %arg1: i32) -> (i32, i32) {
    %c0_i32 = arith.constant 0 : i32
    %c0_i32_0 = arith.constant 0 : i32
    %c0_i32_1 = arith.constant 0 : i32
    return %c0_i32, %c0_i32_0 : i32, i32
  }
  func.func @transform_11(%arg0: i32, %arg1: i32) -> (i32, i32) {
    %c0_i32 = arith.constant 0 : i32
    %c0_i32_0 = arith.constant 0 : i32
    %c0_i32_1 = arith.constant 0 : i32
    return %c0_i32, %c0_i32_0 : i32, i32
  }
  func.func @transform_12(%arg0: i32, %arg1: i32) -> (i32, i32, i32) {
    %c0_i32 = arith.constant 0 : i32
    %c0_i32_0 = arith.constant 0 : i32
    %c0_i32_1 = arith.constant 0 : i32
    %c0_i32_2 = arith.constant 0 : i32
    return %c0_i32, %c0_i32_0, %c0_i32_1 : i32, i32, i32
  }
  func.func @transform_13(%arg0: i32, %arg1: i32) -> (i32, i32) {
    %c0_i32 = arith.constant 0 : i32
    %c0_i32_0 = arith.constant 0 : i32
    %c0_i32_1 = arith.constant 0 : i32
    return %c0_i32, %c0_i32_0 : i32, i32
  }
  func.func @transform_14(%arg0: i32, %arg1: i32) -> (i32, i32) {
    %c0_i32 = arith.constant 0 : i32
    %c0_i32_0 = arith.constant 0 : i32
    %c0_i32_1 = arith.constant 0 : i32
    return %c0_i32, %c0_i32_0 : i32, i32
  }
  func.func @transform_15(%arg0: i32, %arg1: i32) -> (i32, i32) {
    %c0_i32 = arith.constant 0 : i32
    %c0_i32_0 = arith.constant 0 : i32
    %c0_i32_1 = arith.constant 0 : i32
    return %c0_i32, %c0_i32_0 : i32, i32
  }
  func.func @transform_16(%arg0: i32, %arg1: i32) -> (i32, i32) {
    %c0_i32 = arith.constant 0 : i32
    %c0_i32_0 = arith.constant 0 : i32
    %c0_i32_1 = arith.constant 0 : i32
    return %c0_i32, %c0_i32_0 : i32, i32
  }
  func.func @transform_17(%arg0: i32, %arg1: i32) -> (i32, i32) {
    %c0_i32 = arith.constant 0 : i32
    %c0_i32_0 = arith.constant 0 : i32
    %c0_i32_1 = arith.constant 0 : i32
    return %c0_i32, %c0_i32_0 : i32, i32
  }
  func.func @transform_18(%arg0: i32, %arg1: i32) -> (i32, i32) {
    %c0_i32 = arith.constant 0 : i32
    %c0_i32_0 = arith.constant 0 : i32
    %c0_i32_1 = arith.constant 0 : i32
    return %c0_i32, %c0_i32_0 : i32, i32
  }
  func.func @transform_19(%arg0: i32, %arg1: i32) -> (i32, i32) {
    %c0_i32 = arith.constant 0 : i32
    %c0_i32_0 = arith.constant 0 : i32
    %c0_i32_1 = arith.constant 0 : i32
    return %c0_i32, %c0_i32_0 : i32, i32
  }
  func.func @transform_20(%arg0: i32, %arg1: i32) -> (i32, i32) {
    %c0_i32 = arith.constant 0 : i32
    %c0_i32_0 = arith.constant 0 : i32
    %c0_i32_1 = arith.constant 0 : i32
    return %c0_i32, %c0_i32_0 : i32, i32
  }
  func.func @transform_21(%arg0: i32, %arg1: i32) -> (i32, i32) {
    %c0_i32 = arith.constant 0 : i32
    %c0_i32_0 = arith.constant 0 : i32
    %c0_i32_1 = arith.constant 0 : i32
    return %c0_i32, %c0_i32_0 : i32, i32
  }
  func.func @transform_22(%arg0: i32, %arg1: i32) -> (i32, i32, i32) {
    %c0_i32 = arith.constant 0 : i32
    %c0_i32_0 = arith.constant 0 : i32
    %c0_i32_1 = arith.constant 0 : i32
    return %arg0, %c0_i32, %c0_i32_0 : i32, i32, i32
  }
  func.func @transform_23(%arg0: i32, %arg1: i32) -> (i32, i32, i32, i32, i32) {
    %c0_i32 = arith.constant 0 : i32
    %c0_i32_0 = arith.constant 0 : i32
    %c0_i32_1 = arith.constant 0 : i32
    %c0_i32_2 = arith.constant 0 : i32
    return %arg1, %arg0, %c0_i32, %c0_i32_0, %c0_i32_1 : i32, i32, i32, i32, i32
  }
  func.func @transform_24(%arg0: i32, %arg1: i32) -> (i32, i32, i32, i32, i32) {
    %c0_i32 = arith.constant 0 : i32
    %c0_i32_0 = arith.constant 0 : i32
    %c0_i32_1 = arith.constant 0 : i32
    %c0_i32_2 = arith.constant 0 : i32
    return %arg1, %arg0, %c0_i32, %c0_i32_0, %c0_i32_1 : i32, i32, i32, i32, i32
  }
}

</mosaic_0001>

<llo_original>
// kernel: tpu_custom_call.1
$region0: #{tpu_custom_call.1}
  #allocation0 [shape = 'u32[]', space=smem, size = 0x4, offset = 0x4, fixed_abs, tag = 'smem constant byte address 0x4 - core index']
  #allocation1 [shape = 'u32[144,128]{1,0:T(1,128)}', space=vmem, size = 0x12000, scoped, tag = 'internal scratch']
  %s0 = inlined_call_operand.vmem [shape: f32[2,8,32], index: 0, kind: input, shape index: {}]
  %s1 = inlined_call_operand.vmem [shape: f32[2,4,8,8], index: 1, kind: input, shape index: {}]
  %s2 = inlined_call_operand.hbm [shape: f32[2,4,8,8], index: 2, kind: input, shape index: {}]
  %s3 = inlined_call_operand.hbm [shape: bf16[2,8,64], index: 3, kind: input, shape index: {}]
  %s4 = inlined_call_operand.hbm [shape: bf16[32,96], index: 4, kind: input, shape index: {}]
  %s5 = inlined_call_operand.hbm [shape: f32[1,96], index: 5, kind: input, shape index: {}]
  %s6 = inlined_call_operand.hbm [shape: bf16[4,8,32], index: 6, kind: input, shape index: {}]
  %s7 = inlined_call_operand.hbm [shape: f32[1,32], index: 7, kind: input, shape index: {}]
  %s8 = inlined_call_operand.hbm [shape: f32[1,32], index: 8, kind: input, shape index: {}]
  %s9 = inlined_call_operand.hbm [shape: f32[1,32], index: 9, kind: input, shape index: {}]
  %s10 = inlined_call_operand.vmem [shape: bf16[32,32], index: 10, kind: input, shape index: {}]
  %s11 = inlined_call_operand.hbm [shape: f32[1,32], index: 11, kind: input, shape index: {}]
  %s12 = inlined_call_operand.hbm [shape: bf16[4,8,32], index: 12, kind: input, shape index: {}]
  %s13 = inlined_call_operand.hbm [shape: f32[1,32], index: 13, kind: input, shape index: {}]
  %s14 = inlined_call_operand.hbm [shape: f32[1,32], index: 14, kind: input, shape index: {}]
  %s15 = inlined_call_operand.hbm [shape: f32[1,32], index: 15, kind: input, shape index: {}]
  %s16 = inlined_call_operand.hbm [shape: bf16[32,128], index: 16, kind: input, shape index: {}]
  %s17 = inlined_call_operand.hbm [shape: f32[1,128], index: 17, kind: input, shape index: {}]
  %s18 = inlined_call_operand.vmem [shape: bf16[128,32], index: 18, kind: input, shape index: {}]
  %s19 = inlined_call_operand.vmem [shape: f32[1,32], index: 19, kind: input, shape index: {}]
  %s20 = inlined_call_operand.vmem [shape: f32[1,32], index: 20, kind: input, shape index: {}]
  %s21 = inlined_call_operand.vmem [shape: f32[1,32], index: 21, kind: input, shape index: {}]
  %s22 = inlined_call_operand.hbm [shape: f32[2,8,32], index: 22, kind: output, shape index: {0}]
  %s23 = inlined_call_operand.hbm [shape: f32[2,2,4,8,8], index: 23, kind: output, shape index: {1}]
  %s24 = inlined_call_operand.hbm [shape: f32[2,2,4,8,8], index: 24, kind: output, shape index: {2}]
  %25 = xla_tuple %s22, %s23, %s24
  %s26 = sld [smem:[#allocation0]]
  $region201: #{tpu_custom_call.1} parent=0
    _
  %s28 = ssub.s32 1, %s26
  %s29 = scalar_select 0, %s28, %s26
  $region1: #{tpu_custom_call.1} parent=0
    #allocation2 [shape = 'u8[32768]{0}', space=vmem, size = 0x8000, scoped, tag = 'input window, operand 2']
    #allocation3 [shape = 's32[2]{0}', space=sflag, size = 0x8, scoped, tag = 'scoped memory for tpu_custom_call.1']
    #allocation4 [shape = 's32[2]{0}', space=sflag, size = 0x8, scoped, tag = 'scoped memory for tpu_custom_call.1']
    #allocation5 [shape = 'u8[4096]{0}', space=vmem, size = 0x1000, scoped, tag = 'input window, operand 3']
    #allocation6 [shape = 's32[2]{0}', space=sflag, size = 0x8, scoped, tag = 'scoped memory for tpu_custom_call.1']
    #allocation7 [shape = 'u8[8192]{0}', space=vmem, size = 0x2000, scoped, tag = 'input window, operand 4, single buffered']
    #allocation8 [shape = 'u8[512]{0}', space=vmem, size = 0x400, scoped, tag = 'input window, operand 5, single buffered']
    #allocation9 [shape = 's32[1]{0}', space=sflag, size = 0x4, scoped, tag = 'scoped memory for tpu_custom_call.1']
    #allocation10 [shape = 'u8[8192]{0}', space=vmem, size = 0x2000, scoped, tag = 'input window, operand 6, single buffered']
    #allocation11 [shape = 'u8[512]{0}', space=vmem, size = 0x400, scoped, tag = 'input window, operand 7, single buffered']
    #allocation12 [shape = 's32[1]{0}', space=sflag, size = 0x4, scoped, tag = 'scoped memory for tpu_custom_call.1']
    #allocation13 [shape = 'u8[512]{0}', space=vmem, size = 0x400, scoped, tag = 'input window, operand 8, single buffered']
    #allocation14 [shape = 'u8[512]{0}', space=vmem, size = 0x400, scoped, tag = 'input window, operand 9, single buffered']
    #allocation15 [shape = 's32[1]{0}', space=sflag, size = 0x4, scoped, tag = 'scoped memory for tpu_custom_call.1']
    #allocation16 [shape = 'u8[512]{0}', space=vmem, size = 0x400, scoped, tag = 'input window, operand 11, single buffered']
    #allocation17 [shape = 'u8[8192]{0}', space=vmem, size = 0x2000, scoped, tag = 'input window, operand 12, single buffered']
    #allocation18 [shape = 's32[1]{0}', space=sflag, size = 0x4, scoped, tag = 'scoped memory for tpu_custom_call.1']
    #allocation19 [shape = 'u8[512]{0}', space=vmem, size = 0x400, scoped, tag = 'input window, operand 13, single buffered']
    #allocation20 [shape = 'u8[512]{0}', space=vmem, size = 0x400, scoped, tag = 'input window, operand 14, single buffered']
    #allocation21 [shape = 's32[1]{0}', space=sflag, size = 0x4, scoped, tag = 'scoped memory for tpu_custom_call.1']
    #allocation22 [shape = 'u8[512]{0}', space=vmem, size = 0x400, scoped, tag = 'input window, operand 15, single buffered']
    #allocation23 [shape = 'u8[8192]{0}', space=vmem, size = 0x2000, scoped, tag = 'input window, operand 16, single buffered']
    #allocation24 [shape = 's32[1]{0}', space=sflag, size = 0x4, scoped, tag = 'scoped memory for tpu_custom_call.1']
    #allocation25 [shape = 'u8[512]{0}', space=vmem, size = 0x400, scoped, tag = 'input window, operand 17, single buffered']
    #allocation26 [shape = 'u8[8192]{0}', space=vmem, size = 0x2000, scoped, tag = 'output window, operand 0']
    #allocation27 [shape = 'u8[32768]{0}', space=vmem, size = 0x8000, scoped, tag = 'output window, operand 1']
    #allocation28 [shape = 's32[2]{0}', space=sflag, size = 0x8, scoped, tag = 'scoped memory for tpu_custom_call.1']
    #allocation29 [shape = 'u8[32768]{0}', space=vmem, size = 0x8000, scoped, tag = 'output window, operand 2']
    %30 = vsyncpa [#allocation3], 0
    %s31 = scalar_lea.sflag [#allocation3], 1
    %32 = vsyncpa %s31, 0
    %33 = vsyncpa [#allocation6], 0
    %s34 = scalar_lea.sflag [#allocation6], 1
    %35 = vsyncpa %s34, 0
    %36 = vsyncpa [#allocation9], 0
    %37 = vsyncpa [#allocation12], 0
    %38 = vsyncpa [#allocation15], 0
    %39 = vsyncpa [#allocation18], 0
    %40 = vsyncpa [#allocation21], 0
    %41 = vsyncpa [#allocation24], 0
    %42 = vsyncpa [#allocation4], 0
    %s43 = scalar_lea.sflag [#allocation4], 1
    %44 = vsyncpa %s43, 0
    %45 = vsyncpa [#allocation28], 0
    %s46 = scalar_lea.sflag [#allocation28], 1
    %47 = vsyncpa %s46, 0
    loop: start=0, step=1, limit=6
    $region2: #{tpu_custom_call.1} parent=1 // loop_pre_header
      _
    $region3: #{tpu_custom_call.1} parent=1 // loop_header
      %s49 = sphi 0, %s53
      %p50 = scmp.ge.s32.totalorder %s49, 6
      %s56 = sphi 0, %s68
      %s57 = sphi 0, %s64
      %s58 = sphi 0, %s56
      %s59 = sphi 0, %s57
      %s60 = sphi 0, %s58
      %s61 = sphi 0, %s59
      %s71 = sphi 0, %s73
      %s74 = sphi 0, %s71
      %s75 = sphi 0, %s74
      %s91 = sphi 0, %s75
      %s97 = sphi 0, %s99
      %s100 = sphi 0, %s97
      %s101 = sphi 0, %s100
      %s117 = sphi 0, %s101
      %s123 = sphi 0, %s125
      %s126 = sphi 0, %s123
      %s127 = sphi 0, %s126
      %s143 = sphi 0, %s127
      %s149 = sphi 0, %s151
      %s152 = sphi 0, %s149
      %s153 = sphi 0, %s152
      %s169 = sphi 0, %s153
      %s173 = sphi 0, %s173
      %s175 = sphi 0, %s173
      %s176 = sphi 0, %s175
      %s190 = sphi 0, %s176
      %s194 = sphi 0, %s194
      %s196 = sphi 0, %s194
      %s197 = sphi 0, %s196
      %s211 = sphi 0, %s197
      %s215 = sphi 0, %s215
      %s217 = sphi 0, %s215
      %s218 = sphi 0, %s217
      %s232 = sphi 0, %s218
      %s236 = sphi 0, %s236
      %s238 = sphi 0, %s236
      %s239 = sphi 0, %s238
      %s253 = sphi 0, %s239
      %s257 = sphi 0, %s257
      %s259 = sphi 0, %s257
      %s260 = sphi 0, %s259
      %s274 = sphi 0, %s260
      %s278 = sphi 0, %s278
      %s280 = sphi 0, %s278
      %s281 = sphi 0, %s280
      %s295 = sphi 0, %s281
      %s299 = sphi 0, %s299
      %s301 = sphi 0, %s299
      %s302 = sphi 0, %s301
      %s316 = sphi 0, %s302
      %s320 = sphi 0, %s320
      %s322 = sphi 0, %s320
      %s323 = sphi 0, %s322
      %s337 = sphi 0, %s323
      %s341 = sphi 0, %s341
      %s343 = sphi 0, %s341
      %s344 = sphi 0, %s343
      %s358 = sphi 0, %s344
      %s362 = sphi 0, %s362
      %s364 = sphi 0, %s362
      %s365 = sphi 0, %s364
      %s379 = sphi 0, %s365
      %s383 = sphi 0, %s383
      %s385 = sphi 0, %s383
      %s386 = sphi 0, %s385
      %s400 = sphi 0, %s386
      %s404 = sphi 0, %s404
      %s406 = sphi 0, %s404
      %s407 = sphi 0, %s406
      %s421 = sphi 0, %s407
      %s425 = sphi 0, %s425
      %s427 = sphi 0, %s425
      %s428 = sphi 0, %s427
      %s442 = sphi 0, %s428
      %s446 = sphi 0, %s446
      %s448 = sphi 0, %s446
      %s449 = sphi 0, %s448
      %s463 = sphi 0, %s449
      %s467 = sphi 0, %s467
      %s469 = sphi 0, %s467
      %s470 = sphi 0, %s469
      %s484 = sphi 0, %s470
      %s488 = sphi 0, %s488
      %s490 = sphi 0, %s488
      %s491 = sphi 0, %s490
      %s505 = sphi 0, %s491
      %s509 = sphi 0, %s509
      %s511 = sphi 0, %s509
      %s512 = sphi 0, %s511
      %s526 = sphi 0, %s512
      %s530 = sphi 0, %s530
      %s532 = sphi 0, %s530
      %s533 = sphi 0, %s532
      %s547 = sphi 0, %s533
      %s553 = sphi 0, %s555
      %s556 = sphi 0, %s553
      %s557 = sphi 0, %s556
      %s573 = sphi 0, %s557
      %s581 = sphi 0, %s583
      %s584 = sphi 0, %s581
      %s585 = sphi 0, %s584
      %s601 = sphi 0, %s585
      %s609 = sphi 0, %s611
      %s612 = sphi 0, %s609
      %s613 = sphi 0, %s612
      %s629 = sphi 0, %s613
    $region4: #{tpu_custom_call.1} parent=1 // loop_header_branch
      %52 = sbr.rel (%p50) target = $region8
    $region5: #{tpu_custom_call.1} parent=1 // loop_body
      %s54 = ssub.s32 %s49, 1
      %s55 = ssub.s32 %s49, 2
      %s62 = sadd.s32 1, %s57
      %p63 = scmp.ge.s32.totalorder %s62, 2
      %s64 = scalar_select %p63, 0, %s62
      %s65 = sadd.s32 1, %s56
      %s66 = scalar_select %p63, %s65, %s56
      %p67 = scmp.ge.s32.totalorder %s66, 2
      %s68 = scalar_select %p67, 0, %s66
      %s69 = ssub.s32 %s56, %s68
      %p70 = scmp.eq.s32.totalorder %s69, 0
      %s72 = sadd.s32 %s71, 1
      %s73 = scalar_select %p70, %s71, %s72
      %p76 = pneg %p70
      %p77 = scmp.eq.s32.totalorder %s49, 3
      %p78 = por %p76, %p77
      %p79 = scmp.ne.s32.totalorder %s71, %s74
      %p80 = scmp.eq.s32.totalorder %s49, 0
      %p81 = por %p79, %p80
      %p82 = scmp.ne.s32.totalorder %s71, %s74
      %p83 = scmp.eq.s32.totalorder %s54, 3
      %p84 = por %p82, %p83
      %p85 = scmp.ne.s32.totalorder %s74, %s75
      %p86 = scmp.eq.s32.totalorder %s54, 0
      %p87 = por %p85, %p86
      %p88 = scmp.ne.s32.totalorder %s74, %s75
      %p89 = scmp.eq.s32.totalorder %s55, 3
      %p90 = por %p88, %p89
      %p92 = scmp.ne.s32.totalorder %s75, %s91
      %p93 = scmp.eq.s32.totalorder %s55, 0
      %p94 = por %p92, %p93
      %s95 = ssub.s32 %s56, %s68
      %p96 = scmp.eq.s32.totalorder %s95, 0
      %s98 = sadd.s32 %s97, 1
      %s99 = scalar_select %p96, %s97, %s98
      %p102 = pneg %p96
      %p103 = scmp.eq.s32.totalorder %s49, 3
      %p104 = por %p102, %p103
      %p105 = scmp.ne.s32.totalorder %s97, %s100
      %p106 = scmp.eq.s32.totalorder %s49, 0
      %p107 = por %p105, %p106
      %p108 = scmp.ne.s32.totalorder %s97, %s100
      %p109 = scmp.eq.s32.totalorder %s54, 3
      %p110 = por %p108, %p109
      %p111 = scmp.ne.s32.totalorder %s100, %s101
      %p112 = scmp.eq.s32.totalorder %s54, 0
      %p113 = por %p111, %p112
      %p114 = scmp.ne.s32.totalorder %s100, %s101
      %p115 = scmp.eq.s32.totalorder %s55, 3
      %p116 = por %p114, %p115
      %p118 = scmp.ne.s32.totalorder %s101, %s117
      %p119 = scmp.eq.s32.totalorder %s55, 0
      %p120 = por %p118, %p119
      %s121 = ssub.s32 %s56, %s68
      %p122 = scmp.eq.s32.totalorder %s121, 0
      %s124 = sadd.s32 %s123, 1
      %s125 = scalar_select %p122, %s123, %s124
      %p128 = pneg %p122
      %p129 = scmp.eq.s32.totalorder %s49, 3
      %p130 = por %p128, %p129
      %p131 = scmp.ne.s32.totalorder %s123, %s126
      %p132 = scmp.eq.s32.totalorder %s49, 0
      %p133 = por %p131, %p132
      %p134 = scmp.ne.s32.totalorder %s123, %s126
      %p135 = scmp.eq.s32.totalorder %s54, 3
      %p136 = por %p134, %p135
      %p137 = scmp.ne.s32.totalorder %s126, %s127
      %p138 = scmp.eq.s32.totalorder %s54, 0
      %p139 = por %p137, %p138
      %p140 = scmp.ne.s32.totalorder %s126, %s127
      %p141 = scmp.eq.s32.totalorder %s55, 3
      %p142 = por %p140, %p141
      %p144 = scmp.ne.s32.totalorder %s127, %s143
      %p145 = scmp.eq.s32.totalorder %s55, 0
      %p146 = por %p144, %p145
      %s147 = ssub.s32 %s56, %s68
      %p148 = scmp.eq.s32.totalorder %s147, 0
      %s150 = sadd.s32 %s149, 1
      %s151 = scalar_select %p148, %s149, %s150
      %p154 = pneg %p148
      %p155 = scmp.eq.s32.totalorder %s49, 3
      %p156 = por %p154, %p155
      %p157 = scmp.ne.s32.totalorder %s149, %s152
      %p158 = scmp.eq.s32.totalorder %s49, 0
      %p159 = por %p157, %p158
      %p160 = scmp.ne.s32.totalorder %s149, %s152
      %p161 = scmp.eq.s32.totalorder %s54, 3
      %p162 = por %p160, %p161
      %p163 = scmp.ne.s32.totalorder %s152, %s153
      %p164 = scmp.eq.s32.totalorder %s54, 0
      %p165 = por %p163, %p164
      %p166 = scmp.ne.s32.totalorder %s152, %s153
      %p167 = scmp.eq.s32.totalorder %s55, 3
      %p168 = por %p166, %p167
      %p170 = scmp.ne.s32.totalorder %s153, %s169
      %p171 = scmp.eq.s32.totalorder %s55, 0
      %p172 = por %p170, %p171
      %s174 = sadd.s32 %s173, 1
      %p177 = scmp.eq.s32.totalorder %s49, 3
      %p178 = scmp.ne.s32.totalorder %s173, %s175
      %p179 = scmp.eq.s32.totalorder %s49, 0
      %p180 = por %p178, %p179
      %p181 = scmp.ne.s32.totalorder %s173, %s175
      %p182 = scmp.eq.s32.totalorder %s54, 3
      %p183 = por %p181, %p182
      %p184 = scmp.ne.s32.totalorder %s175, %s176
      %p185 = scmp.eq.s32.totalorder %s54, 0
      %p186 = por %p184, %p185
      %p187 = scmp.ne.s32.totalorder %s175, %s176
      %p188 = scmp.eq.s32.totalorder %s55, 3
      %p189 = por %p187, %p188
      %p191 = scmp.ne.s32.totalorder %s176, %s190
      %p192 = scmp.eq.s32.totalorder %s55, 0
      %p193 = por %p191, %p192
      %s195 = sadd.s32 %s194, 1
      %p198 = scmp.eq.s32.totalorder %s49, 3
      %p199 = scmp.ne.s32.totalorder %s194, %s196
      %p200 = scmp.eq.s32.totalorder %s49, 0
      %p201 = por %p199, %p200
      %p202 = scmp.ne.s32.totalorder %s194, %s196
      %p203 = scmp.eq.s32.totalorder %s54, 3
      %p204 = por %p202, %p203
      %p205 = scmp.ne.s32.totalorder %s196, %s197
      %p206 = scmp.eq.s32.totalorder %s54, 0
      %p207 = por %p205, %p206
      %p208 = scmp.ne.s32.totalorder %s196, %s197
      %p209 = scmp.eq.s32.totalorder %s55, 3
      %p210 = por %p208, %p209
      %p212 = scmp.ne.s32.totalorder %s197, %s211
      %p213 = scmp.eq.s32.totalorder %s55, 0
      %p214 = por %p212, %p213
      %s216 = sadd.s32 %s215, 1
      %p219 = scmp.eq.s32.totalorder %s49, 3
      %p220 = scmp.ne.s32.totalorder %s215, %s217
      %p221 = scmp.eq.s32.totalorder %s49, 0
      %p222 = por %p220, %p221
      %p223 = scmp.ne.s32.totalorder %s215, %s217
      %p224 = scmp.eq.s32.totalorder %s54, 3
      %p225 = por %p223, %p224
      %p226 = scmp.ne.s32.totalorder %s217, %s218
      %p227 = scmp.eq.s32.totalorder %s54, 0
      %p228 = por %p226, %p227
      %p229 = scmp.ne.s32.totalorder %s217, %s218
      %p230 = scmp.eq.s32.totalorder %s55, 3
      %p231 = por %p229, %p230
      %p233 = scmp.ne.s32.totalorder %s218, %s232
      %p234 = scmp.eq.s32.totalorder %s55, 0
      %p235 = por %p233, %p234
      %s237 = sadd.s32 %s236, 1
      %p240 = scmp.eq.s32.totalorder %s49, 3
      %p241 = scmp.ne.s32.totalorder %s236, %s238
      %p242 = scmp.eq.s32.totalorder %s49, 0
      %p243 = por %p241, %p242
      %p244 = scmp.ne.s32.totalorder %s236, %s238
      %p245 = scmp.eq.s32.totalorder %s54, 3
      %p246 = por %p244, %p245
      %p247 = scmp.ne.s32.totalorder %s238, %s239
      %p248 = scmp.eq.s32.totalorder %s54, 0
      %p249 = por %p247, %p248
      %p250 = scmp.ne.s32.totalorder %s238, %s239
      %p251 = scmp.eq.s32.totalorder %s55, 3
      %p252 = por %p250, %p251
      %p254 = scmp.ne.s32.totalorder %s239, %s253
      %p255 = scmp.eq.s32.totalorder %s55, 0
      %p256 = por %p254, %p255
      %s258 = sadd.s32 %s257, 1
      %p261 = scmp.eq.s32.totalorder %s49, 3
      %p262 = scmp.ne.s32.totalorder %s257, %s259
      %p263 = scmp.eq.s32.totalorder %s49, 0
      %p264 = por %p262, %p263
      %p265 = scmp.ne.s32.totalorder %s257, %s259
      %p266 = scmp.eq.s32.totalorder %s54, 3
      %p267 = por %p265, %p266
      %p268 = scmp.ne.s32.totalorder %s259, %s260
      %p269 = scmp.eq.s32.totalorder %s54, 0
      %p270 = por %p268, %p269
      %p271 = scmp.ne.s32.totalorder %s259, %s260
      %p272 = scmp.eq.s32.totalorder %s55, 3
      %p273 = por %p271, %p272
      %p275 = scmp.ne.s32.totalorder %s260, %s274
      %p276 = scmp.eq.s32.totalorder %s55, 0
      %p277 = por %p275, %p276
      %s279 = sadd.s32 %s278, 1
      %p282 = scmp.eq.s32.totalorder %s49, 3
      %p283 = scmp.ne.s32.totalorder %s278, %s280
      %p284 = scmp.eq.s32.totalorder %s49, 0
      %p285 = por %p283, %p284
      %p286 = scmp.ne.s32.totalorder %s278, %s280
      %p287 = scmp.eq.s32.totalorder %s54, 3
      %p288 = por %p286, %p287
      %p289 = scmp.ne.s32.totalorder %s280, %s281
      %p290 = scmp.eq.s32.totalorder %s54, 0
      %p291 = por %p289, %p290
      %p292 = scmp.ne.s32.totalorder %s280, %s281
      %p293 = scmp.eq.s32.totalorder %s55, 3
      %p294 = por %p292, %p293
      %p296 = scmp.ne.s32.totalorder %s281, %s295
      %p297 = scmp.eq.s32.totalorder %s55, 0
      %p298 = por %p296, %p297
      %s300 = sadd.s32 %s299, 1
      %p303 = scmp.eq.s32.totalorder %s49, 3
      %p304 = scmp.ne.s32.totalorder %s299, %s301
      %p305 = scmp.eq.s32.totalorder %s49, 0
      %p306 = por %p304, %p305
      %p307 = scmp.ne.s32.totalorder %s299, %s301
      %p308 = scmp.eq.s32.totalorder %s54, 3
      %p309 = por %p307, %p308
      %p310 = scmp.ne.s32.totalorder %s301, %s302
      %p311 = scmp.eq.s32.totalorder %s54, 0
      %p312 = por %p310, %p311
      %p313 = scmp.ne.s32.totalorder %s301, %s302
      %p314 = scmp.eq.s32.totalorder %s55, 3
      %p315 = por %p313, %p314
      %p317 = scmp.ne.s32.totalorder %s302, %s316
      %p318 = scmp.eq.s32.totalorder %s55, 0
      %p319 = por %p317, %p318
      %s321 = sadd.s32 %s320, 1
      %p324 = scmp.eq.s32.totalorder %s49, 3
      %p325 = scmp.ne.s32.totalorder %s320, %s322
      %p326 = scmp.eq.s32.totalorder %s49, 0
      %p327 = por %p325, %p326
      %p328 = scmp.ne.s32.totalorder %s320, %s322
      %p329 = scmp.eq.s32.totalorder %s54, 3
      %p330 = por %p328, %p329
      %p331 = scmp.ne.s32.totalorder %s322, %s323
      %p332 = scmp.eq.s32.totalorder %s54, 0
      %p333 = por %p331, %p332
      %p334 = scmp.ne.s32.totalorder %s322, %s323
      %p335 = scmp.eq.s32.totalorder %s55, 3
      %p336 = por %p334, %p335
      %p338 = scmp.ne.s32.totalorder %s323, %s337
      %p339 = scmp.eq.s32.totalorder %s55, 0
      %p340 = por %p338, %p339
      %s342 = sadd.s32 %s341, 1
      %p345 = scmp.eq.s32.totalorder %s49, 3
      %p346 = scmp.ne.s32.totalorder %s341, %s343
      %p347 = scmp.eq.s32.totalorder %s49, 0
      %p348 = por %p346, %p347
      %p349 = scmp.ne.s32.totalorder %s341, %s343
      %p350 = scmp.eq.s32.totalorder %s54, 3
      %p351 = por %p349, %p350
      %p352 = scmp.ne.s32.totalorder %s343, %s344
      %p353 = scmp.eq.s32.totalorder %s54, 0
      %p354 = por %p352, %p353
      %p355 = scmp.ne.s32.totalorder %s343, %s344
      %p356 = scmp.eq.s32.totalorder %s55, 3
      %p357 = por %p355, %p356
      %p359 = scmp.ne.s32.totalorder %s344, %s358
      %p360 = scmp.eq.s32.totalorder %s55, 0
      %p361 = por %p359, %p360
      %s363 = sadd.s32 %s362, 1
      %p366 = scmp.eq.s32.totalorder %s49, 3
      %p367 = scmp.ne.s32.totalorder %s362, %s364
      %p368 = scmp.eq.s32.totalorder %s49, 0
      %p369 = por %p367, %p368
      %p370 = scmp.ne.s32.totalorder %s362, %s364
      %p371 = scmp.eq.s32.totalorder %s54, 3
      %p372 = por %p370, %p371
      %p373 = scmp.ne.s32.totalorder %s364, %s365
      %p374 = scmp.eq.s32.totalorder %s54, 0
      %p375 = por %p373, %p374
      %p376 = scmp.ne.s32.totalorder %s364, %s365
      %p377 = scmp.eq.s32.totalorder %s55, 3
      %p378 = por %p376, %p377
      %p380 = scmp.ne.s32.totalorder %s365, %s379
      %p381 = scmp.eq.s32.totalorder %s55, 0
      %p382 = por %p380, %p381
      %s384 = sadd.s32 %s383, 1
      %p387 = scmp.eq.s32.totalorder %s49, 3
      %p388 = scmp.ne.s32.totalorder %s383, %s385
      %p389 = scmp.eq.s32.totalorder %s49, 0
      %p390 = por %p388, %p389
      %p391 = scmp.ne.s32.totalorder %s383, %s385
      %p392 = scmp.eq.s32.totalorder %s54, 3
      %p393 = por %p391, %p392
      %p394 = scmp.ne.s32.totalorder %s385, %s386
      %p395 = scmp.eq.s32.totalorder %s54, 0
      %p396 = por %p394, %p395
      %p397 = scmp.ne.s32.totalorder %s385, %s386
      %p398 = scmp.eq.s32.totalorder %s55, 3
      %p399 = por %p397, %p398
      %p401 = scmp.ne.s32.totalorder %s386, %s400
      %p402 = scmp.eq.s32.totalorder %s55, 0
      %p403 = por %p401, %p402
      %s405 = sadd.s32 %s404, 1
      %p408 = scmp.eq.s32.totalorder %s49, 3
      %p409 = scmp.ne.s32.totalorder %s404, %s406
      %p410 = scmp.eq.s32.totalorder %s49, 0
      %p411 = por %p409, %p410
      %p412 = scmp.ne.s32.totalorder %s404, %s406
      %p413 = scmp.eq.s32.totalorder %s54, 3
      %p414 = por %p412, %p413
      %p415 = scmp.ne.s32.totalorder %s406, %s407
      %p416 = scmp.eq.s32.totalorder %s54, 0
      %p417 = por %p415, %p416
      %p418 = scmp.ne.s32.totalorder %s406, %s407
      %p419 = scmp.eq.s32.totalorder %s55, 3
      %p420 = por %p418, %p419
      %p422 = scmp.ne.s32.totalorder %s407, %s421
      %p423 = scmp.eq.s32.totalorder %s55, 0
      %p424 = por %p422, %p423
      %s426 = sadd.s32 %s425, 1
      %p429 = scmp.eq.s32.totalorder %s49, 3
      %p430 = scmp.ne.s32.totalorder %s425, %s427
      %p431 = scmp.eq.s32.totalorder %s49, 0
      %p432 = por %p430, %p431
      %p433 = scmp.ne.s32.totalorder %s425, %s427
      %p434 = scmp.eq.s32.totalorder %s54, 3
      %p435 = por %p433, %p434
      %p436 = scmp.ne.s32.totalorder %s427, %s428
      %p437 = scmp.eq.s32.totalorder %s54, 0
      %p438 = por %p436, %p437
      %p439 = scmp.ne.s32.totalorder %s427, %s428
      %p440 = scmp.eq.s32.totalorder %s55, 3
      %p441 = por %p439, %p440
      %p443 = scmp.ne.s32.totalorder %s428, %s442
      %p444 = scmp.eq.s32.totalorder %s55, 0
      %p445 = por %p443, %p444
      %s447 = sadd.s32 %s446, 1
      %p450 = scmp.eq.s32.totalorder %s49, 3
      %p451 = scmp.ne.s32.totalorder %s446, %s448
      %p452 = scmp.eq.s32.totalorder %s49, 0
      %p453 = por %p451, %p452
      %p454 = scmp.ne.s32.totalorder %s446, %s448
      %p455 = scmp.eq.s32.totalorder %s54, 3
      %p456 = por %p454, %p455
      %p457 = scmp.ne.s32.totalorder %s448, %s449
      %p458 = scmp.eq.s32.totalorder %s54, 0
      %p459 = por %p457, %p458
      %p460 = scmp.ne.s32.totalorder %s448, %s449
      %p461 = scmp.eq.s32.totalorder %s55, 3
      %p462 = por %p460, %p461
      %p464 = scmp.ne.s32.totalorder %s449, %s463
      %p465 = scmp.eq.s32.totalorder %s55, 0
      %p466 = por %p464, %p465
      %s468 = sadd.s32 %s467, 1
      %p471 = scmp.eq.s32.totalorder %s49, 3
      %p472 = scmp.ne.s32.totalorder %s467, %s469
      %p473 = scmp.eq.s32.totalorder %s49, 0
      %p474 = por %p472, %p473
      %p475 = scmp.ne.s32.totalorder %s467, %s469
      %p476 = scmp.eq.s32.totalorder %s54, 3
      %p477 = por %p475, %p476
      %p478 = scmp.ne.s32.totalorder %s469, %s470
      %p479 = scmp.eq.s32.totalorder %s54, 0
      %p480 = por %p478, %p479
      %p481 = scmp.ne.s32.totalorder %s469, %s470
      %p482 = scmp.eq.s32.totalorder %s55, 3
      %p483 = por %p481, %p482
      %p485 = scmp.ne.s32.totalorder %s470, %s484
      %p486 = scmp.eq.s32.totalorder %s55, 0
      %p487 = por %p485, %p486
      %s489 = sadd.s32 %s488, 1
      %p492 = scmp.eq.s32.totalorder %s49, 3
      %p493 = scmp.ne.s32.totalorder %s488, %s490
      %p494 = scmp.eq.s32.totalorder %s49, 0
      %p495 = por %p493, %p494
      %p496 = scmp.ne.s32.totalorder %s488, %s490
      %p497 = scmp.eq.s32.totalorder %s54, 3
      %p498 = por %p496, %p497
      %p499 = scmp.ne.s32.totalorder %s490, %s491
      %p500 = scmp.eq.s32.totalorder %s54, 0
      %p501 = por %p499, %p500
      %p502 = scmp.ne.s32.totalorder %s490, %s491
      %p503 = scmp.eq.s32.totalorder %s55, 3
      %p504 = por %p502, %p503
      %p506 = scmp.ne.s32.totalorder %s491, %s505
      %p507 = scmp.eq.s32.totalorder %s55, 0
      %p508 = por %p506, %p507
      %s510 = sadd.s32 %s509, 1
      %p513 = scmp.eq.s32.totalorder %s49, 3
      %p514 = scmp.ne.s32.totalorder %s509, %s511
      %p515 = scmp.eq.s32.totalorder %s49, 0
      %p516 = por %p514, %p515
      %p517 = scmp.ne.s32.totalorder %s509, %s511
      %p518 = scmp.eq.s32.totalorder %s54, 3
      %p519 = por %p517, %p518
      %p520 = scmp.ne.s32.totalorder %s511, %s512
      %p521 = scmp.eq.s32.totalorder %s54, 0
      %p522 = por %p520, %p521
      %p523 = scmp.ne.s32.totalorder %s511, %s512
      %p524 = scmp.eq.s32.totalorder %s55, 3
      %p525 = por %p523, %p524
      %p527 = scmp.ne.s32.totalorder %s512, %s526
      %p528 = scmp.eq.s32.totalorder %s55, 0
      %p529 = por %p527, %p528
      %s531 = sadd.s32 %s530, 1
      %p534 = scmp.eq.s32.totalorder %s49, 3
      %p535 = scmp.ne.s32.totalorder %s530, %s532
      %p536 = scmp.eq.s32.totalorder %s49, 0
      %p537 = por %p535, %p536
      %p538 = scmp.ne.s32.totalorder %s530, %s532
      %p539 = scmp.eq.s32.totalorder %s54, 3
      %p540 = por %p538, %p539
      %p541 = scmp.ne.s32.totalorder %s532, %s533
      %p542 = scmp.eq.s32.totalorder %s54, 0
      %p543 = por %p541, %p542
      %p544 = scmp.ne.s32.totalorder %s532, %s533
      %p545 = scmp.eq.s32.totalorder %s55, 3
      %p546 = por %p544, %p545
      %p548 = scmp.ne.s32.totalorder %s533, %s547
      %p549 = scmp.eq.s32.totalorder %s55, 0
      %p550 = por %p548, %p549
      %s551 = ssub.s32 %s56, %s68
      %p552 = scmp.eq.s32.totalorder %s551, 0
      %s554 = sadd.s32 %s553, 1
      %s555 = scalar_select %p552, %s553, %s554
      %p558 = pneg %p552
      %p559 = scmp.eq.s32.totalorder %s49, 3
      %p560 = por %p558, %p559
      %p561 = scmp.ne.s32.totalorder %s553, %s556
      %p562 = scmp.eq.s32.totalorder %s49, 0
      %p563 = por %p561, %p562
      %p564 = scmp.ne.s32.totalorder %s553, %s556
      %p565 = scmp.eq.s32.totalorder %s54, 3
      %p566 = por %p564, %p565
      %p567 = scmp.ne.s32.totalorder %s556, %s557
      %p568 = scmp.eq.s32.totalorder %s54, 0
      %p569 = por %p567, %p568
      %p570 = scmp.ne.s32.totalorder %s556, %s557
      %p571 = scmp.eq.s32.totalorder %s55, 3
      %p572 = por %p570, %p571
      %p574 = scmp.ne.s32.totalorder %s557, %s573
      %p575 = scmp.eq.s32.totalorder %s55, 0
      %p576 = por %p574, %p575
      %s577 = ssub.s32 %s57, %s64
      %s578 = ssub.s32 %s56, %s68
      %s579 = sor.u32 %s577, %s578
      %p580 = scmp.eq.s32.totalorder %s579, 0
      %s582 = sadd.s32 %s581, 1
      %s583 = scalar_select %p580, %s581, %s582
      %p586 = pneg %p580
      %p587 = scmp.eq.s32.totalorder %s49, 3
      %p588 = por %p586, %p587
      %p589 = scmp.ne.s32.totalorder %s581, %s584
      %p590 = scmp.eq.s32.totalorder %s49, 0
      %p591 = por %p589, %p590
      %p592 = scmp.ne.s32.totalorder %s581, %s584
      %p593 = scmp.eq.s32.totalorder %s54, 3
      %p594 = por %p592, %p593
      %p595 = scmp.ne.s32.totalorder %s584, %s585
      %p596 = scmp.eq.s32.totalorder %s54, 0
      %p597 = por %p595, %p596
      %p598 = scmp.ne.s32.totalorder %s584, %s585
      %p599 = scmp.eq.s32.totalorder %s55, 3
      %p600 = por %p598, %p599
      %p602 = scmp.ne.s32.totalorder %s585, %s601
      %p603 = scmp.eq.s32.totalorder %s55, 0
      %p604 = por %p602, %p603
      %s605 = ssub.s32 %s57, %s64
      %s606 = ssub.s32 %s56, %s68
      %s607 = sor.u32 %s605, %s606
      %p608 = scmp.eq.s32.totalorder %s607, 0
      %s610 = sadd.s32 %s609, 1
      %s611 = scalar_select %p608, %s609, %s610
      %p614 = pneg %p608
      %p615 = scmp.eq.s32.totalorder %s49, 3
      %p616 = por %p614, %p615
      %p617 = scmp.ne.s32.totalorder %s609, %s612
      %p618 = scmp.eq.s32.totalorder %s49, 0
      %p619 = por %p617, %p618
      %p620 = scmp.ne.s32.totalorder %s609, %s612
      %p621 = scmp.eq.s32.totalorder %s54, 3
      %p622 = por %p620, %p621
      %p623 = scmp.ne.s32.totalorder %s612, %s613
      %p624 = scmp.eq.s32.totalorder %s54, 0
      %p625 = por %p623, %p624
      %p626 = scmp.ne.s32.totalorder %s612, %s613
      %p627 = scmp.eq.s32.totalorder %s55, 3
      %p628 = por %p626, %p627
      %p630 = scmp.ne.s32.totalorder %s613, %s629
      %p631 = scmp.eq.s32.totalorder %s55, 0
      %p632 = por %p630, %p631
      %p633 = scmp.le.s32.totalorder 1, %s49
      %p634 = scmp.lt.s32.totalorder %s49, 5
      %p635 = pnand %p633, %p634
      %p636 = pneg %p635
      // Predicated region
      $region9: #{tpu_custom_call.1} parent=5 // pred_check
        _
      $region10: #{tpu_custom_call.1} parent=5 // pred_check_branch
        %638 = sbr.rel (%p635) target = $region12
      $region11: #{tpu_custom_call.1} parent=5 // pred_region
        %s639 = ssub.s32 %s49, 1
        // Predicated region
        $region13: #{tpu_custom_call.1} parent=11 // pred_check
          %p640 = pneg %p186
        $region14: #{tpu_custom_call.1} parent=11 // pred_check_branch
          %642 = sbr.rel (%p640) target = $region16
        $region15: #{tpu_custom_call.1} parent=11 // pred_region
          %s644 = ssub.s32 256, 256
          %645 = vsyncadd [#allocation6], %s644
          %s646 = sshll.u32 [#allocation7], 4
          %s647 = int_to_ptr.vmem [resolvable:$true] %s646
          %652 = dma.hbm_to_vmem [thread:$0]  %s4, 256, %s647, [#allocation6], 64, 64, 4
        $region16: #{tpu_custom_call.1} parent=11 // pred_fallthru
          _
        // Predicated region
        $region17: #{tpu_custom_call.1} parent=11 // pred_check
          %p653 = pneg %p207
        $region18: #{tpu_custom_call.1} parent=11 // pred_check_branch
          %655 = sbr.rel (%p653) target = $region20
        $region19: #{tpu_custom_call.1} parent=11 // pred_region
          %s657 = ssub.s32 16, 16
          %658 = vsyncadd [#allocation9], %s657
          %s660 = sshll.u32 [#allocation8], 4
          %s661 = int_to_ptr.vmem [resolvable:$true] %s660
          %663 = dma.hbm_to_vmem [thread:$0]  %s5, 16, %s661, [#allocation9]
        $region20: #{tpu_custom_call.1} parent=11 // pred_fallthru
          _
        // Predicated region
        $region21: #{tpu_custom_call.1} parent=11 // pred_check
          %p664 = pneg %p228
        $region22: #{tpu_custom_call.1} parent=11 // pred_check_branch
          %666 = sbr.rel (%p664) target = $region24
        $region23: #{tpu_custom_call.1} parent=11 // pred_region
          %s668 = ssub.s32 256, 256
          %669 = vsyncadd [#allocation9], %s668
          %s670 = sshll.u32 [#allocation10], 4
          %s671 = int_to_ptr.vmem [resolvable:$true] %s670
          %676 = dma.hbm_to_vmem [thread:$0]  %s6, 256, %s671, [#allocation9], 64, 64, 4
        $region24: #{tpu_custom_call.1} parent=11 // pred_fallthru
          _
        // Predicated region
        $region25: #{tpu_custom_call.1} parent=11 // pred_check
          %p677 = pneg %p249
        $region26: #{tpu_custom_call.1} parent=11 // pred_check_branch
          %679 = sbr.rel (%p677) target = $region28
        $region27: #{tpu_custom_call.1} parent=11 // pred_region
          %s681 = ssub.s32 16, 16
          %682 = vsyncadd [#allocation12], %s681
          %s684 = sshll.u32 [#allocation11], 4
          %s685 = int_to_ptr.vmem [resolvable:$true] %s684
          %687 = dma.hbm_to_vmem [thread:$0]  %s7, 16, %s685, [#allocation12]
        $region28: #{tpu_custom_call.1} parent=11 // pred_fallthru
          _
        // Predicated region
        $region29: #{tpu_custom_call.1} parent=11 // pred_check
          %p688 = pneg %p270
        $region30: #{tpu_custom_call.1} parent=11 // pred_check_branch
          %690 = sbr.rel (%p688) target = $region32
        $region31: #{tpu_custom_call.1} parent=11 // pred_region
          %s692 = ssub.s32 16, 16
          %693 = vsyncadd [#allocation12], %s692
          %s695 = sshll.u32 [#allocation13], 4
          %s696 = int_to_ptr.vmem [resolvable:$true] %s695
          %698 = dma.hbm_to_vmem [thread:$0]  %s8, 16, %s696, [#allocation12]
        $region32: #{tpu_custom_call.1} parent=11 // pred_fallthru
          _
        // Predicated region
        $region33: #{tpu_custom_call.1} parent=11 // pred_check
          %p699 = pneg %p291
        $region34: #{tpu_custom_call.1} parent=11 // pred_check_branch
          %701 = sbr.rel (%p699) target = $region36
        $region35: #{tpu_custom_call.1} parent=11 // pred_region
          %s703 = ssub.s32 16, 16
          %704 = vsyncadd [#allocation15], %s703
          %s706 = sshll.u32 [#allocation14], 4
          %s707 = int_to_ptr.vmem [resolvable:$true] %s706
          %709 = dma.hbm_to_vmem [thread:$0]  %s9, 16, %s707, [#allocation15]
        $region36: #{tpu_custom_call.1} parent=11 // pred_fallthru
          _
        // Predicated region
        $region37: #{tpu_custom_call.1} parent=11 // pred_check
          %p710 = pneg %p312
        $region38: #{tpu_custom_call.1} parent=11 // pred_check_branch
          %712 = sbr.rel (%p710) target = $region40
        $region39: #{tpu_custom_call.1} parent=11 // pred_region
          _
        $region40: #{tpu_custom_call.1} parent=11 // pred_fallthru
          _
        // Predicated region
        $region41: #{tpu_custom_call.1} parent=11 // pred_check
          %p713 = pneg %p333
        $region42: #{tpu_custom_call.1} parent=11 // pred_check_branch
          %715 = sbr.rel (%p713) target = $region44
        $region43: #{tpu_custom_call.1} parent=11 // pred_region
          %s717 = ssub.s32 16, 16
          %718 = vsyncadd [#allocation15], %s717
          %s720 = sshll.u32 [#allocation16], 4
          %s721 = int_to_ptr.vmem [resolvable:$true] %s720
          %723 = dma.hbm_to_vmem [thread:$0]  %s11, 16, %s721, [#allocation15]
        $region44: #{tpu_custom_call.1} parent=11 // pred_fallthru
          _
        // Predicated region
        $region45: #{tpu_custom_call.1} parent=11 // pred_check
          %p724 = pneg %p354
        $region46: #{tpu_custom_call.1} parent=11 // pred_check_branch
          %726 = sbr.rel (%p724) target = $region48
        $region47: #{tpu_custom_call.1} parent=11 // pred_region
          %s728 = ssub.s32 256, 256
          %729 = vsyncadd [#allocation18], %s728
          %s730 = sshll.u32 [#allocation17], 4
          %s731 = int_to_ptr.vmem [resolvable:$true] %s730
          %736 = dma.hbm_to_vmem [thread:$0]  %s12, 256, %s731, [#allocation18], 64, 64, 4
        $region48: #{tpu_custom_call.1} parent=11 // pred_fallthru
          _
        // Predicated region
        $region49: #{tpu_custom_call.1} parent=11 // pred_check
          %p737 = pneg %p375
        $region50: #{tpu_custom_call.1} parent=11 // pred_check_branch
          %739 = sbr.rel (%p737) target = $region52
        $region51: #{tpu_custom_call.1} parent=11 // pred_region
          %s741 = ssub.s32 16, 16
          %742 = vsyncadd [#allocation18], %s741
          %s744 = sshll.u32 [#allocation19], 4
          %s745 = int_to_ptr.vmem [resolvable:$true] %s744
          %747 = dma.hbm_to_vmem [thread:$0]  %s13, 16, %s745, [#allocation18]
        $region52: #{tpu_custom_call.1} parent=11 // pred_fallthru
          _
        // Predicated region
        $region53: #{tpu_custom_call.1} parent=11 // pred_check
          %p748 = pneg %p396
        $region54: #{tpu_custom_call.1} parent=11 // pred_check_branch
          %750 = sbr.rel (%p748) target = $region56
        $region55: #{tpu_custom_call.1} parent=11 // pred_region
          %s752 = ssub.s32 16, 16
          %753 = vsyncadd [#allocation21], %s752
          %s755 = sshll.u32 [#allocation20], 4
          %s756 = int_to_ptr.vmem [resolvable:$true] %s755
          %758 = dma.hbm_to_vmem [thread:$0]  %s14, 16, %s756, [#allocation21]
        $region56: #{tpu_custom_call.1} parent=11 // pred_fallthru
          _
        // Predicated region
        $region57: #{tpu_custom_call.1} parent=11 // pred_check
          %p759 = pneg %p417
        $region58: #{tpu_custom_call.1} parent=11 // pred_check_branch
          %761 = sbr.rel (%p759) target = $region60
        $region59: #{tpu_custom_call.1} parent=11 // pred_region
          %s763 = ssub.s32 16, 16
          %764 = vsyncadd [#allocation21], %s763
          %s766 = sshll.u32 [#allocation22], 4
          %s767 = int_to_ptr.vmem [resolvable:$true] %s766
          %769 = dma.hbm_to_vmem [thread:$0]  %s15, 16, %s767, [#allocation21]
        $region60: #{tpu_custom_call.1} parent=11 // pred_fallthru
          _
        // Predicated region
        $region61: #{tpu_custom_call.1} parent=11 // pred_check
          %p770 = pneg %p438
        $region62: #{tpu_custom_call.1} parent=11 // pred_check_branch
          %772 = sbr.rel (%p770) target = $region64
        $region63: #{tpu_custom_call.1} parent=11 // pred_region
          %s774 = ssub.s32 256, 256
          %775 = vsyncadd [#allocation24], %s774
          %s776 = sshll.u32 [#allocation23], 4
          %s777 = int_to_ptr.vmem [resolvable:$true] %s776
          %782 = dma.hbm_to_vmem [thread:$0]  %s16, 256, %s777, [#allocation24], 64, 64, 4
        $region64: #{tpu_custom_call.1} parent=11 // pred_fallthru
          _
        // Predicated region
        $region65: #{tpu_custom_call.1} parent=11 // pred_check
          %p783 = pneg %p459
        $region66: #{tpu_custom_call.1} parent=11 // pred_check_branch
          %785 = sbr.rel (%p783) target = $region68
        $region67: #{tpu_custom_call.1} parent=11 // pred_region
          %s787 = ssub.s32 16, 16
          %788 = vsyncadd [#allocation24], %s787
          %s790 = sshll.u32 [#allocation25], 4
          %s791 = int_to_ptr.vmem [resolvable:$true] %s790
          %793 = dma.hbm_to_vmem [thread:$0]  %s17, 16, %s791, [#allocation24]
        $region68: #{tpu_custom_call.1} parent=11 // pred_fallthru
          _
        // Predicated region
        $region69: #{tpu_custom_call.1} parent=11 // pred_check
          %p794 = pneg %p480
        $region70: #{tpu_custom_call.1} parent=11 // pred_check_branch
          %796 = sbr.rel (%p794) target = $region72
        $region71: #{tpu_custom_call.1} parent=11 // pred_region
          _
        $region72: #{tpu_custom_call.1} parent=11 // pred_fallthru
          _
        // Predicated region
        $region73: #{tpu_custom_call.1} parent=11 // pred_check
          %p797 = pneg %p501
        $region74: #{tpu_custom_call.1} parent=11 // pred_check_branch
          %799 = sbr.rel (%p797) target = $region76
        $region75: #{tpu_custom_call.1} parent=11 // pred_region
          _
        $region76: #{tpu_custom_call.1} parent=11 // pred_fallthru
          _
        // Predicated region
        $region77: #{tpu_custom_call.1} parent=11 // pred_check
          %p800 = pneg %p522
        $region78: #{tpu_custom_call.1} parent=11 // pred_check_branch
          %802 = sbr.rel (%p800) target = $region80
        $region79: #{tpu_custom_call.1} parent=11 // pred_region
          _
        $region80: #{tpu_custom_call.1} parent=11 // pred_fallthru
          _
        // Predicated region
        $region81: #{tpu_custom_call.1} parent=11 // pred_check
          %p803 = pneg %p543
        $region82: #{tpu_custom_call.1} parent=11 // pred_check_branch
          %805 = sbr.rel (%p803) target = $region84
        $region83: #{tpu_custom_call.1} parent=11 // pred_region
          _
        $region84: #{tpu_custom_call.1} parent=11 // pred_fallthru
          _
      $region12: #{tpu_custom_call.1} parent=5 // pred_fallthru
        _
      %p806 = scmp.lt.s32.totalorder %s49, 4
      // Predicated region
      $region85: #{tpu_custom_call.1} parent=5 // pred_check
        %p807 = pneg %p806
      $region86: #{tpu_custom_call.1} parent=5 // pred_check_branch
        %809 = sbr.rel (%p807) target = $region88
      $region87: #{tpu_custom_call.1} parent=5 // pred_region
        // Predicated region
        $region89: #{tpu_custom_call.1} parent=87 // pred_check
          %p810 = pneg %p81
        $region90: #{tpu_custom_call.1} parent=87 // pred_check_branch
          %812 = sbr.rel (%p810) target = $region92
        $region91: #{tpu_custom_call.1} parent=87 // pred_region
          %p813 = scmp.lt.s32.totalorder %s56, 1
          %s814 = scalar_select %p813, %s56, 1
          %s815 = smul.addr %s814, 8
          %s816 = scalar_lea.vmem %s0, %s815
        $region92: #{tpu_custom_call.1} parent=87 // pred_fallthru
          _
        // Predicated region
        $region93: #{tpu_custom_call.1} parent=87 // pred_check
          %p817 = pneg %p107
        $region94: #{tpu_custom_call.1} parent=87 // pred_check_branch
          %819 = sbr.rel (%p817) target = $region96
        $region95: #{tpu_custom_call.1} parent=87 // pred_region
          %p820 = scmp.lt.s32.totalorder %s56, 1
          %s821 = scalar_select %p820, %s56, 1
          %s822 = smul.addr %s821, 4
          %s823 = smul.addr %s822, 8
          %s824 = scalar_lea.vmem %s1, %s823
        $region96: #{tpu_custom_call.1} parent=87 // pred_fallthru
          _
        // Predicated region
        $region97: #{tpu_custom_call.1} parent=87 // pred_check
          %p825 = pneg %p133
        $region98: #{tpu_custom_call.1} parent=87 // pred_check_branch
          %827 = sbr.rel (%p825) target = $region100
        $region99: #{tpu_custom_call.1} parent=87 // pred_region
          %s828 = sand.u32 %s123, 1
          %s829 = scalar_lea.sflag [#allocation3], %s828
          %s830 = sand.u32 %s123, 1
          %s831 = smul.addr %s830, 32
          %s832 = scalar_lea.vmem [#allocation2], %s831
          %s834 = ssub.s32 512, 512
          %835 = vsyncadd %s829, %s834
          %s836 = smul.addr %s56, 4
          %s837 = smul.addr %s836, 128
          %s838 = scalar_lea.hbm %s2, %s837
          %s839 = sshll.u32 %s832, 4
          %s840 = int_to_ptr.vmem [resolvable:$true] %s839
          %845 = dma.hbm_to_vmem [thread:$0]  %s838, 512, %s840, %s829, 128, 128, 8
        $region100: #{tpu_custom_call.1} parent=87 // pred_fallthru
          _
        // Predicated region
        $region101: #{tpu_custom_call.1} parent=87 // pred_check
          %p846 = pneg %p159
        $region102: #{tpu_custom_call.1} parent=87 // pred_check_branch
          %848 = sbr.rel (%p846) target = $region104
        $region103: #{tpu_custom_call.1} parent=87 // pred_region
          %s849 = sand.u32 %s49, 1
          %s850 = scalar_lea.sflag [#allocation6], %s849
          %s851 = sand.u32 %s149, 1
          %s852 = smul.addr %s851, 4
          %s853 = scalar_lea.vmem [#allocation5], %s852
          %s855 = ssub.s32 64, 64
          %856 = vsyncadd %s850, %s855
          %s857 = smul.addr %s56, 64
          %s858 = scalar_lea.hbm %s3, %s857
          %s860 = sshll.u32 %s853, 4
          %s861 = int_to_ptr.vmem [resolvable:$true] %s860
          %863 = dma.hbm_to_vmem [thread:$0]  %s858, 64, %s861, %s850
        $region104: #{tpu_custom_call.1} parent=87 // pred_fallthru
          _
      $region88: #{tpu_custom_call.1} parent=5 // pred_fallthru
        _
      %p864 = scmp.le.s32.totalorder 1, %s49
      %p865 = scmp.lt.s32.totalorder %s49, 5
      %p866 = pnand %p864, %p865
      %p867 = pneg %p866
      // Predicated region
      $region105: #{tpu_custom_call.1} parent=5 // pred_check
        _
      $region106: #{tpu_custom_call.1} parent=5 // pred_check_branch
        %869 = sbr.rel (%p866) target = $region108
      $region107: #{tpu_custom_call.1} parent=5 // pred_region
        %s870 = ssub.s32 %s49, 1
        %s871 = sand.u32 %s126, 1
        %s872 = scalar_lea.sflag [#allocation3], %s871
        %s873 = sand.u32 %s126, 1
        %s874 = smul.addr %s873, 32
        %s875 = scalar_lea.vmem [#allocation2], %s874
        // Predicated region
        $region109: #{tpu_custom_call.1} parent=107 // pred_check
          %p876 = pneg %p139
        $region110: #{tpu_custom_call.1} parent=107 // pred_check_branch
          %878 = sbr.rel (%p876) target = $region112
        $region111: #{tpu_custom_call.1} parent=107 // pred_region
          %879 = dma.done %s872, 512
        $region112: #{tpu_custom_call.1} parent=107 // pred_fallthru
          _
        %s880 = sand.u32 %s54, 1
        %s881 = scalar_lea.sflag [#allocation6], %s880
        %s882 = sand.u32 %s152, 1
        %s883 = smul.addr %s882, 4
        %s884 = scalar_lea.vmem [#allocation5], %s883
        // Predicated region
        $region113: #{tpu_custom_call.1} parent=107 // pred_check
          %p885 = pneg %p165
        $region114: #{tpu_custom_call.1} parent=107 // pred_check_branch
          %887 = sbr.rel (%p885) target = $region116
        $region115: #{tpu_custom_call.1} parent=107 // pred_region
          %888 = dma.done %s881, 64
        $region116: #{tpu_custom_call.1} parent=107 // pred_fallthru
          _
        // Predicated region
        $region117: #{tpu_custom_call.1} parent=107 // pred_check
          %p889 = pneg %p186
        $region118: #{tpu_custom_call.1} parent=107 // pred_check_branch
          %891 = sbr.rel (%p889) target = $region120
        $region119: #{tpu_custom_call.1} parent=107 // pred_region
          %892 = dma.done [#allocation6], 256
        $region120: #{tpu_custom_call.1} parent=107 // pred_fallthru
          _
        // Predicated region
        $region121: #{tpu_custom_call.1} parent=107 // pred_check
          %p893 = pneg %p207
        $region122: #{tpu_custom_call.1} parent=107 // pred_check_branch
          %895 = sbr.rel (%p893) target = $region124
        $region123: #{tpu_custom_call.1} parent=107 // pred_region
          %896 = dma.done [#allocation9], 16
        $region124: #{tpu_custom_call.1} parent=107 // pred_fallthru
          _
        // Predicated region
        $region125: #{tpu_custom_call.1} parent=107 // pred_check
          %p897 = pneg %p228
        $region126: #{tpu_custom_call.1} parent=107 // pred_check_branch
          %899 = sbr.rel (%p897) target = $region128
        $region127: #{tpu_custom_call.1} parent=107 // pred_region
          %900 = dma.done [#allocation9], 256
        $region128: #{tpu_custom_call.1} parent=107 // pred_fallthru
          _
        // Predicated region
        $region129: #{tpu_custom_call.1} parent=107 // pred_check
          %p901 = pneg %p249
        $region130: #{tpu_custom_call.1} parent=107 // pred_check_branch
          %903 = sbr.rel (%p901) target = $region132
        $region131: #{tpu_custom_call.1} parent=107 // pred_region
          %904 = dma.done [#allocation12], 16
        $region132: #{tpu_custom_call.1} parent=107 // pred_fallthru
          _
        // Predicated region
        $region133: #{tpu_custom_call.1} parent=107 // pred_check
          %p905 = pneg %p270
        $region134: #{tpu_custom_call.1} parent=107 // pred_check_branch
          %907 = sbr.rel (%p905) target = $region136
        $region135: #{tpu_custom_call.1} parent=107 // pred_region
          %908 = dma.done [#allocation12], 16
        $region136: #{tpu_custom_call.1} parent=107 // pred_fallthru
          _
        // Predicated region
        $region137: #{tpu_custom_call.1} parent=107 // pred_check
          %p909 = pneg %p291
        $region138: #{tpu_custom_call.1} parent=107 // pred_check_branch
          %911 = sbr.rel (%p909) target = $region140
        $region139: #{tpu_custom_call.1} parent=107 // pred_region
          %912 = dma.done [#allocation15], 16
        $region140: #{tpu_custom_call.1} parent=107 // pred_fallthru
          _
        // Predicated region
        $region141: #{tpu_custom_call.1} parent=107 // pred_check
          %p913 = pneg %p333
        $region142: #{tpu_custom_call.1} parent=107 // pred_check_branch
          %915 = sbr.rel (%p913) target = $region144
        $region143: #{tpu_custom_call.1} parent=107 // pred_region
          %916 = dma.done [#allocation15], 16
        $region144: #{tpu_custom_call.1} parent=107 // pred_fallthru
          _
        // Predicated region
        $region145: #{tpu_custom_call.1} parent=107 // pred_check
          %p917 = pneg %p354
        $region146: #{tpu_custom_call.1} parent=107 // pred_check_branch
          %919 = sbr.rel (%p917) target = $region148
        $region147: #{tpu_custom_call.1} parent=107 // pred_region
          %920 = dma.done [#allocation18], 256
        $region148: #{tpu_custom_call.1} parent=107 // pred_fallthru
          _
        // Predicated region
        $region149: #{tpu_custom_call.1} parent=107 // pred_check
          %p921 = pneg %p375
        $region150: #{tpu_custom_call.1} parent=107 // pred_check_branch
          %923 = sbr.rel (%p921) target = $region152
        $region151: #{tpu_custom_call.1} parent=107 // pred_region
          %924 = dma.done [#allocation18], 16
        $region152: #{tpu_custom_call.1} parent=107 // pred_fallthru
          _
        // Predicated region
        $region153: #{tpu_custom_call.1} parent=107 // pred_check
          %p925 = pneg %p396
        $region154: #{tpu_custom_call.1} parent=107 // pred_check_branch
          %927 = sbr.rel (%p925) target = $region156
        $region155: #{tpu_custom_call.1} parent=107 // pred_region
          %928 = dma.done [#allocation21], 16
        $region156: #{tpu_custom_call.1} parent=107 // pred_fallthru
          _
        // Predicated region
        $region157: #{tpu_custom_call.1} parent=107 // pred_check
          %p929 = pneg %p417
        $region158: #{tpu_custom_call.1} parent=107 // pred_check_branch
          %931 = sbr.rel (%p929) target = $region160
        $region159: #{tpu_custom_call.1} parent=107 // pred_region
          %932 = dma.done [#allocation21], 16
        $region160: #{tpu_custom_call.1} parent=107 // pred_fallthru
          _
        // Predicated region
        $region161: #{tpu_custom_call.1} parent=107 // pred_check
          %p933 = pneg %p438
        $region162: #{tpu_custom_call.1} parent=107 // pred_check_branch
          %935 = sbr.rel (%p933) target = $region164
        $region163: #{tpu_custom_call.1} parent=107 // pred_region
          %936 = dma.done [#allocation24], 256
        $region164: #{tpu_custom_call.1} parent=107 // pred_fallthru
          _
        // Predicated region
        $region165: #{tpu_custom_call.1} parent=107 // pred_check
          %p937 = pneg %p459
        $region166: #{tpu_custom_call.1} parent=107 // pred_check_branch
          %939 = sbr.rel (%p937) target = $region168
        $region167: #{tpu_custom_call.1} parent=107 // pred_region
          %940 = dma.done [#allocation24], 16
        $region168: #{tpu_custom_call.1} parent=107 // pred_fallthru
          _
        %p941 = scmp.lt.s32.totalorder %s58, 1
        %s942 = scalar_select %p941, %s58, 1
        %s943 = smul.addr %s942, 8
        %s944 = scalar_lea.vmem %s0, %s943
        %p945 = pneg %p87
        %p946 = pneg %p84
        %p947 = scmp.lt.s32.totalorder %s58, 1
        %s948 = scalar_select %p947, %s58, 1
        %s949 = smul.addr %s948, 4
        %s950 = smul.addr %s949, 8
        %s951 = scalar_lea.vmem %s1, %s950
        %p952 = pneg %p113
        %p953 = pneg %p110
        %s954 = sand.u32 %s126, 1
        %s955 = scalar_lea.sflag [#allocation3], %s954
        %s956 = sand.u32 %s126, 1
        %s957 = smul.addr %s956, 32
        %s958 = scalar_lea.vmem [#allocation2], %s957
        %p959 = pneg %p139
        %p960 = pneg %p136
        %s961 = sand.u32 %s54, 1
        %s962 = scalar_lea.sflag [#allocation6], %s961
        %s963 = sand.u32 %s152, 1
        %s964 = smul.addr %s963, 4
        %s965 = scalar_lea.vmem [#allocation5], %s964
        %p966 = pneg %p165
        %p967 = pneg %p162
        %p968 = pneg %p186
        %p969 = pneg %p183
        %p970 = pneg %p207
        %p971 = pneg %p204
        %p972 = pneg %p228
        %p973 = pneg %p225
        %p974 = pneg %p249
        %p975 = pneg %p246
        %p976 = pneg %p270
        %p977 = pneg %p267
        %p978 = pneg %p291
        %p979 = pneg %p288
        %p980 = pneg %p312
        %p981 = pneg %p309
        %p982 = pneg %p333
        %p983 = pneg %p330
        %p984 = pneg %p354
        %p985 = pneg %p351
        %p986 = pneg %p375
        %p987 = pneg %p372
        %p988 = pneg %p396
        %p989 = pneg %p393
        %p990 = pneg %p417
        %p991 = pneg %p414
        %p992 = pneg %p438
        %p993 = pneg %p435
        %p994 = pneg %p459
        %p995 = pneg %p456
        %p996 = pneg %p480
        %p997 = pneg %p477
        %p998 = pneg %p501
        %p999 = pneg %p498
        %p1000 = pneg %p522
        %p1001 = pneg %p519
        %p1002 = pneg %p543
        %p1003 = pneg %p540
        %p1004 = pneg %p569
        %p1005 = pneg %p566
        %s1006 = sand.u32 %s556, 1
        %s1007 = scalar_lea.sflag [#allocation4], %s1006
        %s1008 = sand.u32 %s556, 1
        %s1009 = smul.addr %s1008, 8
        %s1010 = scalar_lea.vmem [#allocation26], %s1009
        %p1011 = pneg %p597
        %p1012 = pneg %p594
        %s1013 = sand.u32 %s54, 1
        %s1014 = scalar_lea.sflag [#allocation28], %s1013
        %s1015 = sand.u32 %s584, 1
        %s1016 = smul.addr %s1015, 32
        %s1017 = scalar_lea.vmem [#allocation27], %s1016
        %p1018 = pneg %p625
        %p1019 = pneg %p622
        %s1020 = sand.u32 %s54, 1
        %s1021 = scalar_lea.sflag [#allocation28], %s1020
        %s1022 = sand.u32 %s612, 1
        %s1023 = smul.addr %s1022, 32
        %s1024 = scalar_lea.vmem [#allocation29], %s1023
        %p1025 = scmp.lt.s32.totalorder %s58, 1
        %s1026 = scalar_select %p1025, %s58, 1
        %s1027 = smul.addr %s1026, 8
        %s1028 = scalar_lea.vmem %s0, %s1027
        %p1029 = scmp.lt.s32.totalorder %s58, 1
        %s1030 = scalar_select %p1029, %s58, 1
        %s1031 = smul.addr %s1030, 4
        %s1032 = smul.addr %s1031, 8
        %s1033 = scalar_lea.vmem %s1, %s1032
        %p1035 = scmp.eq.s32.totalorder %s59, 0
        // Predicated region
        $region169: #{tpu_custom_call.1} parent=107 // pred_check
          %p1036 = pneg %p1035
        $region170: #{tpu_custom_call.1} parent=107 // pred_check_branch
          %1038 = sbr.rel (%p1036) target = $region172
        $region171: #{tpu_custom_call.1} parent=107 // pred_region
          %v1039 = vld [vmem:[%s1028] sm:$0xff]
          %vm1040 = vcmask 261120
          %1041 = vst.msk [vmem:[%s1010] sm:$0xff] %vm1040, %v1039
        $region172: #{tpu_custom_call.1} parent=107 // pred_fallthru
          _
        %v1042 = vld [vmem:[%s1010] sm:$0xff]
        %v1043 = vpack.c.bf16 %v1042, %v1042
        %v1044 = vld [vmem:[#allocation7] sm:$0xf]
        %v1045 = vld [vmem:[#allocation7 + $0x4] sm:$0xf]
        %v1046 = vld [vmem:[#allocation7 + $0x8] sm:$0xf]
        %v1047 = vld [vmem:[#allocation7 + $0xc] sm:$0xf]
        %v1048 = vld [vmem:[#allocation8] sm:$0x1]
        %v1050 = vlaneseq
        %v1051 = vshrl.u32 %v1050, 7
        %v1052 = vsub.s32 0, %v1051
        %v1053 = vrot.slane %v1048, %v1052
        %v1059 = vunpack.c.l.b16 %v1044
        %v1060 = vunpack.c.l.b16 %v1045
        %v1061 = vunpack.c.l.b16 %v1046
        %v1062 = vunpack.c.l.b16 %v1047
        %v1063 = vpack.c.b16 %v1060, %v1059
        %v1064 = vpack.c.b16 %v1062, %v1061
        %vm1067 = vcmask 261120
        %v1069 = vsel %vm1067, %v1043, 0
        %1071 = vmatprep.subr.bf16.mxu0 0
        %1072 = vmatpush1.bf16.msra.mxu0 0
        %1073 = vmatprep.subr.bf16.mxu0 0
        %1074 = vmatpush1.bf16.msra.mxu0 0
        %1075 = vmatprep.subr.bf16.mxu0 0
        %1076 = vmatpush1.bf16.msra.mxu0 0
        %1077 = vmatprep.subr.bf16.mxu0 0
        %1078 = vmatpush1.bf16.msra.mxu0 0
        %1079 = vmatprep.subr.bf16.mxu0 0
        %1080 = vmatpush1.bf16.msra.mxu0 0
        %1081 = vmatprep.subr.bf16.mxu0 0
        %1082 = vmatpush1.bf16.msra.mxu0 0
        %1083 = vmatprep.subr.bf16.mxu0 0
        %1084 = vmatpush1.bf16.msra.mxu0 %v1064
        %1085 = vmatprep.subr.bf16.mxu0 0
        %1086 = vmatpush1.bf16.msra.mxu0 %v1063
        %1087 = vmatprep.subr.bf16.mxu0 0
        %1088 = vmatpush2.bf16.msra.mxu0 0
        %1089 = vmatprep.subr.bf16.mxu0 0
        %1090 = vmatpush2.bf16.msra.mxu0 0
        %1091 = vmatprep.subr.bf16.mxu0 0
        %1092 = vmatpush2.bf16.msra.mxu0 0
        %1093 = vmatprep.subr.bf16.mxu0 0
        %1094 = vmatpush2.bf16.msra.mxu0 0
        %1095 = vmatprep.subr.bf16.mxu0 0
        %1096 = vmatpush2.bf16.msra.mxu0 0
        %1097 = vmatprep.subr.bf16.mxu0 0
        %1098 = vmatpush2.bf16.msra.mxu0 0
        %1099 = vmatprep.subr.bf16.mxu0 0
        %1100 = vmatpush2.bf16.msra.mxu0 0
        %1101 = vmatprep.subr.bf16.mxu0 0
        %1102 = vmatpush2.bf16.msra.mxu0 0
        %1103 = vmatprep.mubr.bf16.mxu0 0
        %1104 = vmatmul.mubr.bf16.gmra.mxu0 %v1069
        %v1105 = vpop.f32.mrf.mxu0
        %v1106 = vadd.f32 %v1053, %v1105
        %v1107 = vpop.f32.mrf.mxu0
        %v1108 = vpop.f32.mrf.mxu0
        %v1109 = vpop.f32.mrf.mxu0
        %1110 = vdwg.mxu0
        %v1111 = vpack.c.bf16 %v1106, %v1106
        %v1112 = vld [vmem:[%s1033] sm:$0xff]
        %1114 = vrot.lane.b32.xlu0 %v1111, 96
        %v1115 = vpop.permute.xlu0 %1114
        %vm1116 = vcmask 64512
        %v1118 = vsel %vm1116, %v1111, 0
        %v1121 = vsel %vm1116, %v1115, 0
        %1123 = vmatprep.subr.bf16.mxu0 0
        %1124 = vmatpush1.bf16.xpose.msra.mxu0 0
        %1125 = vmatprep.subr.bf16.mxu0 0
        %1126 = vmatpush1.bf16.xpose.msra.mxu0 0
        %1127 = vmatprep.subr.bf16.mxu0 0
        %1128 = vmatpush1.bf16.xpose.msra.mxu0 0
        %1129 = vmatprep.subr.bf16.mxu0 0
        %1130 = vmatpush1.bf16.xpose.msra.mxu0 0
        %1131 = vmatprep.subr.bf16.mxu0 0
        %1132 = vmatpush1.bf16.xpose.msra.mxu0 0
        %1133 = vmatprep.subr.bf16.mxu0 0
        %1134 = vmatpush1.bf16.xpose.msra.mxu0 0
        %1135 = vmatprep.subr.bf16.mxu0 0
        %1136 = vmatpush1.bf16.xpose.msra.mxu0 0
        %1137 = vmatprep.subr.bf16.mxu0 0
        %1138 = vmatpush1.bf16.xpose.msra.mxu0 %v1121
        %1139 = vmatprep.subr.bf16.mxu0 0
        %1140 = vmatpush2.bf16.xpose.msra.mxu0 0
        %1141 = vmatprep.subr.bf16.mxu0 0
        %1142 = vmatpush2.bf16.xpose.msra.mxu0 0
        %1143 = vmatprep.subr.bf16.mxu0 0
        %1144 = vmatpush2.bf16.xpose.msra.mxu0 0
        %1145 = vmatprep.subr.bf16.mxu0 0
        %1146 = vmatpush2.bf16.xpose.msra.mxu0 0
        %1147 = vmatprep.subr.bf16.mxu0 0
        %1148 = vmatpush2.bf16.xpose.msra.mxu0 0
        %1149 = vmatprep.subr.bf16.mxu0 0
        %1150 = vmatpush2.bf16.xpose.msra.mxu0 0
        %1151 = vmatprep.subr.bf16.mxu0 0
        %1152 = vmatpush2.bf16.xpose.msra.mxu0 0
        %1153 = vmatprep.subr.bf16.mxu0 0
        %1154 = vmatpush2.bf16.xpose.msra.mxu0 0
        %1155 = vmatprep.mubr.bf16.mxu0 0
        %1156 = vmatmul.mubr.bf16.gmra.mxu0 %v1118
        %v1157 = vpop.f32.mrf.mxu0
        %v1158 = vadd.f32 %v1112, %v1157
        %v1159 = vpop.f32.mrf.mxu0
        %v1160 = vpop.f32.mrf.mxu0
        %v1161 = vpop.f32.mrf.mxu0
        %1162 = vdwg.mxu0
        %v1163 = vsel %vm1116, %v1158, -inf
        %1164 = vmax.xlane.f32.xlu0 %v1163
        %v1165 = vpop.xlane.xlu0 %1164
        %v1166 = vsub.f32 %v1158, %v1165
        %v1167 = vmul.f32 %v1166, 1.442695
        %v1168 = vpow.pop %v1167
        %v1169 = vsel %vm1116, %v1168, 0.0
        %1170 = vadd.xlane.f32.xlu0 %v1169
        %v1171 = vpop.xlane.xlu0 %1170
        %v1172 = vrcp.pop %v1171
        %v1173 = vmul.f32 %v1168, %v1172
        %1174 = vst.msk [vmem:[%s1017] sm:$0xff] %vm1116, %v1173
        %v1175 = vpack.c.bf16 %v1173, %v1173
        %1176 = vrot.lane.b32.xlu0 %v1111, 64
        %v1177 = vpop.permute.xlu0 %1176
        %v1179 = vsel %vm1116, %v1175, 0
        %vm1181 = vcmask 1043456
        %v1183 = vsel %vm1181, %v1177, 0
        %1185 = vmatprep.subr.bf16.mxu0 0
        %1186 = vmatpush1.bf16.msra.mxu0 0
        %1187 = vmatprep.subr.bf16.mxu0 0
        %1188 = vmatpush1.bf16.msra.mxu0 0
        %1189 = vmatprep.subr.bf16.mxu0 0
        %1190 = vmatpush1.bf16.msra.mxu0 0
        %1191 = vmatprep.subr.bf16.mxu0 0
        %1192 = vmatpush1.bf16.msra.mxu0 0
        %1193 = vmatprep.subr.bf16.mxu0 0
        %1194 = vmatpush1.bf16.msra.mxu0 0
        %1195 = vmatprep.subr.bf16.mxu0 0
        %1196 = vmatpush1.bf16.msra.mxu0 0
        %1197 = vmatprep.subr.bf16.mxu0 0
        %1198 = vmatpush1.bf16.msra.mxu0 0
        %1199 = vmatprep.subr.bf16.mxu0 0
        %1200 = vmatpush1.bf16.msra.mxu0 %v1183
        %1201 = vmatprep.subr.bf16.mxu0 0
        %1202 = vmatpush2.bf16.msra.mxu0 0
        %1203 = vmatprep.subr.bf16.mxu0 0
        %1204 = vmatpush2.bf16.msra.mxu0 0
        %1205 = vmatprep.subr.bf16.mxu0 0
        %1206 = vmatpush2.bf16.msra.mxu0 0
        %1207 = vmatprep.subr.bf16.mxu0 0
        %1208 = vmatpush2.bf16.msra.mxu0 0
        %1209 = vmatprep.subr.bf16.mxu0 0
        %1210 = vmatpush2.bf16.msra.mxu0 0
        %1211 = vmatprep.subr.bf16.mxu0 0
        %1212 = vmatpush2.bf16.msra.mxu0 0
        %1213 = vmatprep.subr.bf16.mxu0 0
        %1214 = vmatpush2.bf16.msra.mxu0 0
        %1215 = vmatprep.subr.bf16.mxu0 0
        %1216 = vmatpush2.bf16.msra.mxu0 0
        %1217 = vmatprep.mubr.bf16.mxu0 0
        %1218 = vmatmul.mubr.bf16.gmra.mxu0 %v1179
        %v1219 = vpop.f32.mrf.mxu0
        %v1220 = vadd.f32 0.0, %v1219
        %v1221 = vpop.f32.mrf.mxu0
        %v1222 = vpop.f32.mrf.mxu0
        %v1223 = vpop.f32.mrf.mxu0
        %1224 = vdwg.mxu0
        %v1225 = vpack.c.bf16 %v1220, %v1220
        %v1226 = vld [vmem:[#allocation10] sm:$0xf]
        %s1227 = scalar_lea.vmem %s1033, 8
        %v1228 = vld [vmem:[%s1227] sm:$0xff]
        %1229 = vrot.lane.b32.xlu0 %v1111, 120
        %v1230 = vpop.permute.xlu0 %1229
        %1231 = vrot.lane.b32.xlu0 %v1111, 88
        %v1232 = vpop.permute.xlu0 %1231
        %v1234 = vsel %vm1116, %v1230, 0
        %v1237 = vsel %vm1116, %v1232, 0
        %1239 = vmatprep.subr.bf16.mxu0 0
        %1240 = vmatpush1.bf16.xpose.msra.mxu0 0
        %1241 = vmatprep.subr.bf16.mxu0 0
        %1242 = vmatpush1.bf16.xpose.msra.mxu0 0
        %1243 = vmatprep.subr.bf16.mxu0 0
        %1244 = vmatpush1.bf16.xpose.msra.mxu0 0
        %1245 = vmatprep.subr.bf16.mxu0 0
        %1246 = vmatpush1.bf16.xpose.msra.mxu0 0
        %1247 = vmatprep.subr.bf16.mxu0 0
        %1248 = vmatpush1.bf16.xpose.msra.mxu0 0
        %1249 = vmatprep.subr.bf16.mxu0 0
        %1250 = vmatpush1.bf16.xpose.msra.mxu0 0
        %1251 = vmatprep.subr.bf16.mxu0 0
        %1252 = vmatpush1.bf16.xpose.msra.mxu0 0
        %1253 = vmatprep.subr.bf16.mxu0 0
        %1254 = vmatpush1.bf16.xpose.msra.mxu0 %v1237
        %1255 = vmatprep.subr.bf16.mxu0 0
        %1256 = vmatpush2.bf16.xpose.msra.mxu0 0
        %1257 = vmatprep.subr.bf16.mxu0 0
        %1258 = vmatpush2.bf16.xpose.msra.mxu0 0
        %1259 = vmatprep.subr.bf16.mxu0 0
        %1260 = vmatpush2.bf16.xpose.msra.mxu0 0
        %1261 = vmatprep.subr.bf16.mxu0 0
        %1262 = vmatpush2.bf16.xpose.msra.mxu0 0
        %1263 = vmatprep.subr.bf16.mxu0 0
        %1264 = vmatpush2.bf16.xpose.msra.mxu0 0
        %1265 = vmatprep.subr.bf16.mxu0 0
        %1266 = vmatpush2.bf16.xpose.msra.mxu0 0
        %1267 = vmatprep.subr.bf16.mxu0 0
        %1268 = vmatpush2.bf16.xpose.msra.mxu0 0
        %1269 = vmatprep.subr.bf16.mxu0 0
        %1270 = vmatpush2.bf16.xpose.msra.mxu0 0
        %1271 = vmatprep.mubr.bf16.mxu0 0
        %1272 = vmatmul.mubr.bf16.gmra.mxu0 %v1234
        %v1273 = vpop.f32.mrf.mxu0
        %v1274 = vadd.f32 %v1228, %v1273
        %v1275 = vpop.f32.mrf.mxu0
        %v1276 = vpop.f32.mrf.mxu0
        %v1277 = vpop.f32.mrf.mxu0
        %1278 = vdwg.mxu0
        %v1279 = vsel %vm1116, %v1274, -inf
        %1280 = vmax.xlane.f32.xlu0 %v1279
        %v1281 = vpop.xlane.xlu0 %1280
        %v1282 = vsub.f32 %v1274, %v1281
        %v1283 = vmul.f32 %v1282, 1.442695
        %v1284 = vpow.pop %v1283
        %v1285 = vsel %vm1116, %v1284, 0.0
        %1286 = vadd.xlane.f32.xlu0 %v1285
        %v1287 = vpop.xlane.xlu0 %1286
        %v1288 = vrcp.pop %v1287
        %v1289 = vmul.f32 %v1284, %v1288
        %s1290 = scalar_lea.vmem %s1017, 8 [#allocation27]
        %1291 = vst.msk [vmem:[%s1290] sm:$0xff] %vm1116, %v1289
        %v1292 = vpack.c.bf16 %v1289, %v1289
        %1293 = vrot.lane.b32.xlu0 %v1111, 56
        %v1294 = vpop.permute.xlu0 %1293
        %v1296 = vsel %vm1116, %v1292, 0
        %v1299 = vsel %vm1181, %v1294, 0
        %1301 = vmatprep.subr.bf16.mxu0 0
        %1302 = vmatpush1.bf16.msra.mxu0 0
        %1303 = vmatprep.subr.bf16.mxu0 0
        %1304 = vmatpush1.bf16.msra.mxu0 0
        %1305 = vmatprep.subr.bf16.mxu0 0
        %1306 = vmatpush1.bf16.msra.mxu0 0
        %1307 = vmatprep.subr.bf16.mxu0 0
        %1308 = vmatpush1.bf16.msra.mxu0 0
        %1309 = vmatprep.subr.bf16.mxu0 0
        %1310 = vmatpush1.bf16.msra.mxu0 0
        %1311 = vmatprep.subr.bf16.mxu0 0
        %1312 = vmatpush1.bf16.msra.mxu0 0
        %1313 = vmatprep.subr.bf16.mxu0 0
        %1314 = vmatpush1.bf16.msra.mxu0 0
        %1315 = vmatprep.subr.bf16.mxu0 0
        %1316 = vmatpush1.bf16.msra.mxu0 %v1299
        %1317 = vmatprep.subr.bf16.mxu0 0
        %1318 = vmatpush2.bf16.msra.mxu0 0
        %1319 = vmatprep.subr.bf16.mxu0 0
        %1320 = vmatpush2.bf16.msra.mxu0 0
        %1321 = vmatprep.subr.bf16.mxu0 0
        %1322 = vmatpush2.bf16.msra.mxu0 0
        %1323 = vmatprep.subr.bf16.mxu0 0
        %1324 = vmatpush2.bf16.msra.mxu0 0
        %1325 = vmatprep.subr.bf16.mxu0 0
        %1326 = vmatpush2.bf16.msra.mxu0 0
        %1327 = vmatprep.subr.bf16.mxu0 0
        %1328 = vmatpush2.bf16.msra.mxu0 0
        %1329 = vmatprep.subr.bf16.mxu0 0
        %1330 = vmatpush2.bf16.msra.mxu0 0
        %1331 = vmatprep.subr.bf16.mxu0 0
        %1332 = vmatpush2.bf16.msra.mxu0 0
        %1333 = vmatprep.mubr.bf16.mxu0 0
        %1334 = vmatmul.mubr.bf16.gmra.mxu0 %v1296
        %v1335 = vpop.f32.mrf.mxu0
        %v1336 = vadd.f32 0.0, %v1335
        %v1337 = vpop.f32.mrf.mxu0
        %v1338 = vpop.f32.mrf.mxu0
        %v1339 = vpop.f32.mrf.mxu0
        %1340 = vdwg.mxu0
        %v1341 = vpack.c.bf16 %v1336, %v1336
        %s1342 = scalar_lea.vmem [#allocation10], 4
        %v1343 = vld [vmem:[%s1342] sm:$0xf]
        %v1345 = vsel %vm1116, %v1341, 0
        %v1348 = vsel %vm1181, %v1343, 0
        %1350 = vmatprep.subr.bf16.mxu0 0
        %1351 = vmatpush1.bf16.msra.mxu0 0
        %1352 = vmatprep.subr.bf16.mxu0 0
        %1353 = vmatpush1.bf16.msra.mxu0 0
        %1354 = vmatprep.subr.bf16.mxu0 0
        %1355 = vmatpush1.bf16.msra.mxu0 0
        %1356 = vmatprep.subr.bf16.mxu0 0
        %1357 = vmatpush1.bf16.msra.mxu0 0
        %1358 = vmatprep.subr.bf16.mxu0 0
        %1359 = vmatpush1.bf16.msra.mxu0 0
        %1360 = vmatprep.subr.bf16.mxu0 0
        %1361 = vmatpush1.bf16.msra.mxu0 0
        %1362 = vmatprep.subr.bf16.mxu0 0
        %1363 = vmatpush1.bf16.msra.mxu0 0
        %1364 = vmatprep.subr.bf16.mxu0 0
        %1365 = vmatpush1.bf16.msra.mxu0 %v1348
        %1366 = vmatprep.subr.bf16.mxu0 0
        %1367 = vmatpush2.bf16.msra.mxu0 0
        %1368 = vmatprep.subr.bf16.mxu0 0
        %1369 = vmatpush2.bf16.msra.mxu0 0
        %1370 = vmatprep.subr.bf16.mxu0 0
        %1371 = vmatpush2.bf16.msra.mxu0 0
        %1372 = vmatprep.subr.bf16.mxu0 0
        %1373 = vmatpush2.bf16.msra.mxu0 0
        %1374 = vmatprep.subr.bf16.mxu0 0
        %1375 = vmatpush2.bf16.msra.mxu0 0
        %1376 = vmatprep.subr.bf16.mxu0 0
        %1377 = vmatpush2.bf16.msra.mxu0 0
        %1378 = vmatprep.subr.bf16.mxu0 0
        %1379 = vmatpush2.bf16.msra.mxu0 0
        %1380 = vmatprep.subr.bf16.mxu0 0
        %1381 = vmatpush2.bf16.msra.mxu0 0
        %1382 = vmatprep.mubr.bf16.mxu0 0
        %1383 = vmatmul.mubr.bf16.gmra.mxu0 %v1345
        %v1384 = vpop.f32.mrf.mxu0
        %v1385 = vadd.f32 0.0, %v1384
        %v1386 = vpop.f32.mrf.mxu0
        %v1387 = vpop.f32.mrf.mxu0
        %v1388 = vpop.f32.mrf.mxu0
        %1389 = vdwg.mxu0
        %v1391 = vsel %vm1116, %v1225, 0
        %v1394 = vsel %vm1181, %v1226, 0
        %1396 = vmatprep.subr.bf16.mxu0 0
        %1397 = vmatpush1.bf16.msra.mxu0 0
        %1398 = vmatprep.subr.bf16.mxu0 0
        %1399 = vmatpush1.bf16.msra.mxu0 0
        %1400 = vmatprep.subr.bf16.mxu0 0
        %1401 = vmatpush1.bf16.msra.mxu0 0
        %1402 = vmatprep.subr.bf16.mxu0 0
        %1403 = vmatpush1.bf16.msra.mxu0 0
        %1404 = vmatprep.subr.bf16.mxu0 0
        %1405 = vmatpush1.bf16.msra.mxu0 0
        %1406 = vmatprep.subr.bf16.mxu0 0
        %1407 = vmatpush1.bf16.msra.mxu0 0
        %1408 = vmatprep.subr.bf16.mxu0 0
        %1409 = vmatpush1.bf16.msra.mxu0 0
        %1410 = vmatprep.subr.bf16.mxu0 0
        %1411 = vmatpush1.bf16.msra.mxu0 %v1394
        %1412 = vmatprep.subr.bf16.mxu0 0
        %1413 = vmatpush2.bf16.msra.mxu0 0
        %1414 = vmatprep.subr.bf16.mxu0 0
        %1415 = vmatpush2.bf16.msra.mxu0 0
        %1416 = vmatprep.subr.bf16.mxu0 0
        %1417 = vmatpush2.bf16.msra.mxu0 0
        %1418 = vmatprep.subr.bf16.mxu0 0
        %1419 = vmatpush2.bf16.msra.mxu0 0
        %1420 = vmatprep.subr.bf16.mxu0 0
        %1421 = vmatpush2.bf16.msra.mxu0 0
        %1422 = vmatprep.subr.bf16.mxu0 0
        %1423 = vmatpush2.bf16.msra.mxu0 0
        %1424 = vmatprep.subr.bf16.mxu0 0
        %1425 = vmatpush2.bf16.msra.mxu0 0
        %1426 = vmatprep.subr.bf16.mxu0 0
        %1427 = vmatpush2.bf16.msra.mxu0 0
        %1428 = vmatprep.mubr.bf16.mxu0 0
        %1429 = vmatmul.mubr.bf16.gmra.mxu0 %v1391
        %v1430 = vpop.f32.mrf.mxu0
        %v1431 = vadd.f32 %v1385, %v1430
        %v1432 = vpop.f32.mrf.mxu0
        %v1433 = vpop.f32.mrf.mxu0
        %v1434 = vpop.f32.mrf.mxu0
        %1435 = vdwg.mxu0
        %s1436 = scalar_lea.vmem %s1033, 16
        %v1437 = vld [vmem:[%s1436] sm:$0xff]
        %1438 = vrot.lane.b32.xlu0 %v1111, 112
        %v1439 = vpop.permute.xlu0 %1438
        %1440 = vrot.lane.b32.xlu0 %v1111, 80
        %v1441 = vpop.permute.xlu0 %1440
        %v1443 = vsel %vm1116, %v1439, 0
        %v1446 = vsel %vm1116, %v1441, 0
        %1448 = vmatprep.subr.bf16.mxu0 0
        %1449 = vmatpush1.bf16.xpose.msra.mxu0 0
        %1450 = vmatprep.subr.bf16.mxu0 0
        %1451 = vmatpush1.bf16.xpose.msra.mxu0 0
        %1452 = vmatprep.subr.bf16.mxu0 0
        %1453 = vmatpush1.bf16.xpose.msra.mxu0 0
        %1454 = vmatprep.subr.bf16.mxu0 0
        %1455 = vmatpush1.bf16.xpose.msra.mxu0 0
        %1456 = vmatprep.subr.bf16.mxu0 0
        %1457 = vmatpush1.bf16.xpose.msra.mxu0 0
        %1458 = vmatprep.subr.bf16.mxu0 0
        %1459 = vmatpush1.bf16.xpose.msra.mxu0 0
        %1460 = vmatprep.subr.bf16.mxu0 0
        %1461 = vmatpush1.bf16.xpose.msra.mxu0 0
        %1462 = vmatprep.subr.bf16.mxu0 0
        %1463 = vmatpush1.bf16.xpose.msra.mxu0 %v1446
        %1464 = vmatprep.subr.bf16.mxu0 0
        %1465 = vmatpush2.bf16.xpose.msra.mxu0 0
        %1466 = vmatprep.subr.bf16.mxu0 0
        %1467 = vmatpush2.bf16.xpose.msra.mxu0 0
        %1468 = vmatprep.subr.bf16.mxu0 0
        %1469 = vmatpush2.bf16.xpose.msra.mxu0 0
        %1470 = vmatprep.subr.bf16.mxu0 0
        %1471 = vmatpush2.bf16.xpose.msra.mxu0 0
        %1472 = vmatprep.subr.bf16.mxu0 0
        %1473 = vmatpush2.bf16.xpose.msra.mxu0 0
        %1474 = vmatprep.subr.bf16.mxu0 0
        %1475 = vmatpush2.bf16.xpose.msra.mxu0 0
        %1476 = vmatprep.subr.bf16.mxu0 0
        %1477 = vmatpush2.bf16.xpose.msra.mxu0 0
        %1478 = vmatprep.subr.bf16.mxu0 0
        %1479 = vmatpush2.bf16.xpose.msra.mxu0 0
        %1480 = vmatprep.mubr.bf16.mxu0 0
        %1481 = vmatmul.mubr.bf16.gmra.mxu0 %v1443
        %v1482 = vpop.f32.mrf.mxu0
        %v1483 = vadd.f32 %v1437, %v1482
        %v1484 = vpop.f32.mrf.mxu0
        %v1485 = vpop.f32.mrf.mxu0
        %v1486 = vpop.f32.mrf.mxu0
        %1487 = vdwg.mxu0
        %v1488 = vsel %vm1116, %v1483, -inf
        %1489 = vmax.xlane.f32.xlu0 %v1488
        %v1490 = vpop.xlane.xlu0 %1489
        %v1491 = vsub.f32 %v1483, %v1490
        %v1492 = vmul.f32 %v1491, 1.442695
        %v1493 = vpow.pop %v1492
        %v1494 = vsel %vm1116, %v1493, 0.0
        %1495 = vadd.xlane.f32.xlu0 %v1494
        %v1496 = vpop.xlane.xlu0 %1495
        %v1497 = vrcp.pop %v1496
        %v1498 = vmul.f32 %v1493, %v1497
        %s1499 = scalar_lea.vmem %s1017, 16 [#allocation27]
        %1500 = vst.msk [vmem:[%s1499] sm:$0xff] %vm1116, %v1498
        %v1501 = vpack.c.bf16 %v1498, %v1498
        %1502 = vrot.lane.b32.xlu0 %v1111, 48
        %v1503 = vpop.permute.xlu0 %1502
        %v1505 = vsel %vm1116, %v1501, 0
        %v1508 = vsel %vm1181, %v1503, 0
        %1510 = vmatprep.subr.bf16.mxu0 0
        %1511 = vmatpush1.bf16.msra.mxu0 0
        %1512 = vmatprep.subr.bf16.mxu0 0
        %1513 = vmatpush1.bf16.msra.mxu0 0
        %1514 = vmatprep.subr.bf16.mxu0 0
        %1515 = vmatpush1.bf16.msra.mxu0 0
        %1516 = vmatprep.subr.bf16.mxu0 0
        %1517 = vmatpush1.bf16.msra.mxu0 0
        %1518 = vmatprep.subr.bf16.mxu0 0
        %1519 = vmatpush1.bf16.msra.mxu0 0
        %1520 = vmatprep.subr.bf16.mxu0 0
        %1521 = vmatpush1.bf16.msra.mxu0 0
        %1522 = vmatprep.subr.bf16.mxu0 0
        %1523 = vmatpush1.bf16.msra.mxu0 0
        %1524 = vmatprep.subr.bf16.mxu0 0
        %1525 = vmatpush1.bf16.msra.mxu0 %v1508
        %1526 = vmatprep.subr.bf16.mxu0 0
        %1527 = vmatpush2.bf16.msra.mxu0 0
        %1528 = vmatprep.subr.bf16.mxu0 0
        %1529 = vmatpush2.bf16.msra.mxu0 0
        %1530 = vmatprep.subr.bf16.mxu0 0
        %1531 = vmatpush2.bf16.msra.mxu0 0
        %1532 = vmatprep.subr.bf16.mxu0 0
        %1533 = vmatpush2.bf16.msra.mxu0 0
        %1534 = vmatprep.subr.bf16.mxu0 0
        %1535 = vmatpush2.bf16.msra.mxu0 0
        %1536 = vmatprep.subr.bf16.mxu0 0
        %1537 = vmatpush2.bf16.msra.mxu0 0
        %1538 = vmatprep.subr.bf16.mxu0 0
        %1539 = vmatpush2.bf16.msra.mxu0 0
        %1540 = vmatprep.subr.bf16.mxu0 0
        %1541 = vmatpush2.bf16.msra.mxu0 0
        %1542 = vmatprep.mubr.bf16.mxu0 0
        %1543 = vmatmul.mubr.bf16.gmra.mxu0 %v1505
        %v1544 = vpop.f32.mrf.mxu0
        %v1545 = vadd.f32 0.0, %v1544
        %v1546 = vpop.f32.mrf.mxu0
        %v1547 = vpop.f32.mrf.mxu0
        %v1548 = vpop.f32.mrf.mxu0
        %1549 = vdwg.mxu0
        %v1550 = vpack.c.bf16 %v1545, %v1545
        %s1551 = scalar_lea.vmem [#allocation10], 8
        %v1552 = vld [vmem:[%s1551] sm:$0xf]
        %v1554 = vsel %vm1116, %v1550, 0
        %v1557 = vsel %vm1181, %v1552, 0
        %1559 = vmatprep.subr.bf16.mxu0 0
        %1560 = vmatpush1.bf16.msra.mxu0 0
        %1561 = vmatprep.subr.bf16.mxu0 0
        %1562 = vmatpush1.bf16.msra.mxu0 0
        %1563 = vmatprep.subr.bf16.mxu0 0
        %1564 = vmatpush1.bf16.msra.mxu0 0
        %1565 = vmatprep.subr.bf16.mxu0 0
        %1566 = vmatpush1.bf16.msra.mxu0 0
        %1567 = vmatprep.subr.bf16.mxu0 0
        %1568 = vmatpush1.bf16.msra.mxu0 0
        %1569 = vmatprep.subr.bf16.mxu0 0
        %1570 = vmatpush1.bf16.msra.mxu0 0
        %1571 = vmatprep.subr.bf16.mxu0 0
        %1572 = vmatpush1.bf16.msra.mxu0 0
        %1573 = vmatprep.subr.bf16.mxu0 0
        %1574 = vmatpush1.bf16.msra.mxu0 %v1557
        %1575 = vmatprep.subr.bf16.mxu0 0
        %1576 = vmatpush2.bf16.msra.mxu0 0
        %1577 = vmatprep.subr.bf16.mxu0 0
        %1578 = vmatpush2.bf16.msra.mxu0 0
        %1579 = vmatprep.subr.bf16.mxu0 0
        %1580 = vmatpush2.bf16.msra.mxu0 0
        %1581 = vmatprep.subr.bf16.mxu0 0
        %1582 = vmatpush2.bf16.msra.mxu0 0
        %1583 = vmatprep.subr.bf16.mxu0 0
        %1584 = vmatpush2.bf16.msra.mxu0 0
        %1585 = vmatprep.subr.bf16.mxu0 0
        %1586 = vmatpush2.bf16.msra.mxu0 0
        %1587 = vmatprep.subr.bf16.mxu0 0
        %1588 = vmatpush2.bf16.msra.mxu0 0
        %1589 = vmatprep.subr.bf16.mxu0 0
        %1590 = vmatpush2.bf16.msra.mxu0 0
        %1591 = vmatprep.mubr.bf16.mxu0 0
        %1592 = vmatmul.mubr.bf16.gmra.mxu0 %v1554
        %v1593 = vpop.f32.mrf.mxu0
        %v1594 = vadd.f32 0.0, %v1593
        %v1595 = vpop.f32.mrf.mxu0
        %v1596 = vpop.f32.mrf.mxu0
        %v1597 = vpop.f32.mrf.mxu0
        %1598 = vdwg.mxu0
        %v1599 = vadd.f32 %v1431, %v1594
        %s1600 = scalar_lea.vmem %s1033, 24
        %v1601 = vld [vmem:[%s1600] sm:$0xff]
        %1602 = vrot.lane.b32.xlu0 %v1111, 104
        %v1603 = vpop.permute.xlu0 %1602
        %1604 = vrot.lane.b32.xlu0 %v1111, 72
        %v1605 = vpop.permute.xlu0 %1604
        %v1607 = vsel %vm1116, %v1603, 0
        %v1610 = vsel %vm1116, %v1605, 0
        %1612 = vmatprep.subr.bf16.mxu0 0
        %1613 = vmatpush1.bf16.xpose.msra.mxu0 0
        %1614 = vmatprep.subr.bf16.mxu0 0
        %1615 = vmatpush1.bf16.xpose.msra.mxu0 0
        %1616 = vmatprep.subr.bf16.mxu0 0
        %1617 = vmatpush1.bf16.xpose.msra.mxu0 0
        %1618 = vmatprep.subr.bf16.mxu0 0
        %1619 = vmatpush1.bf16.xpose.msra.mxu0 0
        %1620 = vmatprep.subr.bf16.mxu0 0
        %1621 = vmatpush1.bf16.xpose.msra.mxu0 0
        %1622 = vmatprep.subr.bf16.mxu0 0
        %1623 = vmatpush1.bf16.xpose.msra.mxu0 0
        %1624 = vmatprep.subr.bf16.mxu0 0
        %1625 = vmatpush1.bf16.xpose.msra.mxu0 0
        %1626 = vmatprep.subr.bf16.mxu0 0
        %1627 = vmatpush1.bf16.xpose.msra.mxu0 %v1610
        %1628 = vmatprep.subr.bf16.mxu0 0
        %1629 = vmatpush2.bf16.xpose.msra.mxu0 0
        %1630 = vmatprep.subr.bf16.mxu0 0
        %1631 = vmatpush2.bf16.xpose.msra.mxu0 0
        %1632 = vmatprep.subr.bf16.mxu0 0
        %1633 = vmatpush2.bf16.xpose.msra.mxu0 0
        %1634 = vmatprep.subr.bf16.mxu0 0
        %1635 = vmatpush2.bf16.xpose.msra.mxu0 0
        %1636 = vmatprep.subr.bf16.mxu0 0
        %1637 = vmatpush2.bf16.xpose.msra.mxu0 0
        %1638 = vmatprep.subr.bf16.mxu0 0
        %1639 = vmatpush2.bf16.xpose.msra.mxu0 0
        %1640 = vmatprep.subr.bf16.mxu0 0
        %1641 = vmatpush2.bf16.xpose.msra.mxu0 0
        %1642 = vmatprep.subr.bf16.mxu0 0
        %1643 = vmatpush2.bf16.xpose.msra.mxu0 0
        %1644 = vmatprep.mubr.bf16.mxu0 0
        %1645 = vmatmul.mubr.bf16.gmra.mxu0 %v1607
        %v1646 = vpop.f32.mrf.mxu0
        %v1647 = vadd.f32 %v1601, %v1646
        %v1648 = vpop.f32.mrf.mxu0
        %v1649 = vpop.f32.mrf.mxu0
        %v1650 = vpop.f32.mrf.mxu0
        %1651 = vdwg.mxu0
        %v1652 = vsel %vm1116, %v1647, -inf
        %1653 = vmax.xlane.f32.xlu0 %v1652
        %v1654 = vpop.xlane.xlu0 %1653
        %v1655 = vsub.f32 %v1647, %v1654
        %v1656 = vmul.f32 %v1655, 1.442695
        %v1657 = vpow.pop %v1656
        %v1658 = vsel %vm1116, %v1657, 0.0
        %1659 = vadd.xlane.f32.xlu0 %v1658
        %v1660 = vpop.xlane.xlu0 %1659
        %v1661 = vrcp.pop %v1660
        %v1662 = vmul.f32 %v1657, %v1661
        %s1663 = scalar_lea.vmem %s1017, 24 [#allocation27]
        %1664 = vst.msk [vmem:[%s1663] sm:$0xff] %vm1116, %v1662
        %v1665 = vpack.c.bf16 %v1662, %v1662
        %1666 = vrot.lane.b32.xlu0 %v1111, 40
        %v1667 = vpop.permute.xlu0 %1666
        %v1669 = vsel %vm1116, %v1665, 0
        %v1672 = vsel %vm1181, %v1667, 0
        %1674 = vmatprep.subr.bf16.mxu0 0
        %1675 = vmatpush1.bf16.msra.mxu0 0
        %1676 = vmatprep.subr.bf16.mxu0 0
        %1677 = vmatpush1.bf16.msra.mxu0 0
        %1678 = vmatprep.subr.bf16.mxu0 0
        %1679 = vmatpush1.bf16.msra.mxu0 0
        %1680 = vmatprep.subr.bf16.mxu0 0
        %1681 = vmatpush1.bf16.msra.mxu0 0
        %1682 = vmatprep.subr.bf16.mxu0 0
        %1683 = vmatpush1.bf16.msra.mxu0 0
        %1684 = vmatprep.subr.bf16.mxu0 0
        %1685 = vmatpush1.bf16.msra.mxu0 0
        %1686 = vmatprep.subr.bf16.mxu0 0
        %1687 = vmatpush1.bf16.msra.mxu0 0
        %1688 = vmatprep.subr.bf16.mxu0 0
        %1689 = vmatpush1.bf16.msra.mxu0 %v1672
        %1690 = vmatprep.subr.bf16.mxu0 0
        %1691 = vmatpush2.bf16.msra.mxu0 0
        %1692 = vmatprep.subr.bf16.mxu0 0
        %1693 = vmatpush2.bf16.msra.mxu0 0
        %1694 = vmatprep.subr.bf16.mxu0 0
        %1695 = vmatpush2.bf16.msra.mxu0 0
        %1696 = vmatprep.subr.bf16.mxu0 0
        %1697 = vmatpush2.bf16.msra.mxu0 0
        %1698 = vmatprep.subr.bf16.mxu0 0
        %1699 = vmatpush2.bf16.msra.mxu0 0
        %1700 = vmatprep.subr.bf16.mxu0 0
        %1701 = vmatpush2.bf16.msra.mxu0 0
        %1702 = vmatprep.subr.bf16.mxu0 0
        %1703 = vmatpush2.bf16.msra.mxu0 0
        %1704 = vmatprep.subr.bf16.mxu0 0
        %1705 = vmatpush2.bf16.msra.mxu0 0
        %1706 = vmatprep.mubr.bf16.mxu0 0
        %1707 = vmatmul.mubr.bf16.gmra.mxu0 %v1669
        %v1708 = vpop.f32.mrf.mxu0
        %v1709 = vadd.f32 0.0, %v1708
        %v1710 = vpop.f32.mrf.mxu0
        %v1711 = vpop.f32.mrf.mxu0
        %v1712 = vpop.f32.mrf.mxu0
        %1713 = vdwg.mxu0
        %v1714 = vpack.c.bf16 %v1709, %v1709
        %s1715 = scalar_lea.vmem [#allocation10], 12
        %v1716 = vld [vmem:[%s1715] sm:$0xf]
        %v1718 = vsel %vm1116, %v1714, 0
        %v1721 = vsel %vm1181, %v1716, 0
        %1723 = vmatprep.subr.bf16.mxu0 0
        %1724 = vmatpush1.bf16.msra.mxu0 0
        %1725 = vmatprep.subr.bf16.mxu0 0
        %1726 = vmatpush1.bf16.msra.mxu0 0
        %1727 = vmatprep.subr.bf16.mxu0 0
        %1728 = vmatpush1.bf16.msra.mxu0 0
        %1729 = vmatprep.subr.bf16.mxu0 0
        %1730 = vmatpush1.bf16.msra.mxu0 0
        %1731 = vmatprep.subr.bf16.mxu0 0
        %1732 = vmatpush1.bf16.msra.mxu0 0
        %1733 = vmatprep.subr.bf16.mxu0 0
        %1734 = vmatpush1.bf16.msra.mxu0 0
        %1735 = vmatprep.subr.bf16.mxu0 0
        %1736 = vmatpush1.bf16.msra.mxu0 0
        %1737 = vmatprep.subr.bf16.mxu0 0
        %1738 = vmatpush1.bf16.msra.mxu0 %v1721
        %1739 = vmatprep.subr.bf16.mxu0 0
        %1740 = vmatpush2.bf16.msra.mxu0 0
        %1741 = vmatprep.subr.bf16.mxu0 0
        %1742 = vmatpush2.bf16.msra.mxu0 0
        %1743 = vmatprep.subr.bf16.mxu0 0
        %1744 = vmatpush2.bf16.msra.mxu0 0
        %1745 = vmatprep.subr.bf16.mxu0 0
        %1746 = vmatpush2.bf16.msra.mxu0 0
        %1747 = vmatprep.subr.bf16.mxu0 0
        %1748 = vmatpush2.bf16.msra.mxu0 0
        %1749 = vmatprep.subr.bf16.mxu0 0
        %1750 = vmatpush2.bf16.msra.mxu0 0
        %1751 = vmatprep.subr.bf16.mxu0 0
        %1752 = vmatpush2.bf16.msra.mxu0 0
        %1753 = vmatprep.subr.bf16.mxu0 0
        %1754 = vmatpush2.bf16.msra.mxu0 0
        %1755 = vmatprep.mubr.bf16.mxu0 0
        %1756 = vmatmul.mubr.bf16.gmra.mxu0 %v1718
        %v1757 = vpop.f32.mrf.mxu0
        %v1758 = vadd.f32 0.0, %v1757
        %v1759 = vpop.f32.mrf.mxu0
        %v1760 = vpop.f32.mrf.mxu0
        %v1761 = vpop.f32.mrf.mxu0
        %1762 = vdwg.mxu0
        %v1763 = vadd.f32 %v1599, %v1758
        %v1764 = vld [vmem:[#allocation11] sm:$0x1]
        %v1766 = vlaneseq
        %v1767 = vshrl.u32 %v1766, 7
        %v1768 = vsub.s32 0, %v1767
        %v1769 = vrot.slane %v1764, %v1768
        %v1771 = vadd.f32 %v1763, %v1769
        %v1772 = vadd.f32 %v1042, %v1771
        %v1773 = vsel %vm1067, %v1772, 0.0
        %1774 = vadd.xlane.f32.xlu0 %v1773
        %v1775 = vpop.xlane.xlu0 %1774
        %v1776 = vrcp.pop 32.0
        %v1777 = vmul.f32 %v1775, %v1776
        %v1778 = vsub.f32 %v1772, %v1777
        %v1779 = vmul.f32 %v1778, %v1778
        %v1780 = vsel %vm1067, %v1779, 0.0
        %1781 = vadd.xlane.f32.xlu0 %v1780
        %v1782 = vpop.xlane.xlu0 %1781
        %v1783 = vmul.f32 %v1782, %v1776
        %v1784 = vadd.f32 %v1783, 1e-05
        %v1785 = vrsqrt.pop %v1784
        %v1786 = vmul.f32 %v1778, %v1785
        %v1787 = vld [vmem:[#allocation13] sm:$0x1]
        %v1789 = vlaneseq
        %v1790 = vshrl.u32 %v1789, 7
        %v1791 = vsub.s32 0, %v1790
        %v1792 = vrot.slane %v1787, %v1791
        %v1794 = vmul.f32 %v1786, %v1792
        %v1795 = vld [vmem:[#allocation14] sm:$0x1]
        %v1797 = vlaneseq
        %v1798 = vshrl.u32 %v1797, 7
        %v1799 = vsub.s32 0, %v1798
        %v1800 = vrot.slane %v1795, %v1799
        %v1802 = vadd.f32 %v1794, %v1800
        %v1803 = vpack.c.bf16 %v1802, %v1802
        %v1804 = vld [vmem:[%s10] sm:$0xf]
        %v1805 = vld [vmem:[%s10 + $0x4] sm:$0xf]
        %v1806 = vld [vmem:[%s10 + $0x8] sm:$0xf]
        %v1807 = vld [vmem:[%s10 + $0xc] sm:$0xf]
        %v1808 = vld [vmem:[#allocation16] sm:$0x1]
        %v1810 = vlaneseq
        %v1811 = vshrl.u32 %v1810, 7
        %v1812 = vsub.s32 0, %v1811
        %v1813 = vrot.slane %v1808, %v1812
        %v1819 = vunpack.c.l.b16 %v1804
        %v1820 = vunpack.c.l.b16 %v1805
        %v1821 = vunpack.c.l.b16 %v1806
        %v1822 = vunpack.c.l.b16 %v1807
        %v1823 = vpack.c.b16 %v1820, %v1819
        %v1824 = vpack.c.b16 %v1822, %v1821
        %v1828 = vsel %vm1067, %v1803, 0
        %1830 = vmatprep.subr.bf16.mxu0 0
        %1831 = vmatpush1.bf16.msra.mxu0 0
        %1832 = vmatprep.subr.bf16.mxu0 0
        %1833 = vmatpush1.bf16.msra.mxu0 0
        %1834 = vmatprep.subr.bf16.mxu0 0
        %1835 = vmatpush1.bf16.msra.mxu0 0
        %1836 = vmatprep.subr.bf16.mxu0 0
        %1837 = vmatpush1.bf16.msra.mxu0 0
        %1838 = vmatprep.subr.bf16.mxu0 0
        %1839 = vmatpush1.bf16.msra.mxu0 0
        %1840 = vmatprep.subr.bf16.mxu0 0
        %1841 = vmatpush1.bf16.msra.mxu0 0
        %1842 = vmatprep.subr.bf16.mxu0 0
        %1843 = vmatpush1.bf16.msra.mxu0 %v1824
        %1844 = vmatprep.subr.bf16.mxu0 0
        %1845 = vmatpush1.bf16.msra.mxu0 %v1823
        %1846 = vmatprep.subr.bf16.mxu0 0
        %1847 = vmatpush2.bf16.msra.mxu0 0
        %1848 = vmatprep.subr.bf16.mxu0 0
        %1849 = vmatpush2.bf16.msra.mxu0 0
        %1850 = vmatprep.subr.bf16.mxu0 0
        %1851 = vmatpush2.bf16.msra.mxu0 0
        %1852 = vmatprep.subr.bf16.mxu0 0
        %1853 = vmatpush2.bf16.msra.mxu0 0
        %1854 = vmatprep.subr.bf16.mxu0 0
        %1855 = vmatpush2.bf16.msra.mxu0 0
        %1856 = vmatprep.subr.bf16.mxu0 0
        %1857 = vmatpush2.bf16.msra.mxu0 0
        %1858 = vmatprep.subr.bf16.mxu0 0
        %1859 = vmatpush2.bf16.msra.mxu0 0
        %1860 = vmatprep.subr.bf16.mxu0 0
        %1861 = vmatpush2.bf16.msra.mxu0 0
        %1862 = vmatprep.mubr.bf16.mxu0 0
        %1863 = vmatmul.mubr.bf16.gmra.mxu0 %v1828
        %v1864 = vpop.f32.mrf.mxu0
        %v1865 = vadd.f32 %v1813, %v1864
        %v1866 = vpop.f32.mrf.mxu0
        %v1867 = vpop.f32.mrf.mxu0
        %v1868 = vpop.f32.mrf.mxu0
        %1869 = vdwg.mxu0
        %v1870 = vld [vmem:[%s884] sm:$0xf]
        %v1871 = vpack.c.bf16 %v1865, %v1865
        %v1872 = vld [vmem:[%s875] sm:$0xff]
        %v1874 = vsel %vm1116, %v1871, 0
        %v1877 = vsel %vm1116, %v1870, 0
        %1879 = vmatprep.subr.bf16.mxu0 0
        %1880 = vmatpush1.bf16.xpose.msra.mxu0 0
        %1881 = vmatprep.subr.bf16.mxu0 0
        %1882 = vmatpush1.bf16.xpose.msra.mxu0 0
        %1883 = vmatprep.subr.bf16.mxu0 0
        %1884 = vmatpush1.bf16.xpose.msra.mxu0 0
        %1885 = vmatprep.subr.bf16.mxu0 0
        %1886 = vmatpush1.bf16.xpose.msra.mxu0 0
        %1887 = vmatprep.subr.bf16.mxu0 0
        %1888 = vmatpush1.bf16.xpose.msra.mxu0 0
        %1889 = vmatprep.subr.bf16.mxu0 0
        %1890 = vmatpush1.bf16.xpose.msra.mxu0 0
        %1891 = vmatprep.subr.bf16.mxu0 0
        %1892 = vmatpush1.bf16.xpose.msra.mxu0 0
        %1893 = vmatprep.subr.bf16.mxu0 0
        %1894 = vmatpush1.bf16.xpose.msra.mxu0 %v1877
        %1895 = vmatprep.subr.bf16.mxu0 0
        %1896 = vmatpush2.bf16.xpose.msra.mxu0 0
        %1897 = vmatprep.subr.bf16.mxu0 0
        %1898 = vmatpush2.bf16.xpose.msra.mxu0 0
        %1899 = vmatprep.subr.bf16.mxu0 0
        %1900 = vmatpush2.bf16.xpose.msra.mxu0 0
        %1901 = vmatprep.subr.bf16.mxu0 0
        %1902 = vmatpush2.bf16.xpose.msra.mxu0 0
        %1903 = vmatprep.subr.bf16.mxu0 0
        %1904 = vmatpush2.bf16.xpose.msra.mxu0 0
        %1905 = vmatprep.subr.bf16.mxu0 0
        %1906 = vmatpush2.bf16.xpose.msra.mxu0 0
        %1907 = vmatprep.subr.bf16.mxu0 0
        %1908 = vmatpush2.bf16.xpose.msra.mxu0 0
        %1909 = vmatprep.subr.bf16.mxu0 0
        %1910 = vmatpush2.bf16.xpose.msra.mxu0 0
        %1911 = vmatprep.mubr.bf16.mxu0 0
        %1912 = vmatmul.mubr.bf16.gmra.mxu0 %v1874
        %v1913 = vpop.f32.mrf.mxu0
        %v1914 = vadd.f32 %v1872, %v1913
        %v1915 = vpop.f32.mrf.mxu0
        %v1916 = vpop.f32.mrf.mxu0
        %v1917 = vpop.f32.mrf.mxu0
        %1918 = vdwg.mxu0
        %v1919 = vsel %vm1116, %v1914, -inf
        %1920 = vmax.xlane.f32.xlu0 %v1919
        %v1921 = vpop.xlane.xlu0 %1920
        %v1922 = vsub.f32 %v1914, %v1921
        %v1923 = vmul.f32 %v1922, 1.442695
        %v1924 = vpow.pop %v1923
        %v1925 = vsel %vm1116, %v1924, 0.0
        %1926 = vadd.xlane.f32.xlu0 %v1925
        %v1927 = vpop.xlane.xlu0 %1926
        %v1928 = vrcp.pop %v1927
        %v1929 = vmul.f32 %v1924, %v1928
        %1930 = vst.msk [vmem:[%s1024] sm:$0xff] %vm1116, %v1929
        %v1931 = vpack.c.bf16 %v1929, %v1929
        %v1933 = vunpack.c.l.b16 %v1870
        %v1934 = vpack.c.b16 %v1933, %v1933
        %1935 = vrot.lane.b32.xlu0 %v1934, 96
        %v1936 = vpop.permute.xlu0 %1935
        %v1938 = vsel %vm1116, %v1931, 0
        %v1941 = vsel %vm1181, %v1936, 0
        %1943 = vmatprep.subr.bf16.mxu0 0
        %1944 = vmatpush1.bf16.msra.mxu0 0
        %1945 = vmatprep.subr.bf16.mxu0 0
        %1946 = vmatpush1.bf16.msra.mxu0 0
        %1947 = vmatprep.subr.bf16.mxu0 0
        %1948 = vmatpush1.bf16.msra.mxu0 0
        %1949 = vmatprep.subr.bf16.mxu0 0
        %1950 = vmatpush1.bf16.msra.mxu0 0
        %1951 = vmatprep.subr.bf16.mxu0 0
        %1952 = vmatpush1.bf16.msra.mxu0 0
        %1953 = vmatprep.subr.bf16.mxu0 0
        %1954 = vmatpush1.bf16.msra.mxu0 0
        %1955 = vmatprep.subr.bf16.mxu0 0
        %1956 = vmatpush1.bf16.msra.mxu0 0
        %1957 = vmatprep.subr.bf16.mxu0 0
        %1958 = vmatpush1.bf16.msra.mxu0 %v1941
        %1959 = vmatprep.subr.bf16.mxu0 0
        %1960 = vmatpush2.bf16.msra.mxu0 0
        %1961 = vmatprep.subr.bf16.mxu0 0
        %1962 = vmatpush2.bf16.msra.mxu0 0
        %1963 = vmatprep.subr.bf16.mxu0 0
        %1964 = vmatpush2.bf16.msra.mxu0 0
        %1965 = vmatprep.subr.bf16.mxu0 0
        %1966 = vmatpush2.bf16.msra.mxu0 0
        %1967 = vmatprep.subr.bf16.mxu0 0
        %1968 = vmatpush2.bf16.msra.mxu0 0
        %1969 = vmatprep.subr.bf16.mxu0 0
        %1970 = vmatpush2.bf16.msra.mxu0 0
        %1971 = vmatprep.subr.bf16.mxu0 0
        %1972 = vmatpush2.bf16.msra.mxu0 0
        %1973 = vmatprep.subr.bf16.mxu0 0
        %1974 = vmatpush2.bf16.msra.mxu0 0
        %1975 = vmatprep.mubr.bf16.mxu0 0
        %1976 = vmatmul.mubr.bf16.gmra.mxu0 %v1938
        %v1977 = vpop.f32.mrf.mxu0
        %v1978 = vadd.f32 0.0, %v1977
        %v1979 = vpop.f32.mrf.mxu0
        %v1980 = vpop.f32.mrf.mxu0
        %v1981 = vpop.f32.mrf.mxu0
        %1982 = vdwg.mxu0
        %v1983 = vpack.c.bf16 %v1978, %v1978
        %v1984 = vld [vmem:[#allocation17] sm:$0xf]
        %s1985 = scalar_lea.vmem %s875, 8 [#allocation2]
        %v1986 = vld [vmem:[%s1985] sm:$0xff]
        %1988 = vrot.lane.b32.xlu0 %v1871, 120
        %v1989 = vpop.permute.xlu0 %1988
        %1990 = vrot.lane.b32.xlu0 %v1934, 120
        %v1991 = vpop.permute.xlu0 %1990
        %v1993 = vsel %vm1116, %v1989, 0
        %v1996 = vsel %vm1116, %v1991, 0
        %1998 = vmatprep.subr.bf16.mxu0 0
        %1999 = vmatpush1.bf16.xpose.msra.mxu0 0
        %2000 = vmatprep.subr.bf16.mxu0 0
        %2001 = vmatpush1.bf16.xpose.msra.mxu0 0
        %2002 = vmatprep.subr.bf16.mxu0 0
        %2003 = vmatpush1.bf16.xpose.msra.mxu0 0
        %2004 = vmatprep.subr.bf16.mxu0 0
        %2005 = vmatpush1.bf16.xpose.msra.mxu0 0
        %2006 = vmatprep.subr.bf16.mxu0 0
        %2007 = vmatpush1.bf16.xpose.msra.mxu0 0
        %2008 = vmatprep.subr.bf16.mxu0 0
        %2009 = vmatpush1.bf16.xpose.msra.mxu0 0
        %2010 = vmatprep.subr.bf16.mxu0 0
        %2011 = vmatpush1.bf16.xpose.msra.mxu0 0
        %2012 = vmatprep.subr.bf16.mxu0 0
        %2013 = vmatpush1.bf16.xpose.msra.mxu0 %v1996
        %2014 = vmatprep.subr.bf16.mxu0 0
        %2015 = vmatpush2.bf16.xpose.msra.mxu0 0
        %2016 = vmatprep.subr.bf16.mxu0 0
        %2017 = vmatpush2.bf16.xpose.msra.mxu0 0
        %2018 = vmatprep.subr.bf16.mxu0 0
        %2019 = vmatpush2.bf16.xpose.msra.mxu0 0
        %2020 = vmatprep.subr.bf16.mxu0 0
        %2021 = vmatpush2.bf16.xpose.msra.mxu0 0
        %2022 = vmatprep.subr.bf16.mxu0 0
        %2023 = vmatpush2.bf16.xpose.msra.mxu0 0
        %2024 = vmatprep.subr.bf16.mxu0 0
        %2025 = vmatpush2.bf16.xpose.msra.mxu0 0
        %2026 = vmatprep.subr.bf16.mxu0 0
        %2027 = vmatpush2.bf16.xpose.msra.mxu0 0
        %2028 = vmatprep.subr.bf16.mxu0 0
        %2029 = vmatpush2.bf16.xpose.msra.mxu0 0
        %2030 = vmatprep.mubr.bf16.mxu0 0
        %2031 = vmatmul.mubr.bf16.gmra.mxu0 %v1993
        %v2032 = vpop.f32.mrf.mxu0
        %v2033 = vadd.f32 %v1986, %v2032
        %v2034 = vpop.f32.mrf.mxu0
        %v2035 = vpop.f32.mrf.mxu0
        %v2036 = vpop.f32.mrf.mxu0
        %2037 = vdwg.mxu0
        %v2038 = vsel %vm1116, %v2033, -inf
        %2039 = vmax.xlane.f32.xlu0 %v2038
        %v2040 = vpop.xlane.xlu0 %2039
        %v2041 = vsub.f32 %v2033, %v2040
        %v2042 = vmul.f32 %v2041, 1.442695
        %v2043 = vpow.pop %v2042
        %v2044 = vsel %vm1116, %v2043, 0.0
        %2045 = vadd.xlane.f32.xlu0 %v2044
        %v2046 = vpop.xlane.xlu0 %2045
        %v2047 = vrcp.pop %v2046
        %v2048 = vmul.f32 %v2043, %v2047
        %s2049 = scalar_lea.vmem %s1024, 8 [#allocation29]
        %2050 = vst.msk [vmem:[%s2049] sm:$0xff] %vm1116, %v2048
        %v2051 = vpack.c.bf16 %v2048, %v2048
        %2052 = vrot.lane.b32.xlu0 %v1934, 88
        %v2053 = vpop.permute.xlu0 %2052
        %v2055 = vsel %vm1116, %v2051, 0
        %v2058 = vsel %vm1181, %v2053, 0
        %2060 = vmatprep.subr.bf16.mxu0 0
        %2061 = vmatpush1.bf16.msra.mxu0 0
        %2062 = vmatprep.subr.bf16.mxu0 0
        %2063 = vmatpush1.bf16.msra.mxu0 0
        %2064 = vmatprep.subr.bf16.mxu0 0
        %2065 = vmatpush1.bf16.msra.mxu0 0
        %2066 = vmatprep.subr.bf16.mxu0 0
        %2067 = vmatpush1.bf16.msra.mxu0 0
        %2068 = vmatprep.subr.bf16.mxu0 0
        %2069 = vmatpush1.bf16.msra.mxu0 0
        %2070 = vmatprep.subr.bf16.mxu0 0
        %2071 = vmatpush1.bf16.msra.mxu0 0
        %2072 = vmatprep.subr.bf16.mxu0 0
        %2073 = vmatpush1.bf16.msra.mxu0 0
        %2074 = vmatprep.subr.bf16.mxu0 0
        %2075 = vmatpush1.bf16.msra.mxu0 %v2058
        %2076 = vmatprep.subr.bf16.mxu0 0
        %2077 = vmatpush2.bf16.msra.mxu0 0
        %2078 = vmatprep.subr.bf16.mxu0 0
        %2079 = vmatpush2.bf16.msra.mxu0 0
        %2080 = vmatprep.subr.bf16.mxu0 0
        %2081 = vmatpush2.bf16.msra.mxu0 0
        %2082 = vmatprep.subr.bf16.mxu0 0
        %2083 = vmatpush2.bf16.msra.mxu0 0
        %2084 = vmatprep.subr.bf16.mxu0 0
        %2085 = vmatpush2.bf16.msra.mxu0 0
        %2086 = vmatprep.subr.bf16.mxu0 0
        %2087 = vmatpush2.bf16.msra.mxu0 0
        %2088 = vmatprep.subr.bf16.mxu0 0
        %2089 = vmatpush2.bf16.msra.mxu0 0
        %2090 = vmatprep.subr.bf16.mxu0 0
        %2091 = vmatpush2.bf16.msra.mxu0 0
        %2092 = vmatprep.mubr.bf16.mxu0 0
        %2093 = vmatmul.mubr.bf16.gmra.mxu0 %v2055
        %v2094 = vpop.f32.mrf.mxu0
        %v2095 = vadd.f32 0.0, %v2094
        %v2096 = vpop.f32.mrf.mxu0
        %v2097 = vpop.f32.mrf.mxu0
        %v2098 = vpop.f32.mrf.mxu0
        %2099 = vdwg.mxu0
        %v2100 = vpack.c.bf16 %v2095, %v2095
        %s2101 = scalar_lea.vmem [#allocation17], 4
        %v2102 = vld [vmem:[%s2101] sm:$0xf]
        %v2104 = vsel %vm1116, %v2100, 0
        %v2107 = vsel %vm1181, %v2102, 0
        %2109 = vmatprep.subr.bf16.mxu0 0
        %2110 = vmatpush1.bf16.msra.mxu0 0
        %2111 = vmatprep.subr.bf16.mxu0 0
        %2112 = vmatpush1.bf16.msra.mxu0 0
        %2113 = vmatprep.subr.bf16.mxu0 0
        %2114 = vmatpush1.bf16.msra.mxu0 0
        %2115 = vmatprep.subr.bf16.mxu0 0
        %2116 = vmatpush1.bf16.msra.mxu0 0
        %2117 = vmatprep.subr.bf16.mxu0 0
        %2118 = vmatpush1.bf16.msra.mxu0 0
        %2119 = vmatprep.subr.bf16.mxu0 0
        %2120 = vmatpush1.bf16.msra.mxu0 0
        %2121 = vmatprep.subr.bf16.mxu0 0
        %2122 = vmatpush1.bf16.msra.mxu0 0
        %2123 = vmatprep.subr.bf16.mxu0 0
        %2124 = vmatpush1.bf16.msra.mxu0 %v2107
        %2125 = vmatprep.subr.bf16.mxu0 0
        %2126 = vmatpush2.bf16.msra.mxu0 0
        %2127 = vmatprep.subr.bf16.mxu0 0
        %2128 = vmatpush2.bf16.msra.mxu0 0
        %2129 = vmatprep.subr.bf16.mxu0 0
        %2130 = vmatpush2.bf16.msra.mxu0 0
        %2131 = vmatprep.subr.bf16.mxu0 0
        %2132 = vmatpush2.bf16.msra.mxu0 0
        %2133 = vmatprep.subr.bf16.mxu0 0
        %2134 = vmatpush2.bf16.msra.mxu0 0
        %2135 = vmatprep.subr.bf16.mxu0 0
        %2136 = vmatpush2.bf16.msra.mxu0 0
        %2137 = vmatprep.subr.bf16.mxu0 0
        %2138 = vmatpush2.bf16.msra.mxu0 0
        %2139 = vmatprep.subr.bf16.mxu0 0
        %2140 = vmatpush2.bf16.msra.mxu0 0
        %2141 = vmatprep.mubr.bf16.mxu0 0
        %2142 = vmatmul.mubr.bf16.gmra.mxu0 %v2104
        %v2143 = vpop.f32.mrf.mxu0
        %v2144 = vadd.f32 0.0, %v2143
        %v2145 = vpop.f32.mrf.mxu0
        %v2146 = vpop.f32.mrf.mxu0
        %v2147 = vpop.f32.mrf.mxu0
        %2148 = vdwg.mxu0
        %v2150 = vsel %vm1116, %v1983, 0
        %v2153 = vsel %vm1181, %v1984, 0
        %2155 = vmatprep.subr.bf16.mxu0 0
        %2156 = vmatpush1.bf16.msra.mxu0 0
        %2157 = vmatprep.subr.bf16.mxu0 0
        %2158 = vmatpush1.bf16.msra.mxu0 0
        %2159 = vmatprep.subr.bf16.mxu0 0
        %2160 = vmatpush1.bf16.msra.mxu0 0
        %2161 = vmatprep.subr.bf16.mxu0 0
        %2162 = vmatpush1.bf16.msra.mxu0 0
        %2163 = vmatprep.subr.bf16.mxu0 0
        %2164 = vmatpush1.bf16.msra.mxu0 0
        %2165 = vmatprep.subr.bf16.mxu0 0
        %2166 = vmatpush1.bf16.msra.mxu0 0
        %2167 = vmatprep.subr.bf16.mxu0 0
        %2168 = vmatpush1.bf16.msra.mxu0 0
        %2169 = vmatprep.subr.bf16.mxu0 0
        %2170 = vmatpush1.bf16.msra.mxu0 %v2153
        %2171 = vmatprep.subr.bf16.mxu0 0
        %2172 = vmatpush2.bf16.msra.mxu0 0
        %2173 = vmatprep.subr.bf16.mxu0 0
        %2174 = vmatpush2.bf16.msra.mxu0 0
        %2175 = vmatprep.subr.bf16.mxu0 0
        %2176 = vmatpush2.bf16.msra.mxu0 0
        %2177 = vmatprep.subr.bf16.mxu0 0
        %2178 = vmatpush2.bf16.msra.mxu0 0
        %2179 = vmatprep.subr.bf16.mxu0 0
        %2180 = vmatpush2.bf16.msra.mxu0 0
        %2181 = vmatprep.subr.bf16.mxu0 0
        %2182 = vmatpush2.bf16.msra.mxu0 0
        %2183 = vmatprep.subr.bf16.mxu0 0
        %2184 = vmatpush2.bf16.msra.mxu0 0
        %2185 = vmatprep.subr.bf16.mxu0 0
        %2186 = vmatpush2.bf16.msra.mxu0 0
        %2187 = vmatprep.mubr.bf16.mxu0 0
        %2188 = vmatmul.mubr.bf16.gmra.mxu0 %v2150
        %v2189 = vpop.f32.mrf.mxu0
        %v2190 = vadd.f32 %v2144, %v2189
        %v2191 = vpop.f32.mrf.mxu0
        %v2192 = vpop.f32.mrf.mxu0
        %v2193 = vpop.f32.mrf.mxu0
        %2194 = vdwg.mxu0
        %s2195 = scalar_lea.vmem %s875, 16 [#allocation2]
        %v2196 = vld [vmem:[%s2195] sm:$0xff]
        %2197 = vrot.lane.b32.xlu0 %v1871, 112
        %v2198 = vpop.permute.xlu0 %2197
        %2199 = vrot.lane.b32.xlu0 %v1934, 112
        %v2200 = vpop.permute.xlu0 %2199
        %v2202 = vsel %vm1116, %v2198, 0
        %v2205 = vsel %vm1116, %v2200, 0
        %2207 = vmatprep.subr.bf16.mxu0 0
        %2208 = vmatpush1.bf16.xpose.msra.mxu0 0
        %2209 = vmatprep.subr.bf16.mxu0 0
        %2210 = vmatpush1.bf16.xpose.msra.mxu0 0
        %2211 = vmatprep.subr.bf16.mxu0 0
        %2212 = vmatpush1.bf16.xpose.msra.mxu0 0
        %2213 = vmatprep.subr.bf16.mxu0 0
        %2214 = vmatpush1.bf16.xpose.msra.mxu0 0
        %2215 = vmatprep.subr.bf16.mxu0 0
        %2216 = vmatpush1.bf16.xpose.msra.mxu0 0
        %2217 = vmatprep.subr.bf16.mxu0 0
        %2218 = vmatpush1.bf16.xpose.msra.mxu0 0
        %2219 = vmatprep.subr.bf16.mxu0 0
        %2220 = vmatpush1.bf16.xpose.msra.mxu0 0
        %2221 = vmatprep.subr.bf16.mxu0 0
        %2222 = vmatpush1.bf16.xpose.msra.mxu0 %v2205
        %2223 = vmatprep.subr.bf16.mxu0 0
        %2224 = vmatpush2.bf16.xpose.msra.mxu0 0
        %2225 = vmatprep.subr.bf16.mxu0 0
        %2226 = vmatpush2.bf16.xpose.msra.mxu0 0
        %2227 = vmatprep.subr.bf16.mxu0 0
        %2228 = vmatpush2.bf16.xpose.msra.mxu0 0
        %2229 = vmatprep.subr.bf16.mxu0 0
        %2230 = vmatpush2.bf16.xpose.msra.mxu0 0
        %2231 = vmatprep.subr.bf16.mxu0 0
        %2232 = vmatpush2.bf16.xpose.msra.mxu0 0
        %2233 = vmatprep.subr.bf16.mxu0 0
        %2234 = vmatpush2.bf16.xpose.msra.mxu0 0
        %2235 = vmatprep.subr.bf16.mxu0 0
        %2236 = vmatpush2.bf16.xpose.msra.mxu0 0
        %2237 = vmatprep.subr.bf16.mxu0 0
        %2238 = vmatpush2.bf16.xpose.msra.mxu0 0
        %2239 = vmatprep.mubr.bf16.mxu0 0
        %2240 = vmatmul.mubr.bf16.gmra.mxu0 %v2202
        %v2241 = vpop.f32.mrf.mxu0
        %v2242 = vadd.f32 %v2196, %v2241
        %v2243 = vpop.f32.mrf.mxu0
        %v2244 = vpop.f32.mrf.mxu0
        %v2245 = vpop.f32.mrf.mxu0
        %2246 = vdwg.mxu0
        %v2247 = vsel %vm1116, %v2242, -inf
        %2248 = vmax.xlane.f32.xlu0 %v2247
        %v2249 = vpop.xlane.xlu0 %2248
        %v2250 = vsub.f32 %v2242, %v2249
        %v2251 = vmul.f32 %v2250, 1.442695
        %v2252 = vpow.pop %v2251
        %v2253 = vsel %vm1116, %v2252, 0.0
        %2254 = vadd.xlane.f32.xlu0 %v2253
        %v2255 = vpop.xlane.xlu0 %2254
        %v2256 = vrcp.pop %v2255
        %v2257 = vmul.f32 %v2252, %v2256
        %s2258 = scalar_lea.vmem %s1024, 16 [#allocation29]
        %2259 = vst.msk [vmem:[%s2258] sm:$0xff] %vm1116, %v2257
        %v2260 = vpack.c.bf16 %v2257, %v2257
        %2261 = vrot.lane.b32.xlu0 %v1934, 80
        %v2262 = vpop.permute.xlu0 %2261
        %v2264 = vsel %vm1116, %v2260, 0
        %v2267 = vsel %vm1181, %v2262, 0
        %2269 = vmatprep.subr.bf16.mxu0 0
        %2270 = vmatpush1.bf16.msra.mxu0 0
        %2271 = vmatprep.subr.bf16.mxu0 0
        %2272 = vmatpush1.bf16.msra.mxu0 0
        %2273 = vmatprep.subr.bf16.mxu0 0
        %2274 = vmatpush1.bf16.msra.mxu0 0
        %2275 = vmatprep.subr.bf16.mxu0 0
        %2276 = vmatpush1.bf16.msra.mxu0 0
        %2277 = vmatprep.subr.bf16.mxu0 0
        %2278 = vmatpush1.bf16.msra.mxu0 0
        %2279 = vmatprep.subr.bf16.mxu0 0
        %2280 = vmatpush1.bf16.msra.mxu0 0
        %2281 = vmatprep.subr.bf16.mxu0 0
        %2282 = vmatpush1.bf16.msra.mxu0 0
        %2283 = vmatprep.subr.bf16.mxu0 0
        %2284 = vmatpush1.bf16.msra.mxu0 %v2267
        %2285 = vmatprep.subr.bf16.mxu0 0
        %2286 = vmatpush2.bf16.msra.mxu0 0
        %2287 = vmatprep.subr.bf16.mxu0 0
        %2288 = vmatpush2.bf16.msra.mxu0 0
        %2289 = vmatprep.subr.bf16.mxu0 0
        %2290 = vmatpush2.bf16.msra.mxu0 0
        %2291 = vmatprep.subr.bf16.mxu0 0
        %2292 = vmatpush2.bf16.msra.mxu0 0
        %2293 = vmatprep.subr.bf16.mxu0 0
        %2294 = vmatpush2.bf16.msra.mxu0 0
        %2295 = vmatprep.subr.bf16.mxu0 0
        %2296 = vmatpush2.bf16.msra.mxu0 0
        %2297 = vmatprep.subr.bf16.mxu0 0
        %2298 = vmatpush2.bf16.msra.mxu0 0
        %2299 = vmatprep.subr.bf16.mxu0 0
        %2300 = vmatpush2.bf16.msra.mxu0 0
        %2301 = vmatprep.mubr.bf16.mxu0 0
        %2302 = vmatmul.mubr.bf16.gmra.mxu0 %v2264
        %v2303 = vpop.f32.mrf.mxu0
        %v2304 = vadd.f32 0.0, %v2303
        %v2305 = vpop.f32.mrf.mxu0
        %v2306 = vpop.f32.mrf.mxu0
        %v2307 = vpop.f32.mrf.mxu0
        %2308 = vdwg.mxu0
        %v2309 = vpack.c.bf16 %v2304, %v2304
        %s2310 = scalar_lea.vmem [#allocation17], 8
        %v2311 = vld [vmem:[%s2310] sm:$0xf]
        %v2313 = vsel %vm1116, %v2309, 0
        %v2316 = vsel %vm1181, %v2311, 0
        %2318 = vmatprep.subr.bf16.mxu0 0
        %2319 = vmatpush1.bf16.msra.mxu0 0
        %2320 = vmatprep.subr.bf16.mxu0 0
        %2321 = vmatpush1.bf16.msra.mxu0 0
        %2322 = vmatprep.subr.bf16.mxu0 0
        %2323 = vmatpush1.bf16.msra.mxu0 0
        %2324 = vmatprep.subr.bf16.mxu0 0
        %2325 = vmatpush1.bf16.msra.mxu0 0
        %2326 = vmatprep.subr.bf16.mxu0 0
        %2327 = vmatpush1.bf16.msra.mxu0 0
        %2328 = vmatprep.subr.bf16.mxu0 0
        %2329 = vmatpush1.bf16.msra.mxu0 0
        %2330 = vmatprep.subr.bf16.mxu0 0
        %2331 = vmatpush1.bf16.msra.mxu0 0
        %2332 = vmatprep.subr.bf16.mxu0 0
        %2333 = vmatpush1.bf16.msra.mxu0 %v2316
        %2334 = vmatprep.subr.bf16.mxu0 0
        %2335 = vmatpush2.bf16.msra.mxu0 0
        %2336 = vmatprep.subr.bf16.mxu0 0
        %2337 = vmatpush2.bf16.msra.mxu0 0
        %2338 = vmatprep.subr.bf16.mxu0 0
        %2339 = vmatpush2.bf16.msra.mxu0 0
        %2340 = vmatprep.subr.bf16.mxu0 0
        %2341 = vmatpush2.bf16.msra.mxu0 0
        %2342 = vmatprep.subr.bf16.mxu0 0
        %2343 = vmatpush2.bf16.msra.mxu0 0
        %2344 = vmatprep.subr.bf16.mxu0 0
        %2345 = vmatpush2.bf16.msra.mxu0 0
        %2346 = vmatprep.subr.bf16.mxu0 0
        %2347 = vmatpush2.bf16.msra.mxu0 0
        %2348 = vmatprep.subr.bf16.mxu0 0
        %2349 = vmatpush2.bf16.msra.mxu0 0
        %2350 = vmatprep.mubr.bf16.mxu0 0
        %2351 = vmatmul.mubr.bf16.gmra.mxu0 %v2313
        %v2352 = vpop.f32.mrf.mxu0
        %v2353 = vadd.f32 0.0, %v2352
        %v2354 = vpop.f32.mrf.mxu0
        %v2355 = vpop.f32.mrf.mxu0
        %v2356 = vpop.f32.mrf.mxu0
        %2357 = vdwg.mxu0
        %v2358 = vadd.f32 %v2190, %v2353
        %s2359 = scalar_lea.vmem %s875, 24 [#allocation2]
        %v2360 = vld [vmem:[%s2359] sm:$0xff]
        %2361 = vrot.lane.b32.xlu0 %v1871, 104
        %v2362 = vpop.permute.xlu0 %2361
        %2363 = vrot.lane.b32.xlu0 %v1934, 104
        %v2364 = vpop.permute.xlu0 %2363
        %v2366 = vsel %vm1116, %v2362, 0
        %v2369 = vsel %vm1116, %v2364, 0
        %2371 = vmatprep.subr.bf16.mxu0 0
        %2372 = vmatpush1.bf16.xpose.msra.mxu0 0
        %2373 = vmatprep.subr.bf16.mxu0 0
        %2374 = vmatpush1.bf16.xpose.msra.mxu0 0
        %2375 = vmatprep.subr.bf16.mxu0 0
        %2376 = vmatpush1.bf16.xpose.msra.mxu0 0
        %2377 = vmatprep.subr.bf16.mxu0 0
        %2378 = vmatpush1.bf16.xpose.msra.mxu0 0
        %2379 = vmatprep.subr.bf16.mxu0 0
        %2380 = vmatpush1.bf16.xpose.msra.mxu0 0
        %2381 = vmatprep.subr.bf16.mxu0 0
        %2382 = vmatpush1.bf16.xpose.msra.mxu0 0
        %2383 = vmatprep.subr.bf16.mxu0 0
        %2384 = vmatpush1.bf16.xpose.msra.mxu0 0
        %2385 = vmatprep.subr.bf16.mxu0 0
        %2386 = vmatpush1.bf16.xpose.msra.mxu0 %v2369
        %2387 = vmatprep.subr.bf16.mxu0 0
        %2388 = vmatpush2.bf16.xpose.msra.mxu0 0
        %2389 = vmatprep.subr.bf16.mxu0 0
        %2390 = vmatpush2.bf16.xpose.msra.mxu0 0
        %2391 = vmatprep.subr.bf16.mxu0 0
        %2392 = vmatpush2.bf16.xpose.msra.mxu0 0
        %2393 = vmatprep.subr.bf16.mxu0 0
        %2394 = vmatpush2.bf16.xpose.msra.mxu0 0
        %2395 = vmatprep.subr.bf16.mxu0 0
        %2396 = vmatpush2.bf16.xpose.msra.mxu0 0
        %2397 = vmatprep.subr.bf16.mxu0 0
        %2398 = vmatpush2.bf16.xpose.msra.mxu0 0
        %2399 = vmatprep.subr.bf16.mxu0 0
        %2400 = vmatpush2.bf16.xpose.msra.mxu0 0
        %2401 = vmatprep.subr.bf16.mxu0 0
        %2402 = vmatpush2.bf16.xpose.msra.mxu0 0
        %2403 = vmatprep.mubr.bf16.mxu0 0
        %2404 = vmatmul.mubr.bf16.gmra.mxu0 %v2366
        %v2405 = vpop.f32.mrf.mxu0
        %v2406 = vadd.f32 %v2360, %v2405
        %v2407 = vpop.f32.mrf.mxu0
        %v2408 = vpop.f32.mrf.mxu0
        %v2409 = vpop.f32.mrf.mxu0
        %2410 = vdwg.mxu0
        %v2411 = vsel %vm1116, %v2406, -inf
        %2412 = vmax.xlane.f32.xlu0 %v2411
        %v2413 = vpop.xlane.xlu0 %2412
        %v2414 = vsub.f32 %v2406, %v2413
        %v2415 = vmul.f32 %v2414, 1.442695
        %v2416 = vpow.pop %v2415
        %v2417 = vsel %vm1116, %v2416, 0.0
        %2418 = vadd.xlane.f32.xlu0 %v2417
        %v2419 = vpop.xlane.xlu0 %2418
        %v2420 = vrcp.pop %v2419
        %v2421 = vmul.f32 %v2416, %v2420
        %s2422 = scalar_lea.vmem %s1024, 24 [#allocation29]
        %2423 = vst.msk [vmem:[%s2422] sm:$0xff] %vm1116, %v2421
        %v2424 = vpack.c.bf16 %v2421, %v2421
        %2425 = vrot.lane.b32.xlu0 %v1934, 72
        %v2426 = vpop.permute.xlu0 %2425
        %v2428 = vsel %vm1116, %v2424, 0
        %v2431 = vsel %vm1181, %v2426, 0
        %2433 = vmatprep.subr.bf16.mxu0 0
        %2434 = vmatpush1.bf16.msra.mxu0 0
        %2435 = vmatprep.subr.bf16.mxu0 0
        %2436 = vmatpush1.bf16.msra.mxu0 0
        %2437 = vmatprep.subr.bf16.mxu0 0
        %2438 = vmatpush1.bf16.msra.mxu0 0
        %2439 = vmatprep.subr.bf16.mxu0 0
        %2440 = vmatpush1.bf16.msra.mxu0 0
        %2441 = vmatprep.subr.bf16.mxu0 0
        %2442 = vmatpush1.bf16.msra.mxu0 0
        %2443 = vmatprep.subr.bf16.mxu0 0
        %2444 = vmatpush1.bf16.msra.mxu0 0
        %2445 = vmatprep.subr.bf16.mxu0 0
        %2446 = vmatpush1.bf16.msra.mxu0 0
        %2447 = vmatprep.subr.bf16.mxu0 0
        %2448 = vmatpush1.bf16.msra.mxu0 %v2431
        %2449 = vmatprep.subr.bf16.mxu0 0
        %2450 = vmatpush2.bf16.msra.mxu0 0
        %2451 = vmatprep.subr.bf16.mxu0 0
        %2452 = vmatpush2.bf16.msra.mxu0 0
        %2453 = vmatprep.subr.bf16.mxu0 0
        %2454 = vmatpush2.bf16.msra.mxu0 0
        %2455 = vmatprep.subr.bf16.mxu0 0
        %2456 = vmatpush2.bf16.msra.mxu0 0
        %2457 = vmatprep.subr.bf16.mxu0 0
        %2458 = vmatpush2.bf16.msra.mxu0 0
        %2459 = vmatprep.subr.bf16.mxu0 0
        %2460 = vmatpush2.bf16.msra.mxu0 0
        %2461 = vmatprep.subr.bf16.mxu0 0
        %2462 = vmatpush2.bf16.msra.mxu0 0
        %2463 = vmatprep.subr.bf16.mxu0 0
        %2464 = vmatpush2.bf16.msra.mxu0 0
        %2465 = vmatprep.mubr.bf16.mxu0 0
        %2466 = vmatmul.mubr.bf16.gmra.mxu0 %v2428
        %v2467 = vpop.f32.mrf.mxu0
        %v2468 = vadd.f32 0.0, %v2467
        %v2469 = vpop.f32.mrf.mxu0
        %v2470 = vpop.f32.mrf.mxu0
        %v2471 = vpop.f32.mrf.mxu0
        %2472 = vdwg.mxu0
        %v2473 = vpack.c.bf16 %v2468, %v2468
        %s2474 = scalar_lea.vmem [#allocation17], 12
        %v2475 = vld [vmem:[%s2474] sm:$0xf]
        %v2477 = vsel %vm1116, %v2473, 0
        %v2480 = vsel %vm1181, %v2475, 0
        %2482 = vmatprep.subr.bf16.mxu0 0
        %2483 = vmatpush1.bf16.msra.mxu0 0
        %2484 = vmatprep.subr.bf16.mxu0 0
        %2485 = vmatpush1.bf16.msra.mxu0 0
        %2486 = vmatprep.subr.bf16.mxu0 0
        %2487 = vmatpush1.bf16.msra.mxu0 0
        %2488 = vmatprep.subr.bf16.mxu0 0
        %2489 = vmatpush1.bf16.msra.mxu0 0
        %2490 = vmatprep.subr.bf16.mxu0 0
        %2491 = vmatpush1.bf16.msra.mxu0 0
        %2492 = vmatprep.subr.bf16.mxu0 0
        %2493 = vmatpush1.bf16.msra.mxu0 0
        %2494 = vmatprep.subr.bf16.mxu0 0
        %2495 = vmatpush1.bf16.msra.mxu0 0
        %2496 = vmatprep.subr.bf16.mxu0 0
        %2497 = vmatpush1.bf16.msra.mxu0 %v2480
        %2498 = vmatprep.subr.bf16.mxu0 0
        %2499 = vmatpush2.bf16.msra.mxu0 0
        %2500 = vmatprep.subr.bf16.mxu0 0
        %2501 = vmatpush2.bf16.msra.mxu0 0
        %2502 = vmatprep.subr.bf16.mxu0 0
        %2503 = vmatpush2.bf16.msra.mxu0 0
        %2504 = vmatprep.subr.bf16.mxu0 0
        %2505 = vmatpush2.bf16.msra.mxu0 0
        %2506 = vmatprep.subr.bf16.mxu0 0
        %2507 = vmatpush2.bf16.msra.mxu0 0
        %2508 = vmatprep.subr.bf16.mxu0 0
        %2509 = vmatpush2.bf16.msra.mxu0 0
        %2510 = vmatprep.subr.bf16.mxu0 0
        %2511 = vmatpush2.bf16.msra.mxu0 0
        %2512 = vmatprep.subr.bf16.mxu0 0
        %2513 = vmatpush2.bf16.msra.mxu0 0
        %2514 = vmatprep.mubr.bf16.mxu0 0
        %2515 = vmatmul.mubr.bf16.gmra.mxu0 %v2477
        %v2516 = vpop.f32.mrf.mxu0
        %v2517 = vadd.f32 0.0, %v2516
        %v2518 = vpop.f32.mrf.mxu0
        %v2519 = vpop.f32.mrf.mxu0
        %v2520 = vpop.f32.mrf.mxu0
        %2521 = vdwg.mxu0
        %v2522 = vadd.f32 %v2358, %v2517
        %v2523 = vld [vmem:[#allocation19] sm:$0x1]
        %v2525 = vlaneseq
        %v2526 = vshrl.u32 %v2525, 7
        %v2527 = vsub.s32 0, %v2526
        %v2528 = vrot.slane %v2523, %v2527
        %v2530 = vadd.f32 %v2522, %v2528
        %v2531 = vadd.f32 %v1802, %v2530
        %v2532 = vsel %vm1067, %v2531, 0.0
        %2533 = vadd.xlane.f32.xlu0 %v2532
        %v2534 = vpop.xlane.xlu0 %2533
        %v2535 = vmul.f32 %v2534, %v1776
        %v2536 = vsub.f32 %v2531, %v2535
        %v2537 = vmul.f32 %v2536, %v2536
        %v2538 = vsel %vm1067, %v2537, 0.0
        %2539 = vadd.xlane.f32.xlu0 %v2538
        %v2540 = vpop.xlane.xlu0 %2539
        %v2541 = vmul.f32 %v2540, %v1776
        %v2542 = vadd.f32 %v2541, 1e-12
        %v2543 = vrsqrt.pop %v2542
        %v2544 = vmul.f32 %v2536, %v2543
        %v2545 = vld [vmem:[#allocation20] sm:$0x1]
        %v2547 = vlaneseq
        %v2548 = vshrl.u32 %v2547, 7
        %v2549 = vsub.s32 0, %v2548
        %v2550 = vrot.slane %v2545, %v2549
        %v2552 = vmul.f32 %v2544, %v2550
        %v2553 = vld [vmem:[#allocation22] sm:$0x1]
        %v2555 = vlaneseq
        %v2556 = vshrl.u32 %v2555, 7
        %v2557 = vsub.s32 0, %v2556
        %v2558 = vrot.slane %v2553, %v2557
        %v2560 = vadd.f32 %v2552, %v2558
        %v2561 = vpack.c.bf16 %v2560, %v2560
        %v2562 = vld [vmem:[#allocation23] sm:$0xf]
        %v2563 = vld [vmem:[#allocation23 + $0x4] sm:$0xf]
        %v2564 = vld [vmem:[#allocation23 + $0x8] sm:$0xf]
        %v2565 = vld [vmem:[#allocation23 + $0xc] sm:$0xf]
        %v2566 = vld [vmem:[#allocation25] sm:$0x1]
        %v2568 = vlaneseq
        %v2569 = vshrl.u32 %v2568, 7
        %v2570 = vsub.s32 0, %v2569
        %v2571 = vrot.slane %v2566, %v2570
        %v2577 = vunpack.c.l.b16 %v2562
        %v2578 = vunpack.c.l.b16 %v2563
        %v2579 = vunpack.c.l.b16 %v2564
        %v2580 = vunpack.c.l.b16 %v2565
        %v2581 = vpack.c.b16 %v2578, %v2577
        %v2582 = vpack.c.b16 %v2580, %v2579
        %v2586 = vsel %vm1067, %v2561, 0
        %2588 = vmatprep.subr.bf16.mxu0 0
        %2589 = vmatpush1.bf16.msra.mxu0 0
        %2590 = vmatprep.subr.bf16.mxu0 0
        %2591 = vmatpush1.bf16.msra.mxu0 0
        %2592 = vmatprep.subr.bf16.mxu0 0
        %2593 = vmatpush1.bf16.msra.mxu0 0
        %2594 = vmatprep.subr.bf16.mxu0 0
        %2595 = vmatpush1.bf16.msra.mxu0 0
        %2596 = vmatprep.subr.bf16.mxu0 0
        %2597 = vmatpush1.bf16.msra.mxu0 0
        %2598 = vmatprep.subr.bf16.mxu0 0
        %2599 = vmatpush1.bf16.msra.mxu0 0
        %2600 = vmatprep.subr.bf16.mxu0 0
        %2601 = vmatpush1.bf16.msra.mxu0 %v2582
        %2602 = vmatprep.subr.bf16.mxu0 0
        %2603 = vmatpush1.bf16.msra.mxu0 %v2581
        %2604 = vmatprep.subr.bf16.mxu0 0
        %2605 = vmatpush2.bf16.msra.mxu0 0
        %2606 = vmatprep.subr.bf16.mxu0 0
        %2607 = vmatpush2.bf16.msra.mxu0 0
        %2608 = vmatprep.subr.bf16.mxu0 0
        %2609 = vmatpush2.bf16.msra.mxu0 0
        %2610 = vmatprep.subr.bf16.mxu0 0
        %2611 = vmatpush2.bf16.msra.mxu0 0
        %2612 = vmatprep.subr.bf16.mxu0 0
        %2613 = vmatpush2.bf16.msra.mxu0 0
        %2614 = vmatprep.subr.bf16.mxu0 0
        %2615 = vmatpush2.bf16.msra.mxu0 0
        %2616 = vmatprep.subr.bf16.mxu0 0
        %2617 = vmatpush2.bf16.msra.mxu0 0
        %2618 = vmatprep.subr.bf16.mxu0 0
        %2619 = vmatpush2.bf16.msra.mxu0 0
        %2620 = vmatprep.mubr.bf16.mxu0 0
        %2621 = vmatmul.mubr.bf16.gmra.mxu0 %v2586
        %v2622 = vpop.f32.mrf.mxu0
        %v2623 = vadd.f32 %v2571, %v2622
        %v2624 = vpop.f32.mrf.mxu0
        %v2625 = vpop.f32.mrf.mxu0
        %v2626 = vpop.f32.mrf.mxu0
        %2627 = vdwg.mxu0
        %v2628 = vmul.f32 %v2623, 0.5
        %v2629 = vmul.f32 %v2623, 0.70710677
        %v2630 = verf.f32.pop %v2629
        %v2631 = vadd.f32 %v2630, 1.0
        %v2632 = vmul.f32 %v2628, %v2631
        %v2633 = vpack.c.bf16 %v2632, %v2632
        %v2634 = vld [vmem:[%s18] sm:$0xf]
        %v2635 = vld [vmem:[%s18 + $0x4] sm:$0xf]
        %v2636 = vld [vmem:[%s18 + $0x8] sm:$0xf]
        %v2637 = vld [vmem:[%s18 + $0xc] sm:$0xf]
        %v2638 = vld [vmem:[%s18 + $0x10] sm:$0xf]
        %v2639 = vld [vmem:[%s18 + $0x14] sm:$0xf]
        %v2640 = vld [vmem:[%s18 + $0x18] sm:$0xf]
        %v2641 = vld [vmem:[%s18 + $0x1c] sm:$0xf]
        %v2642 = vld [vmem:[%s18 + $0x20] sm:$0xf]
        %v2643 = vld [vmem:[%s18 + $0x24] sm:$0xf]
        %v2644 = vld [vmem:[%s18 + $0x28] sm:$0xf]
        %v2645 = vld [vmem:[%s18 + $0x2c] sm:$0xf]
        %v2646 = vld [vmem:[%s18 + $0x30] sm:$0xf]
        %v2647 = vld [vmem:[%s18 + $0x34] sm:$0xf]
        %v2648 = vld [vmem:[%s18 + $0x38] sm:$0xf]
        %v2649 = vld [vmem:[%s18 + $0x3c] sm:$0xf]
        %v2650 = vld [vmem:[%s19] sm:$0x1]
        %v2652 = vlaneseq
        %v2653 = vshrl.u32 %v2652, 7
        %v2654 = vsub.s32 0, %v2653
        %v2655 = vrot.slane %v2650, %v2654
        %v2673 = vunpack.c.l.b16 %v2634
        %v2674 = vunpack.c.l.b16 %v2635
        %v2675 = vunpack.c.l.b16 %v2636
        %v2676 = vunpack.c.l.b16 %v2637
        %v2677 = vunpack.c.l.b16 %v2638
        %v2678 = vunpack.c.l.b16 %v2639
        %v2679 = vunpack.c.l.b16 %v2640
        %v2680 = vunpack.c.l.b16 %v2641
        %v2681 = vunpack.c.l.b16 %v2642
        %v2682 = vunpack.c.l.b16 %v2643
        %v2683 = vunpack.c.l.b16 %v2644
        %v2684 = vunpack.c.l.b16 %v2645
        %v2685 = vunpack.c.l.b16 %v2646
        %v2686 = vunpack.c.l.b16 %v2647
        %v2687 = vunpack.c.l.b16 %v2648
        %v2688 = vunpack.c.l.b16 %v2649
        %v2689 = vpack.c.b16 %v2674, %v2673
        %v2690 = vpack.c.b16 %v2676, %v2675
        %v2691 = vpack.c.b16 %v2678, %v2677
        %v2692 = vpack.c.b16 %v2680, %v2679
        %v2693 = vpack.c.b16 %v2682, %v2681
        %v2694 = vpack.c.b16 %v2684, %v2683
        %v2695 = vpack.c.b16 %v2686, %v2685
        %v2696 = vpack.c.b16 %v2688, %v2687
        %2705 = vmatprep.subr.bf16.mxu0 0
        %2706 = vmatpush1.bf16.msra.mxu0 %v2696
        %2707 = vmatprep.subr.bf16.mxu0 0
        %2708 = vmatpush1.bf16.msra.mxu0 %v2695
        %2709 = vmatprep.subr.bf16.mxu0 0
        %2710 = vmatpush1.bf16.msra.mxu0 %v2694
        %2711 = vmatprep.subr.bf16.mxu0 0
        %2712 = vmatpush1.bf16.msra.mxu0 %v2693
        %2713 = vmatprep.subr.bf16.mxu0 0
        %2714 = vmatpush1.bf16.msra.mxu0 %v2692
        %2715 = vmatprep.subr.bf16.mxu0 0
        %2716 = vmatpush1.bf16.msra.mxu0 %v2691
        %2717 = vmatprep.subr.bf16.mxu0 0
        %2718 = vmatpush1.bf16.msra.mxu0 %v2690
        %2719 = vmatprep.subr.bf16.mxu0 0
        %2720 = vmatpush1.bf16.msra.mxu0 %v2689
        %2721 = vmatprep.subr.bf16.mxu0 0
        %2722 = vmatpush2.bf16.msra.mxu0 0
        %2723 = vmatprep.subr.bf16.mxu0 0
        %2724 = vmatpush2.bf16.msra.mxu0 0
        %2725 = vmatprep.subr.bf16.mxu0 0
        %2726 = vmatpush2.bf16.msra.mxu0 0
        %2727 = vmatprep.subr.bf16.mxu0 0
        %2728 = vmatpush2.bf16.msra.mxu0 0
        %2729 = vmatprep.subr.bf16.mxu0 0
        %2730 = vmatpush2.bf16.msra.mxu0 0
        %2731 = vmatprep.subr.bf16.mxu0 0
        %2732 = vmatpush2.bf16.msra.mxu0 0
        %2733 = vmatprep.subr.bf16.mxu0 0
        %2734 = vmatpush2.bf16.msra.mxu0 0
        %2735 = vmatprep.subr.bf16.mxu0 0
        %2736 = vmatpush2.bf16.msra.mxu0 0
        %2737 = vmatprep.mubr.bf16.mxu0 0
        %2738 = vmatmul.mubr.bf16.gmra.mxu0 %v2633
        %v2739 = vpop.f32.mrf.mxu0
        %v2740 = vadd.f32 %v2655, %v2739
        %v2741 = vpop.f32.mrf.mxu0
        %v2742 = vpop.f32.mrf.mxu0
        %v2743 = vpop.f32.mrf.mxu0
        %2744 = vdwg.mxu0
        %v2745 = vadd.f32 %v2560, %v2740
        %v2746 = vsel %vm1067, %v2745, 0.0
        %2747 = vadd.xlane.f32.xlu0 %v2746
        %v2748 = vpop.xlane.xlu0 %2747
        %v2749 = vmul.f32 %v2748, %v1776
        %v2750 = vsub.f32 %v2745, %v2749
        %v2751 = vmul.f32 %v2750, %v2750
        %v2752 = vsel %vm1067, %v2751, 0.0
        %2753 = vadd.xlane.f32.xlu0 %v2752
        %v2754 = vpop.xlane.xlu0 %2753
        %v2755 = vmul.f32 %v2754, %v1776
        %v2756 = vadd.f32 %v2755, 1e-12
        %v2757 = vrsqrt.pop %v2756
        %v2758 = vmul.f32 %v2750, %v2757
        %v2759 = vld [vmem:[%s20] sm:$0x1]
        %v2761 = vlaneseq
        %v2762 = vshrl.u32 %v2761, 7
        %v2763 = vsub.s32 0, %v2762
        %v2764 = vrot.slane %v2759, %v2763
        %v2766 = vmul.f32 %v2758, %v2764
        %v2767 = vld [vmem:[%s21] sm:$0x1]
        %v2769 = vlaneseq
        %v2770 = vshrl.u32 %v2769, 7
        %v2771 = vsub.s32 0, %v2770
        %v2772 = vrot.slane %v2767, %v2771
        %v2774 = vadd.f32 %v2766, %v2772
        %2775 = vst.msk [vmem:[%s1010] sm:$0xff] %vm1067, %v2774
        %s2776 = sand.u32 %s556, 1
        %s2777 = scalar_lea.sflag [#allocation4], %s2776
        %s2778 = sand.u32 %s556, 1
        %s2779 = smul.addr %s2778, 8
        %s2780 = scalar_lea.vmem [#allocation26], %s2779
        %s2781 = sand.u32 %s54, 1
        %s2782 = scalar_lea.sflag [#allocation28], %s2781
        %s2783 = sand.u32 %s584, 1
        %s2784 = smul.addr %s2783, 32
        %s2785 = scalar_lea.vmem [#allocation27], %s2784
        %s2786 = sand.u32 %s54, 1
        %s2787 = scalar_lea.sflag [#allocation28], %s2786
        %s2788 = sand.u32 %s612, 1
        %s2789 = smul.addr %s2788, 32
        %s2790 = scalar_lea.vmem [#allocation29], %s2789
        // Predicated region
        $region173: #{tpu_custom_call.1} parent=107 // pred_check
          %p2791 = pneg %p566
        $region174: #{tpu_custom_call.1} parent=107 // pred_check_branch
          %2793 = sbr.rel (%p2791) target = $region176
        $region175: #{tpu_custom_call.1} parent=107 // pred_region
          %s2795 = ssub.s32 128, 128
          %2796 = vsyncadd %s2777, %s2795
          %s2797 = smul.addr %s58, 128
          %s2798 = scalar_lea.hbm %s22, %s2797
          %s2800 = sshll.u32 %s2780, 4
          %s2801 = int_to_ptr.vmem [resolvable:$true] %s2800
          %2803 = dma.vmem_to_hbm [thread:$0]  %s2801, 128, %s2798, %s2777
        $region176: #{tpu_custom_call.1} parent=107 // pred_fallthru
          _
        // Predicated region
        $region177: #{tpu_custom_call.1} parent=107 // pred_check
          %p2804 = pneg %p594
        $region178: #{tpu_custom_call.1} parent=107 // pred_check_branch
          %2806 = sbr.rel (%p2804) target = $region180
        $region179: #{tpu_custom_call.1} parent=107 // pred_region
          %s2808 = ssub.s32 512, 512
          %2809 = vsyncadd %s2782, %s2808
          %s2810 = smul.addr %s58, 4
          %s2811 = smul.addr %s59, 8
          %s2812 = sadd.s32 %s2810, %s2811
          %s2813 = smul.addr %s2812, 128
          %s2814 = scalar_lea.hbm %s23, %s2813
          %s2815 = sshll.u32 %s2785, 4
          %s2816 = int_to_ptr.vmem [resolvable:$true] %s2815
          %2821 = dma.vmem_to_hbm [thread:$0]  %s2816, 512, %s2814, %s2782, 128, 128, 8
        $region180: #{tpu_custom_call.1} parent=107 // pred_fallthru
          _
        // Predicated region
        $region181: #{tpu_custom_call.1} parent=107 // pred_check
          %p2822 = pneg %p622
        $region182: #{tpu_custom_call.1} parent=107 // pred_check_branch
          %2824 = sbr.rel (%p2822) target = $region184
        $region183: #{tpu_custom_call.1} parent=107 // pred_region
          %s2826 = ssub.s32 512, 512
          %2827 = vsyncadd %s2787, %s2826
          %s2828 = smul.addr %s58, 4
          %s2829 = smul.addr %s59, 8
          %s2830 = sadd.s32 %s2828, %s2829
          %s2831 = smul.addr %s2830, 128
          %s2832 = scalar_lea.hbm %s24, %s2831
          %s2833 = sshll.u32 %s2790, 4
          %s2834 = int_to_ptr.vmem [resolvable:$true] %s2833
          %2839 = dma.vmem_to_hbm [thread:$0]  %s2834, 512, %s2832, %s2787, 128, 128, 8
        $region184: #{tpu_custom_call.1} parent=107 // pred_fallthru
          _
      $region108: #{tpu_custom_call.1} parent=5 // pred_fallthru
        _
      %p2840 = scmp.le.s32.totalorder 2, %s49
      // Predicated region
      $region185: #{tpu_custom_call.1} parent=5 // pred_check
        %p2841 = pneg %p2840
      $region186: #{tpu_custom_call.1} parent=5 // pred_check_branch
        %2843 = sbr.rel (%p2841) target = $region188
      $region187: #{tpu_custom_call.1} parent=5 // pred_region
        %s2844 = ssub.s32 %s49, 2
        // Predicated region
        $region189: #{tpu_custom_call.1} parent=187 // pred_check
          %p2845 = pneg %p572
        $region190: #{tpu_custom_call.1} parent=187 // pred_check_branch
          %2847 = sbr.rel (%p2845) target = $region192
        $region191: #{tpu_custom_call.1} parent=187 // pred_region
          %s2848 = sand.u32 %s557, 1
          %s2849 = scalar_lea.sflag [#allocation4], %s2848
          %s2850 = sand.u32 %s557, 1
          %s2851 = smul.addr %s2850, 8
          %s2852 = scalar_lea.vmem [#allocation26], %s2851
          %2853 = dma.done %s2849, 128
        $region192: #{tpu_custom_call.1} parent=187 // pred_fallthru
          _
        // Predicated region
        $region193: #{tpu_custom_call.1} parent=187 // pred_check
          %p2854 = pneg %p600
        $region194: #{tpu_custom_call.1} parent=187 // pred_check_branch
          %2856 = sbr.rel (%p2854) target = $region196
        $region195: #{tpu_custom_call.1} parent=187 // pred_region
          %s2857 = sand.u32 %s55, 1
          %s2858 = scalar_lea.sflag [#allocation28], %s2857
          %s2859 = sand.u32 %s585, 1
          %s2860 = smul.addr %s2859, 32
          %s2861 = scalar_lea.vmem [#allocation27], %s2860
          %2862 = dma.done %s2858, 512
        $region196: #{tpu_custom_call.1} parent=187 // pred_fallthru
          _
        // Predicated region
        $region197: #{tpu_custom_call.1} parent=187 // pred_check
          %p2863 = pneg %p628
        $region198: #{tpu_custom_call.1} parent=187 // pred_check_branch
          %2865 = sbr.rel (%p2863) target = $region200
        $region199: #{tpu_custom_call.1} parent=187 // pred_region
          %s2866 = sand.u32 %s55, 1
          %s2867 = scalar_lea.sflag [#allocation28], %s2866
          %s2868 = sand.u32 %s613, 1
          %s2869 = smul.addr %s2868, 32
          %s2870 = scalar_lea.vmem [#allocation29], %s2869
          %2871 = dma.done %s2867, 512
        $region200: #{tpu_custom_call.1} parent=187 // pred_fallthru
          _
      $region188: #{tpu_custom_call.1} parent=5 // pred_fallthru
        _
    $region6: #{tpu_custom_call.1} parent=1 // loop_footer
      %s53 = sadd.s32 1, %s49
    $region7: #{tpu_custom_call.1} parent=1 // loop_footer_branch
      %48 = sbr.rel target = $region3
    $region8: #{tpu_custom_call.1} parent=1 // loop_exit
      _
    %2872 = vsyncpa [#allocation3], 1
    %s2873 = scalar_lea.sflag [#allocation3], 1
    %2874 = vsyncpa %s2873, 1
    %2875 = vsyncpa [#allocation6], 1
    %s2876 = scalar_lea.sflag [#allocation6], 1
    %2877 = vsyncpa %s2876, 1
    %2878 = vsyncpa [#allocation9], 1
    %2879 = vsyncpa [#allocation12], 1
    %2880 = vsyncpa [#allocation15], 1
    %2881 = vsyncpa [#allocation18], 1
    %2882 = vsyncpa [#allocation21], 1
    %2883 = vsyncpa [#allocation24], 1
    %2884 = vsyncpa [#allocation4], 1
    %s2885 = scalar_lea.sflag [#allocation4], 1
    %2886 = vsyncpa %s2885, 1
    %2887 = vsyncpa [#allocation28], 1
    %s2888 = scalar_lea.sflag [#allocation28], 1
    %2889 = vsyncpa %s2888, 1

</llo_original>
